<compile_context>
chip_gen: v6e
topology: v6e:2x2x1
jax: 0.10.0
libtpu: 0.0.40
codegen_flags: <defaults>
</compile_context>

<pallas_src>
import jax
import jax.numpy as jnp
from jax.experimental import pallas as pl
from jax.experimental.pallas import tpu as pltpu


def _round_up(n, m):
    return ((n + m - 1) // m) * m


def make_nfm_kernel(f_dim, v_dim, e_dim, h1_dim, h2_dim, offs):
    off_b1, off_b2, off_wo, off_bo = offs
    hp = jax.lax.Precision.HIGHEST

    def nfm_kernel(idx_ref, val_ref, embt_ref, w1_ref, w2_ref, pvec_ref, out_ref):
        # idx_ref : (F, TB)  int32  -- batch tile on the lane axis
        # val_ref : (F, TB)  f32
        # embt_ref: (E, V)   f32    (transposed embedding table, VMEM-resident)
        # w1_ref  : (H1, E)  f32    (transposed Linear weight)
        # w2_ref  : (H2, H1) f32
        # pvec_ref: (P, 1)   f32    packed [b1 | b2 | wo | bo], 8-aligned offsets
        tb = idx_ref.shape[-1]

        embt = embt_ref[...]                         # (E, V)
        embt_sq = embt * embt                        # (E, V)

        # Value-weighted one-hot scatter matrices (running accumulation over
        # fields; duplicate indices within a row combine correctly).
        iota_v = jax.lax.broadcasted_iota(jnp.int32, (v_dim, tb), 0)
        s1 = jnp.zeros((v_dim, tb), jnp.float32)
        s2 = jnp.zeros((v_dim, tb), jnp.float32)
        for f in range(f_dim):                       # F is small & static
            idx_f = idx_ref[f:f + 1, :]              # (1, TB) int32
            val_f = val_ref[f:f + 1, :]              # (1, TB) f32
            hit = (iota_v == idx_f).astype(jnp.float32)   # (V, TB)
            s1 = s1 + hit * val_f
            s2 = s2 + hit * (val_f * val_f)

        # Fused gather + bi-interaction reductions on the MXU:
        #   sum_x  [e,b] = sum_f emb[idx_f[b], e] * val_f[b]   = (embt   @ S1)[e,b]
        #   sum_x2 [e,b] = sum_f (emb[idx_f[b], e]*val_f[b])^2 = (embt^2 @ S2)[e,b]
        sum_x = jnp.dot(embt, s1, precision=hp,
                        preferred_element_type=jnp.float32)       # (E, TB)
        sum_x2 = jnp.dot(embt_sq, s2, precision=hp,
                         preferred_element_type=jnp.float32)      # (E, TB)
        bi = 0.5 * (sum_x * sum_x - sum_x2)                       # (E, TB)

        b1 = pvec_ref[off_b1:off_b1 + h1_dim, :]     # (H1,1)
        b2 = pvec_ref[off_b2:off_b2 + h2_dim, :]     # (H2,1)
        wo = pvec_ref[off_wo:off_wo + h2_dim, :]     # (H2,1)
        bo = pvec_ref[off_bo:off_bo + 1, :]          # (1,1)

        # MLP with batch on lanes: h = relu(W @ x + b)
        h1 = jnp.dot(w1_ref[...], bi, precision=hp,
                     preferred_element_type=jnp.float32) + b1
        h1 = jnp.maximum(h1, 0.0)                                  # (H1, TB)
        h2 = jnp.dot(w2_ref[...], h1, precision=hp,
                     preferred_element_type=jnp.float32) + b2
        h2 = jnp.maximum(h2, 0.0)                                  # (H2, TB)

        # Output layer: VPU multiply + sublane reduce (avoid degenerate N=1 matmul)
        logit = jnp.sum(h2 * wo, axis=0, keepdims=True) + bo       # (1, TB)
        out_ref[...] = jax.nn.sigmoid(logit)

    return nfm_kernel


def nfm_forward(feat_index, feat_value, params, *, tile_b=1024):
    """NFM forward.  The embedding gather, bi-interaction, MLP and output
    layer all run in one Pallas kernel; the wrapper only transposes the tiny
    (B, F) index / value arrays so the batch sits on the lane axis."""
    emb_table = params["emb"]
    B, F = feat_index.shape
    V, E = emb_table.shape
    H1 = params["w1"].shape[1]
    H2 = params["w2"].shape[1]

    # Tile sizing: big lane tiles amortize the ~0.35us/step pipeline overhead;
    # cap so the grid keeps >= 2 steps (v7x has 2 TensorCores) and stays a
    # multiple of 128.
    b128 = _round_up(B, 128)
    cap = max(128, (b128 // 2) // 128 * 128)
    tile_b = max(128, min(_round_up(tile_b, 128), cap))
    B_pad = _round_up(B, tile_b)
    num_tiles = B_pad // tile_b

    # Batch on the lane axis (these streams are tiny: 8 bytes/field/sample).
    idx_t = jnp.transpose(feat_index.astype(jnp.int32), (1, 0))     # (F, B)
    val_t = jnp.transpose(feat_value.astype(jnp.float32), (1, 0))   # (F, B)
    if B_pad != B:
        idx_t = jnp.pad(idx_t, ((0, 0), (0, B_pad - B)))             # pad idx 0 (valid)
        val_t = jnp.pad(val_t, ((0, 0), (0, B_pad - B)))             # pad val 0

    # VMEM-resident parameters (constant index_map).
    embt = jnp.transpose(emb_table.astype(jnp.float32), (1, 0))      # (E, V)
    w1t = params["w1"].T.astype(jnp.float32)                         # (H1, E)
    w2t = params["w2"].T.astype(jnp.float32)                         # (H2, H1)

    # Pack biases + output weights into one small sublane-aligned vector.
    off_b1 = 0
    off_b2 = _round_up(H1, 8)
    off_wo = off_b2 + _round_up(H2, 8)
    off_bo = off_wo + _round_up(H2, 8)
    P = off_bo + 8
    pvec = jnp.zeros((P, 1), jnp.float32)
    pvec = pvec.at[off_b1:off_b1 + H1, 0].set(params["b1"].reshape(-1))
    pvec = pvec.at[off_b2:off_b2 + H2, 0].set(params["b2"].reshape(-1))
    pvec = pvec.at[off_wo:off_wo + H2, 0].set(params["wo"].reshape(-1))
    pvec = pvec.at[off_bo, 0].set(params["bo"].reshape(-1)[0])

    kernel = make_nfm_kernel(F, V, E, H1, H2, (off_b1, off_b2, off_wo, off_bo))

    # Advisory cost estimate so XLA overlaps surrounding ops with the kernel.
    flops = B_pad * (5 * F * V + 4 * E * V + 2 * E * H1 + 2 * H1 * H2 + 2 * H2 + 6 * E)
    bytes_accessed = B_pad * (4 * F + 4 * F + 4) + (E * V + H1 * E + H2 * H1 + P) * 4
    cost = pl.CostEstimate(flops=int(flops), transcendentals=int(B_pad),
                           bytes_accessed=int(bytes_accessed))

    out = pl.pallas_call(
        kernel,
        out_shape=jax.ShapeDtypeStruct((1, B_pad), jnp.float32),
        grid=(num_tiles,),
        in_specs=[
            pl.BlockSpec((F, tile_b), lambda i: (0, i)),   # indices: tiled over batch
            pl.BlockSpec((F, tile_b), lambda i: (0, i)),   # values:  tiled over batch
            pl.BlockSpec((E, V), lambda i: (0, 0)),        # embedding table: resident
            pl.BlockSpec((H1, E), lambda i: (0, 0)),       # weights: resident
            pl.BlockSpec((H2, H1), lambda i: (0, 0)),
            pl.BlockSpec((P, 1), lambda i: (0, 0)),
        ],
        out_specs=pl.BlockSpec((1, tile_b), lambda i: (0, i)),  # lane-dense output
        compiler_params=pltpu.CompilerParams(
            dimension_semantics=("parallel",),
            vmem_limit_bytes=32 * 1024 * 1024,
        ),
        cost_estimate=cost,
    )(idx_t, val_t, embt, w1t, w2t, pvec)

    return out[0, :B].reshape(B, 1)


def nfm_reference(feat_index, feat_value, params):
    """Pure-JAX f32 reference (faithful to the PyTorch f32 math)."""
    hp = jax.lax.Precision.HIGHEST
    emb = jnp.take(params["emb"], feat_index, axis=0)                 # (B,F,E)
    x = emb * feat_value[:, :, None]
    sum_x = jnp.sum(x, axis=1)
    sum_x2 = jnp.sum(x * x, axis=1)
    bi = 0.5 * (sum_x * sum_x - sum_x2)
    h1 = jnp.maximum(jnp.dot(bi, params["w1"], precision=hp) + params["b1"], 0.0)
    h2 = jnp.maximum(jnp.dot(h1, params["w2"], precision=hp) + params["b2"], 0.0)
    logit = jnp.sum(h2 * params["wo"], axis=-1, keepdims=True) + params["bo"]
    return jax.nn.sigmoid(logit)


def xavier_uniform(key, shape):
    fan_in, fan_out = shape
    limit = (6.0 / (fan_in + fan_out)) ** 0.5
    return jax.random.uniform(key, shape, jnp.float32, -limit, limit)


def make_params(key, feature_size, embedding_size, fc_dims):
    k_emb, k1, k2, ko, kb1, kb2 = jax.random.split(key, 6)
    h1, h2 = fc_dims
    return {
        "emb": xavier_uniform(k_emb, (feature_size, embedding_size)),
        "w1": xavier_uniform(k1, (embedding_size, h1)),
        "b1": 0.1 * jax.random.normal(kb1, (h1,), jnp.float32),
        "w2": xavier_uniform(k2, (h1, h2)),
        "b2": 0.1 * jax.random.normal(kb2, (h2,), jnp.float32),
        "wo": xavier_uniform(ko, (h2, 1)).reshape(-1),
        "bo": jnp.zeros((1,), jnp.float32),
    }


if __name__ == "__main__":
    # Small shapes consistent with the module.
    feature_size = 64      # size of the feature dictionary
    field_size = 8         # number of fields
    embedding_size = 8
    fc_dims = [32, 32]

    key = jax.random.PRNGKey(0)
    k_params = jax.random.fold_in(key, 1)
    params = make_params(k_params, feature_size, embedding_size, fc_dims)

    # batch=200 exercises padding + the 2-tile (128-lane) path;
    # batch=2048 exercises the large (1024-lane) tile path with 2 grid steps.
    for batch in (200, 2048):
        k_i, k_v = jax.random.split(jax.random.fold_in(key, batch))
        feat_index = jax.random.randint(k_i, (batch, field_size), 0, feature_size,
                                        dtype=jnp.int32)
        feat_value = jax.random.uniform(k_v, (batch, field_size), dtype=jnp.float32)

        out = jax.block_until_ready(nfm_forward(feat_index, feat_value, params))
        ref = jax.block_until_ready(nfm_reference(feat_index, feat_value, params))

        assert out.shape == (batch, 1)
        assert bool(jnp.all(jnp.isfinite(out)))
        assert bool(jnp.all((out >= 0.0) & (out <= 1.0)))
        max_err = float(jnp.max(jnp.abs(out - ref)))
        assert max_err < 2e-3, max_err

    print("KERNEL_OK")
</pallas_src>

<mosaic_0001>
module attributes {stable_mosaic.version = 11 : i64} {
  func.func @nfm_kernel(%arg0: i32, %arg1: memref<8x128xi32, #tpu.memory_space<vmem>>, %arg2: memref<8x128xf32, #tpu.memory_space<vmem>>, %arg3: memref<8x64xf32, #tpu.memory_space<vmem>>, %arg4: memref<32x8xf32, #tpu.memory_space<vmem>>, %arg5: memref<32x32xf32, #tpu.memory_space<vmem>>, %arg6: memref<104x1xf32, #tpu.memory_space<vmem>>, %arg7: memref<1x128xf32, #tpu.memory_space<vmem>>) attributes {dimension_semantics = [#tpu.dimension_semantics<parallel>], iteration_bounds = array<i64: 2>, scalar_prefetch = 0 : i64, scratch_operands = 0 : i64, tpu.core_type = #tpu.core_type<tc>, window_params = [{transform_indices = @transform_0, window_bounds = array<i64: 8, 128>}, {transform_indices = @transform_1, window_bounds = array<i64: 8, 128>}, {pipeline_mode = #tpu.pipeline_mode<synchronous>, transform_indices = @transform_2, window_bounds = array<i64: 8, 64>}, {pipeline_mode = #tpu.pipeline_mode<synchronous>, transform_indices = @transform_3, window_bounds = array<i64: 32, 8>}, {pipeline_mode = #tpu.pipeline_mode<synchronous>, transform_indices = @transform_4, window_bounds = array<i64: 32, 32>}, {pipeline_mode = #tpu.pipeline_mode<synchronous>, transform_indices = @transform_5, window_bounds = array<i64: 104, 1>}, {transform_indices = @transform_6, window_bounds = array<i64: 1, 128>}]} {
    %c0 = arith.constant 0 : index
    %c0_0 = arith.constant 0 : index
    %0 = vector.load %arg3[%c0, %c0_0] : memref<8x64xf32, #tpu.memory_space<vmem>>, vector<8x64xf32>
    %1 = arith.mulf %0, %0 : vector<8x64xf32>
    %2 = tpu.iota {dimensions = array<i32: 0>} : vector<64x128xi32>
    %cst = arith.constant 0.000000e+00 : f32
    %3 = vector.broadcast %cst : f32 to vector<64x128xf32>
    %cst_1 = arith.constant 0.000000e+00 : f32
    %4 = vector.broadcast %cst_1 : f32 to vector<64x128xf32>
    %c0_2 = arith.constant 0 : index
    %c0_3 = arith.constant 0 : index
    %5 = vector.load %arg1[%c0_2, %c0_3] : memref<8x128xi32, #tpu.memory_space<vmem>>, vector<1x128xi32>
    %c0_4 = arith.constant 0 : index
    %c0_5 = arith.constant 0 : index
    %6 = vector.load %arg2[%c0_4, %c0_5] : memref<8x128xf32, #tpu.memory_space<vmem>>, vector<1x128xf32>
    %7 = vector.broadcast %5 : vector<1x128xi32> to vector<64x128xi32>
    %8 = arith.cmpi eq, %2, %7 : vector<64x128xi32>
    %9 = arith.extui %8 : vector<64x128xi1> to vector<64x128xi32>
    %10 = arith.sitofp %9 : vector<64x128xi32> to vector<64x128xf32>
    %11 = vector.broadcast %6 : vector<1x128xf32> to vector<64x128xf32>
    %12 = arith.mulf %10, %11 : vector<64x128xf32>
    %13 = arith.addf %3, %12 : vector<64x128xf32>
    %14 = arith.mulf %6, %6 : vector<1x128xf32>
    %15 = vector.broadcast %14 : vector<1x128xf32> to vector<64x128xf32>
    %16 = arith.mulf %10, %15 : vector<64x128xf32>
    %17 = arith.addf %4, %16 : vector<64x128xf32>
    %c1 = arith.constant 1 : index
    %c0_6 = arith.constant 0 : index
    %18 = vector.load %arg1[%c1, %c0_6] : memref<8x128xi32, #tpu.memory_space<vmem>>, vector<1x128xi32>
    %c1_7 = arith.constant 1 : index
    %c0_8 = arith.constant 0 : index
    %19 = vector.load %arg2[%c1_7, %c0_8] : memref<8x128xf32, #tpu.memory_space<vmem>>, vector<1x128xf32>
    %20 = vector.broadcast %18 : vector<1x128xi32> to vector<64x128xi32>
    %21 = arith.cmpi eq, %2, %20 : vector<64x128xi32>
    %22 = arith.extui %21 : vector<64x128xi1> to vector<64x128xi32>
    %23 = arith.sitofp %22 : vector<64x128xi32> to vector<64x128xf32>
    %24 = vector.broadcast %19 : vector<1x128xf32> to vector<64x128xf32>
    %25 = arith.mulf %23, %24 : vector<64x128xf32>
    %26 = arith.addf %13, %25 : vector<64x128xf32>
    %27 = arith.mulf %19, %19 : vector<1x128xf32>
    %28 = vector.broadcast %27 : vector<1x128xf32> to vector<64x128xf32>
    %29 = arith.mulf %23, %28 : vector<64x128xf32>
    %30 = arith.addf %17, %29 : vector<64x128xf32>
    %c2 = arith.constant 2 : index
    %c0_9 = arith.constant 0 : index
    %31 = vector.load %arg1[%c2, %c0_9] : memref<8x128xi32, #tpu.memory_space<vmem>>, vector<1x128xi32>
    %c2_10 = arith.constant 2 : index
    %c0_11 = arith.constant 0 : index
    %32 = vector.load %arg2[%c2_10, %c0_11] : memref<8x128xf32, #tpu.memory_space<vmem>>, vector<1x128xf32>
    %33 = vector.broadcast %31 : vector<1x128xi32> to vector<64x128xi32>
    %34 = arith.cmpi eq, %2, %33 : vector<64x128xi32>
    %35 = arith.extui %34 : vector<64x128xi1> to vector<64x128xi32>
    %36 = arith.sitofp %35 : vector<64x128xi32> to vector<64x128xf32>
    %37 = vector.broadcast %32 : vector<1x128xf32> to vector<64x128xf32>
    %38 = arith.mulf %36, %37 : vector<64x128xf32>
    %39 = arith.addf %26, %38 : vector<64x128xf32>
    %40 = arith.mulf %32, %32 : vector<1x128xf32>
    %41 = vector.broadcast %40 : vector<1x128xf32> to vector<64x128xf32>
    %42 = arith.mulf %36, %41 : vector<64x128xf32>
    %43 = arith.addf %30, %42 : vector<64x128xf32>
    %c3 = arith.constant 3 : index
    %c0_12 = arith.constant 0 : index
    %44 = vector.load %arg1[%c3, %c0_12] : memref<8x128xi32, #tpu.memory_space<vmem>>, vector<1x128xi32>
    %c3_13 = arith.constant 3 : index
    %c0_14 = arith.constant 0 : index
    %45 = vector.load %arg2[%c3_13, %c0_14] : memref<8x128xf32, #tpu.memory_space<vmem>>, vector<1x128xf32>
    %46 = vector.broadcast %44 : vector<1x128xi32> to vector<64x128xi32>
    %47 = arith.cmpi eq, %2, %46 : vector<64x128xi32>
    %48 = arith.extui %47 : vector<64x128xi1> to vector<64x128xi32>
    %49 = arith.sitofp %48 : vector<64x128xi32> to vector<64x128xf32>
    %50 = vector.broadcast %45 : vector<1x128xf32> to vector<64x128xf32>
    %51 = arith.mulf %49, %50 : vector<64x128xf32>
    %52 = arith.addf %39, %51 : vector<64x128xf32>
    %53 = arith.mulf %45, %45 : vector<1x128xf32>
    %54 = vector.broadcast %53 : vector<1x128xf32> to vector<64x128xf32>
    %55 = arith.mulf %49, %54 : vector<64x128xf32>
    %56 = arith.addf %43, %55 : vector<64x128xf32>
    %c4 = arith.constant 4 : index
    %c0_15 = arith.constant 0 : index
    %57 = vector.load %arg1[%c4, %c0_15] : memref<8x128xi32, #tpu.memory_space<vmem>>, vector<1x128xi32>
    %c4_16 = arith.constant 4 : index
    %c0_17 = arith.constant 0 : index
    %58 = vector.load %arg2[%c4_16, %c0_17] : memref<8x128xf32, #tpu.memory_space<vmem>>, vector<1x128xf32>
    %59 = vector.broadcast %57 : vector<1x128xi32> to vector<64x128xi32>
    %60 = arith.cmpi eq, %2, %59 : vector<64x128xi32>
    %61 = arith.extui %60 : vector<64x128xi1> to vector<64x128xi32>
    %62 = arith.sitofp %61 : vector<64x128xi32> to vector<64x128xf32>
    %63 = vector.broadcast %58 : vector<1x128xf32> to vector<64x128xf32>
    %64 = arith.mulf %62, %63 : vector<64x128xf32>
    %65 = arith.addf %52, %64 : vector<64x128xf32>
    %66 = arith.mulf %58, %58 : vector<1x128xf32>
    %67 = vector.broadcast %66 : vector<1x128xf32> to vector<64x128xf32>
    %68 = arith.mulf %62, %67 : vector<64x128xf32>
    %69 = arith.addf %56, %68 : vector<64x128xf32>
    %c5 = arith.constant 5 : index
    %c0_18 = arith.constant 0 : index
    %70 = vector.load %arg1[%c5, %c0_18] : memref<8x128xi32, #tpu.memory_space<vmem>>, vector<1x128xi32>
    %c5_19 = arith.constant 5 : index
    %c0_20 = arith.constant 0 : index
    %71 = vector.load %arg2[%c5_19, %c0_20] : memref<8x128xf32, #tpu.memory_space<vmem>>, vector<1x128xf32>
    %72 = vector.broadcast %70 : vector<1x128xi32> to vector<64x128xi32>
    %73 = arith.cmpi eq, %2, %72 : vector<64x128xi32>
    %74 = arith.extui %73 : vector<64x128xi1> to vector<64x128xi32>
    %75 = arith.sitofp %74 : vector<64x128xi32> to vector<64x128xf32>
    %76 = vector.broadcast %71 : vector<1x128xf32> to vector<64x128xf32>
    %77 = arith.mulf %75, %76 : vector<64x128xf32>
    %78 = arith.addf %65, %77 : vector<64x128xf32>
    %79 = arith.mulf %71, %71 : vector<1x128xf32>
    %80 = vector.broadcast %79 : vector<1x128xf32> to vector<64x128xf32>
    %81 = arith.mulf %75, %80 : vector<64x128xf32>
    %82 = arith.addf %69, %81 : vector<64x128xf32>
    %c6 = arith.constant 6 : index
    %c0_21 = arith.constant 0 : index
    %83 = vector.load %arg1[%c6, %c0_21] : memref<8x128xi32, #tpu.memory_space<vmem>>, vector<1x128xi32>
    %c6_22 = arith.constant 6 : index
    %c0_23 = arith.constant 0 : index
    %84 = vector.load %arg2[%c6_22, %c0_23] : memref<8x128xf32, #tpu.memory_space<vmem>>, vector<1x128xf32>
    %85 = vector.broadcast %83 : vector<1x128xi32> to vector<64x128xi32>
    %86 = arith.cmpi eq, %2, %85 : vector<64x128xi32>
    %87 = arith.extui %86 : vector<64x128xi1> to vector<64x128xi32>
    %88 = arith.sitofp %87 : vector<64x128xi32> to vector<64x128xf32>
    %89 = vector.broadcast %84 : vector<1x128xf32> to vector<64x128xf32>
    %90 = arith.mulf %88, %89 : vector<64x128xf32>
    %91 = arith.addf %78, %90 : vector<64x128xf32>
    %92 = arith.mulf %84, %84 : vector<1x128xf32>
    %93 = vector.broadcast %92 : vector<1x128xf32> to vector<64x128xf32>
    %94 = arith.mulf %88, %93 : vector<64x128xf32>
    %95 = arith.addf %82, %94 : vector<64x128xf32>
    %c7 = arith.constant 7 : index
    %c0_24 = arith.constant 0 : index
    %96 = vector.load %arg1[%c7, %c0_24] : memref<8x128xi32, #tpu.memory_space<vmem>>, vector<1x128xi32>
    %c7_25 = arith.constant 7 : index
    %c0_26 = arith.constant 0 : index
    %97 = vector.load %arg2[%c7_25, %c0_26] : memref<8x128xf32, #tpu.memory_space<vmem>>, vector<1x128xf32>
    %98 = vector.broadcast %96 : vector<1x128xi32> to vector<64x128xi32>
    %99 = arith.cmpi eq, %2, %98 : vector<64x128xi32>
    %100 = arith.extui %99 : vector<64x128xi1> to vector<64x128xi32>
    %101 = arith.sitofp %100 : vector<64x128xi32> to vector<64x128xf32>
    %102 = vector.broadcast %97 : vector<1x128xf32> to vector<64x128xf32>
    %103 = arith.mulf %101, %102 : vector<64x128xf32>
    %104 = arith.addf %91, %103 : vector<64x128xf32>
    %105 = arith.mulf %97, %97 : vector<1x128xf32>
    %106 = vector.broadcast %105 : vector<1x128xf32> to vector<64x128xf32>
    %107 = arith.mulf %101, %106 : vector<64x128xf32>
    %108 = arith.addf %95, %107 : vector<64x128xf32>
    %cst_27 = arith.constant dense<0.000000e+00> : vector<8x128xf32>
    %109 = tpu.matmul %0, %104, %cst_27 {dimension_numbers = #tpu.dot_dimension_numbers<[1], [0], [0], [1], [0, 0, 1, 1], [], []>, precision = #tpu.contract_precision<fp32>} : vector<8x64xf32>, vector<64x128xf32>, vector<8x128xf32> -> vector<8x128xf32>
    %cst_28 = arith.constant dense<0.000000e+00> : vector<8x128xf32>
    %110 = tpu.matmul %1, %108, %cst_28 {dimension_numbers = #tpu.dot_dimension_numbers<[1], [0], [0], [1], [0, 0, 1, 1], [], []>, precision = #tpu.contract_precision<fp32>} : vector<8x64xf32>, vector<64x128xf32>, vector<8x128xf32> -> vector<8x128xf32>
    %111 = arith.mulf %109, %109 : vector<8x128xf32>
    %112 = arith.subf %111, %110 : vector<8x128xf32>
    %cst_29 = arith.constant 5.000000e-01 : f32
    %113 = vector.broadcast %cst_29 : f32 to vector<8x128xf32>
    %114 = arith.mulf %113, %112 : vector<8x128xf32>
    %c0_30 = arith.constant 0 : index
    %c0_31 = arith.constant 0 : index
    %115 = vector.load %arg6[%c0_30, %c0_31] : memref<104x1xf32, #tpu.memory_space<vmem>>, vector<32x1xf32>
    %c32 = arith.constant 32 : index
    %c0_32 = arith.constant 0 : index
    %116 = vector.load %arg6[%c32, %c0_32] : memref<104x1xf32, #tpu.memory_space<vmem>>, vector<32x1xf32>
    %c64 = arith.constant 64 : index
    %c0_33 = arith.constant 0 : index
    %117 = vector.load %arg6[%c64, %c0_33] : memref<104x1xf32, #tpu.memory_space<vmem>>, vector<32x1xf32>
    %c96 = arith.constant 96 : index
    %c0_34 = arith.constant 0 : index
    %118 = vector.load %arg6[%c96, %c0_34] : memref<104x1xf32, #tpu.memory_space<vmem>>, vector<1x1xf32>
    %c0_35 = arith.constant 0 : index
    %c0_36 = arith.constant 0 : index
    %119 = vector.load %arg4[%c0_35, %c0_36] : memref<32x8xf32, #tpu.memory_space<vmem>>, vector<32x8xf32>
    %cst_37 = arith.constant dense<0.000000e+00> : vector<32x128xf32>
    %120 = tpu.matmul %119, %114, %cst_37 {dimension_numbers = #tpu.dot_dimension_numbers<[1], [0], [0], [1], [0, 0, 1, 1], [], []>, precision = #tpu.contract_precision<fp32>} : vector<32x8xf32>, vector<8x128xf32>, vector<32x128xf32> -> vector<32x128xf32>
    %121 = vector.broadcast %115 : vector<32x1xf32> to vector<32x128xf32>
    %122 = arith.addf %120, %121 : vector<32x128xf32>
    %cst_38 = arith.constant 0.000000e+00 : f32
    %123 = vector.broadcast %cst_38 : f32 to vector<32x128xf32>
    %124 = arith.maximumf %122, %123 : vector<32x128xf32>
    %c0_39 = arith.constant 0 : index
    %c0_40 = arith.constant 0 : index
    %125 = vector.load %arg5[%c0_39, %c0_40] : memref<32x32xf32, #tpu.memory_space<vmem>>, vector<32x32xf32>
    %cst_41 = arith.constant dense<0.000000e+00> : vector<32x128xf32>
    %126 = tpu.matmul %125, %124, %cst_41 {dimension_numbers = #tpu.dot_dimension_numbers<[1], [0], [0], [1], [0, 0, 1, 1], [], []>, precision = #tpu.contract_precision<fp32>} : vector<32x32xf32>, vector<32x128xf32>, vector<32x128xf32> -> vector<32x128xf32>
    %127 = vector.broadcast %116 : vector<32x1xf32> to vector<32x128xf32>
    %128 = arith.addf %126, %127 : vector<32x128xf32>
    %cst_42 = arith.constant 0.000000e+00 : f32
    %129 = vector.broadcast %cst_42 : f32 to vector<32x128xf32>
    %130 = arith.maximumf %128, %129 : vector<32x128xf32>
    %131 = vector.broadcast %117 : vector<32x1xf32> to vector<32x128xf32>
    %132 = arith.mulf %130, %131 : vector<32x128xf32>
    %cst_43 = arith.constant dense<0.000000e+00> : vector<128xf32>
    %133 = vector.multi_reduction <add>, %132, %cst_43 [0] : vector<32x128xf32> to vector<128xf32>
    %134 = vector.shape_cast %133 : vector<128xf32> to vector<1x128xf32>
    %135 = vector.broadcast %118 : vector<1x1xf32> to vector<1x128xf32>
    %136 = arith.addf %134, %135 : vector<1x128xf32>
    %137 = arith.negf %136 : vector<1x128xf32>
    %138 = math.exp %137 : vector<1x128xf32>
    %cst_44 = arith.constant 1.000000e+00 : f32
    %139 = vector.broadcast %cst_44 : f32 to vector<1x128xf32>
    %140 = arith.addf %139, %138 : vector<1x128xf32>
    %141 = arith.divf %139, %140 : vector<1x128xf32>
    %c0_45 = arith.constant 0 : index
    %c0_46 = arith.constant 0 : index
    %142 = vector.load %arg7[%c0_45, %c0_46] : memref<1x128xf32, #tpu.memory_space<vmem>>, vector<1x128xf32>
    tpu.vector_store %arg7[%c0_45, %c0_46], %141 {strides = array<i32>} : memref<1x128xf32, #tpu.memory_space<vmem>>, vector<1x128xf32>,
    return
  }
  func.func @transform_0(%arg0: i32) -> (i32, i32) {
    %c0_i32 = arith.constant 0 : i32
    %c0_i32_0 = arith.constant 0 : i32
    return %c0_i32, %arg0 : i32, i32
  }
  func.func @transform_1(%arg0: i32) -> (i32, i32) {
    %c0_i32 = arith.constant 0 : i32
    %c0_i32_0 = arith.constant 0 : i32
    return %c0_i32, %arg0 : i32, i32
  }
  func.func @transform_2(%arg0: i32) -> (i32, i32) {
    %c0_i32 = arith.constant 0 : i32
    %c0_i32_0 = arith.constant 0 : i32
    %c0_i32_1 = arith.constant 0 : i32
    return %c0_i32, %c0_i32_0 : i32, i32
  }
  func.func @transform_3(%arg0: i32) -> (i32, i32) {
    %c0_i32 = arith.constant 0 : i32
    %c0_i32_0 = arith.constant 0 : i32
    %c0_i32_1 = arith.constant 0 : i32
    return %c0_i32, %c0_i32_0 : i32, i32
  }
  func.func @transform_4(%arg0: i32) -> (i32, i32) {
    %c0_i32 = arith.constant 0 : i32
    %c0_i32_0 = arith.constant 0 : i32
    %c0_i32_1 = arith.constant 0 : i32
    return %c0_i32, %c0_i32_0 : i32, i32
  }
  func.func @transform_5(%arg0: i32) -> (i32, i32) {
    %c0_i32 = arith.constant 0 : i32
    %c0_i32_0 = arith.constant 0 : i32
    %c0_i32_1 = arith.constant 0 : i32
    return %c0_i32, %c0_i32_0 : i32, i32
  }
  func.func @transform_6(%arg0: i32) -> (i32, i32) {
    %c0_i32 = arith.constant 0 : i32
    %c0_i32_0 = arith.constant 0 : i32
    return %c0_i32, %arg0 : i32, i32
  }
}

</mosaic_0001>

<llo_original>
// kernel: tpu_custom_call.1
$region0: #{tpu_custom_call.1}
  #allocation0 [shape = 'u32[]', space=smem, size = 0x4, offset = 0x4, fixed_abs, tag = 'smem constant byte address 0x4 - core index']
  #allocation1 [shape = 'u32[144,128]{1,0:T(1,128)}', space=vmem, size = 0x12000, scoped, tag = 'internal scratch']
  %s0 = inlined_call_operand.vmem [shape: s32[8,256], index: 0, kind: input, shape index: {}]
  %s1 = inlined_call_operand.vmem [shape: f32[8,256], index: 1, kind: input, shape index: {}]
  %s2 = inlined_call_operand.vmem [shape: f32[8,64], index: 2, kind: input, shape index: {}]
  %s3 = inlined_call_operand.vmem [shape: f32[32,8], index: 3, kind: input, shape index: {}]
  %s4 = inlined_call_operand.vmem [shape: f32[32,32], index: 4, kind: input, shape index: {}]
  %s5 = inlined_call_operand.vmem [shape: f32[104,1], index: 5, kind: input, shape index: {}]
  %s6 = inlined_call_operand.hbm [shape: f32[1,256], index: 6, kind: output, shape index: {}]
  %s7 = sld [smem:[#allocation0]]
  $region57: #{tpu_custom_call.1} parent=0
    _
  %s9 = ssub.s32 1, %s7
  %s10 = scalar_select 0, %s9, %s7
  $region1: #{tpu_custom_call.1} parent=0
    #allocation2 [shape = 'u8[1024]{0}', space=vmem, size = 0x400, scoped, tag = 'output window, operand 0']
    #allocation3 [shape = 's32[2]{0}', space=sflag, size = 0x8, scoped, tag = 'scoped memory for tpu_custom_call.1']
    %11 = vsyncpa [#allocation3], 0
    %s12 = scalar_lea.sflag [#allocation3], 1
    %13 = vsyncpa %s12, 0
    loop: start=0, step=1, limit=4
    $region2: #{tpu_custom_call.1} parent=1 // loop_pre_header
      _
    $region3: #{tpu_custom_call.1} parent=1 // loop_header
      %s15 = sphi 0, %s19
      %p16 = scmp.ge.s32.totalorder %s15, 4
      %s25 = sphi 0, %s27
      %s28 = sphi 0, %s25
      %s29 = sphi 0, %s28
      %s45 = sphi 0, %s29
      %s51 = sphi 0, %s53
      %s54 = sphi 0, %s51
      %s55 = sphi 0, %s54
      %s71 = sphi 0, %s55
      %s75 = sphi 0, %s75
      %s77 = sphi 0, %s75
      %s78 = sphi 0, %s77
      %s92 = sphi 0, %s78
      %s96 = sphi 0, %s96
      %s98 = sphi 0, %s96
      %s99 = sphi 0, %s98
      %s113 = sphi 0, %s99
      %s117 = sphi 0, %s117
      %s119 = sphi 0, %s117
      %s120 = sphi 0, %s119
      %s134 = sphi 0, %s120
      %s138 = sphi 0, %s138
      %s140 = sphi 0, %s138
      %s141 = sphi 0, %s140
      %s155 = sphi 0, %s141
      %s161 = sphi 0, %s163
      %s164 = sphi 0, %s161
      %s165 = sphi 0, %s164
      %s181 = sphi 0, %s165
    $region4: #{tpu_custom_call.1} parent=1 // loop_header_branch
      %18 = sbr.rel (%p16) target = $region8
    $region5: #{tpu_custom_call.1} parent=1 // loop_body
      %s20 = ssub.s32 %s15, 1
      %s21 = ssub.s32 %s15, 2
      %s22 = sadd.s32 %s15, 1
      %s23 = ssub.s32 %s15, %s22
      %p24 = scmp.eq.s32.totalorder %s23, 0
      %s26 = sadd.s32 %s25, 1
      %s27 = scalar_select %p24, %s25, %s26
      %p30 = pneg %p24
      %p31 = scmp.eq.s32.totalorder %s15, 1
      %p32 = por %p30, %p31
      %p33 = scmp.ne.s32.totalorder %s25, %s28
      %p34 = scmp.eq.s32.totalorder %s15, 0
      %p35 = por %p33, %p34
      %p36 = scmp.ne.s32.totalorder %s25, %s28
      %p37 = scmp.eq.s32.totalorder %s20, 1
      %p38 = por %p36, %p37
      %p39 = scmp.ne.s32.totalorder %s28, %s29
      %p40 = scmp.eq.s32.totalorder %s20, 0
      %p41 = por %p39, %p40
      %p42 = scmp.ne.s32.totalorder %s28, %s29
      %p43 = scmp.eq.s32.totalorder %s21, 1
      %p44 = por %p42, %p43
      %p46 = scmp.ne.s32.totalorder %s29, %s45
      %p47 = scmp.eq.s32.totalorder %s21, 0
      %p48 = por %p46, %p47
      %s49 = ssub.s32 %s15, %s22
      %p50 = scmp.eq.s32.totalorder %s49, 0
      %s52 = sadd.s32 %s51, 1
      %s53 = scalar_select %p50, %s51, %s52
      %p56 = pneg %p50
      %p57 = scmp.eq.s32.totalorder %s15, 1
      %p58 = por %p56, %p57
      %p59 = scmp.ne.s32.totalorder %s51, %s54
      %p60 = scmp.eq.s32.totalorder %s15, 0
      %p61 = por %p59, %p60
      %p62 = scmp.ne.s32.totalorder %s51, %s54
      %p63 = scmp.eq.s32.totalorder %s20, 1
      %p64 = por %p62, %p63
      %p65 = scmp.ne.s32.totalorder %s54, %s55
      %p66 = scmp.eq.s32.totalorder %s20, 0
      %p67 = por %p65, %p66
      %p68 = scmp.ne.s32.totalorder %s54, %s55
      %p69 = scmp.eq.s32.totalorder %s21, 1
      %p70 = por %p68, %p69
      %p72 = scmp.ne.s32.totalorder %s55, %s71
      %p73 = scmp.eq.s32.totalorder %s21, 0
      %p74 = por %p72, %p73
      %s76 = sadd.s32 %s75, 1
      %p79 = scmp.eq.s32.totalorder %s15, 1
      %p80 = scmp.ne.s32.totalorder %s75, %s77
      %p81 = scmp.eq.s32.totalorder %s15, 0
      %p82 = por %p80, %p81
      %p83 = scmp.ne.s32.totalorder %s75, %s77
      %p84 = scmp.eq.s32.totalorder %s20, 1
      %p85 = por %p83, %p84
      %p86 = scmp.ne.s32.totalorder %s77, %s78
      %p87 = scmp.eq.s32.totalorder %s20, 0
      %p88 = por %p86, %p87
      %p89 = scmp.ne.s32.totalorder %s77, %s78
      %p90 = scmp.eq.s32.totalorder %s21, 1
      %p91 = por %p89, %p90
      %p93 = scmp.ne.s32.totalorder %s78, %s92
      %p94 = scmp.eq.s32.totalorder %s21, 0
      %p95 = por %p93, %p94
      %s97 = sadd.s32 %s96, 1
      %p100 = scmp.eq.s32.totalorder %s15, 1
      %p101 = scmp.ne.s32.totalorder %s96, %s98
      %p102 = scmp.eq.s32.totalorder %s15, 0
      %p103 = por %p101, %p102
      %p104 = scmp.ne.s32.totalorder %s96, %s98
      %p105 = scmp.eq.s32.totalorder %s20, 1
      %p106 = por %p104, %p105
      %p107 = scmp.ne.s32.totalorder %s98, %s99
      %p108 = scmp.eq.s32.totalorder %s20, 0
      %p109 = por %p107, %p108
      %p110 = scmp.ne.s32.totalorder %s98, %s99
      %p111 = scmp.eq.s32.totalorder %s21, 1
      %p112 = por %p110, %p111
      %p114 = scmp.ne.s32.totalorder %s99, %s113
      %p115 = scmp.eq.s32.totalorder %s21, 0
      %p116 = por %p114, %p115
      %s118 = sadd.s32 %s117, 1
      %p121 = scmp.eq.s32.totalorder %s15, 1
      %p122 = scmp.ne.s32.totalorder %s117, %s119
      %p123 = scmp.eq.s32.totalorder %s15, 0
      %p124 = por %p122, %p123
      %p125 = scmp.ne.s32.totalorder %s117, %s119
      %p126 = scmp.eq.s32.totalorder %s20, 1
      %p127 = por %p125, %p126
      %p128 = scmp.ne.s32.totalorder %s119, %s120
      %p129 = scmp.eq.s32.totalorder %s20, 0
      %p130 = por %p128, %p129
      %p131 = scmp.ne.s32.totalorder %s119, %s120
      %p132 = scmp.eq.s32.totalorder %s21, 1
      %p133 = por %p131, %p132
      %p135 = scmp.ne.s32.totalorder %s120, %s134
      %p136 = scmp.eq.s32.totalorder %s21, 0
      %p137 = por %p135, %p136
      %s139 = sadd.s32 %s138, 1
      %p142 = scmp.eq.s32.totalorder %s15, 1
      %p143 = scmp.ne.s32.totalorder %s138, %s140
      %p144 = scmp.eq.s32.totalorder %s15, 0
      %p145 = por %p143, %p144
      %p146 = scmp.ne.s32.totalorder %s138, %s140
      %p147 = scmp.eq.s32.totalorder %s20, 1
      %p148 = por %p146, %p147
      %p149 = scmp.ne.s32.totalorder %s140, %s141
      %p150 = scmp.eq.s32.totalorder %s20, 0
      %p151 = por %p149, %p150
      %p152 = scmp.ne.s32.totalorder %s140, %s141
      %p153 = scmp.eq.s32.totalorder %s21, 1
      %p154 = por %p152, %p153
      %p156 = scmp.ne.s32.totalorder %s141, %s155
      %p157 = scmp.eq.s32.totalorder %s21, 0
      %p158 = por %p156, %p157
      %s159 = ssub.s32 %s15, %s22
      %p160 = scmp.eq.s32.totalorder %s159, 0
      %s162 = sadd.s32 %s161, 1
      %s163 = scalar_select %p160, %s161, %s162
      %p166 = pneg %p160
      %p167 = scmp.eq.s32.totalorder %s15, 1
      %p168 = por %p166, %p167
      %p169 = scmp.ne.s32.totalorder %s161, %s164
      %p170 = scmp.eq.s32.totalorder %s15, 0
      %p171 = por %p169, %p170
      %p172 = scmp.ne.s32.totalorder %s161, %s164
      %p173 = scmp.eq.s32.totalorder %s20, 1
      %p174 = por %p172, %p173
      %p175 = scmp.ne.s32.totalorder %s164, %s165
      %p176 = scmp.eq.s32.totalorder %s20, 0
      %p177 = por %p175, %p176
      %p178 = scmp.ne.s32.totalorder %s164, %s165
      %p179 = scmp.eq.s32.totalorder %s21, 1
      %p180 = por %p178, %p179
      %p182 = scmp.ne.s32.totalorder %s165, %s181
      %p183 = scmp.eq.s32.totalorder %s21, 0
      %p184 = por %p182, %p183
      %p185 = scmp.le.s32.totalorder 1, %s15
      %p186 = scmp.lt.s32.totalorder %s15, 3
      %p187 = pnand %p185, %p186
      %p188 = pneg %p187
      // Predicated region
      $region9: #{tpu_custom_call.1} parent=5 // pred_check
        _
      $region10: #{tpu_custom_call.1} parent=5 // pred_check_branch
        %190 = sbr.rel (%p187) target = $region12
      $region11: #{tpu_custom_call.1} parent=5 // pred_region
        %s191 = ssub.s32 %s15, 1
        // Predicated region
        $region13: #{tpu_custom_call.1} parent=11 // pred_check
          %p192 = pneg %p88
        $region14: #{tpu_custom_call.1} parent=11 // pred_check_branch
          %194 = sbr.rel (%p192) target = $region16
        $region15: #{tpu_custom_call.1} parent=11 // pred_region
          _
        $region16: #{tpu_custom_call.1} parent=11 // pred_fallthru
          _
        // Predicated region
        $region17: #{tpu_custom_call.1} parent=11 // pred_check
          %p195 = pneg %p109
        $region18: #{tpu_custom_call.1} parent=11 // pred_check_branch
          %197 = sbr.rel (%p195) target = $region20
        $region19: #{tpu_custom_call.1} parent=11 // pred_region
          _
        $region20: #{tpu_custom_call.1} parent=11 // pred_fallthru
          _
        // Predicated region
        $region21: #{tpu_custom_call.1} parent=11 // pred_check
          %p198 = pneg %p130
        $region22: #{tpu_custom_call.1} parent=11 // pred_check_branch
          %200 = sbr.rel (%p198) target = $region24
        $region23: #{tpu_custom_call.1} parent=11 // pred_region
          _
        $region24: #{tpu_custom_call.1} parent=11 // pred_fallthru
          _
        // Predicated region
        $region25: #{tpu_custom_call.1} parent=11 // pred_check
          %p201 = pneg %p151
        $region26: #{tpu_custom_call.1} parent=11 // pred_check_branch
          %203 = sbr.rel (%p201) target = $region28
        $region27: #{tpu_custom_call.1} parent=11 // pred_region
          _
        $region28: #{tpu_custom_call.1} parent=11 // pred_fallthru
          _
      $region12: #{tpu_custom_call.1} parent=5 // pred_fallthru
        _
      %p204 = scmp.lt.s32.totalorder %s15, 2
      // Predicated region
      $region29: #{tpu_custom_call.1} parent=5 // pred_check
        %p205 = pneg %p204
      $region30: #{tpu_custom_call.1} parent=5 // pred_check_branch
        %207 = sbr.rel (%p205) target = $region32
      $region31: #{tpu_custom_call.1} parent=5 // pred_region
        // Predicated region
        $region33: #{tpu_custom_call.1} parent=31 // pred_check
          %p208 = pneg %p35
        $region34: #{tpu_custom_call.1} parent=31 // pred_check_branch
          %210 = sbr.rel (%p208) target = $region36
        $region35: #{tpu_custom_call.1} parent=31 // pred_region
          %p211 = scmp.lt.s32.totalorder %s15, 1
          %s212 = scalar_select %p211, %s15, 1
          %s213 = smul.addr %s212, 8
          %s214 = scalar_lea.vmem %s0, %s213
        $region36: #{tpu_custom_call.1} parent=31 // pred_fallthru
          _
        // Predicated region
        $region37: #{tpu_custom_call.1} parent=31 // pred_check
          %p215 = pneg %p61
        $region38: #{tpu_custom_call.1} parent=31 // pred_check_branch
          %217 = sbr.rel (%p215) target = $region40
        $region39: #{tpu_custom_call.1} parent=31 // pred_region
          %p218 = scmp.lt.s32.totalorder %s15, 1
          %s219 = scalar_select %p218, %s15, 1
          %s220 = smul.addr %s219, 8
          %s221 = scalar_lea.vmem %s1, %s220
        $region40: #{tpu_custom_call.1} parent=31 // pred_fallthru
          _
      $region32: #{tpu_custom_call.1} parent=5 // pred_fallthru
        _
      %p222 = scmp.le.s32.totalorder 1, %s15
      %p223 = scmp.lt.s32.totalorder %s15, 3
      %p224 = pnand %p222, %p223
      %p225 = pneg %p224
      // Predicated region
      $region41: #{tpu_custom_call.1} parent=5 // pred_check
        _
      $region42: #{tpu_custom_call.1} parent=5 // pred_check_branch
        %227 = sbr.rel (%p224) target = $region44
      $region43: #{tpu_custom_call.1} parent=5 // pred_region
        %s228 = ssub.s32 %s15, 1
        %p229 = scmp.lt.s32.totalorder %s20, 1
        %s230 = scalar_select %p229, %s20, 1
        %s231 = smul.addr %s230, 8
        %s232 = scalar_lea.vmem %s0, %s231
        %p233 = pneg %p41
        %p234 = pneg %p38
        %p235 = scmp.lt.s32.totalorder %s20, 1
        %s236 = scalar_select %p235, %s20, 1
        %s237 = smul.addr %s236, 8
        %s238 = scalar_lea.vmem %s1, %s237
        %p239 = pneg %p67
        %p240 = pneg %p64
        %p241 = pneg %p88
        %p242 = pneg %p85
        %p243 = pneg %p109
        %p244 = pneg %p106
        %p245 = pneg %p130
        %p246 = pneg %p127
        %p247 = pneg %p151
        %p248 = pneg %p148
        %p249 = pneg %p177
        %p250 = pneg %p174
        %s251 = sand.u32 %s164, 1
        %s252 = scalar_lea.sflag [#allocation3], %s251
        %s253 = sand.u32 %s164, 1
        %s254 = scalar_lea.vmem [#allocation2], %s253
        %p255 = scmp.lt.s32.totalorder %s20, 1
        %s256 = scalar_select %p255, %s20, 1
        %s257 = smul.addr %s256, 8
        %s258 = scalar_lea.vmem %s0, %s257
        %p259 = scmp.lt.s32.totalorder %s20, 1
        %s260 = scalar_select %p259, %s20, 1
        %s261 = smul.addr %s260, 8
        %s262 = scalar_lea.vmem %s1, %s261
        %v263 = vld [vmem:[%s2] sm:$0xff]
        %v264 = vmul.f32 %v263, %v263
        %v265 = vlaneseq
        %v266 = vshrl.u32 %v265, 7
        %v267 = vadd.s32 %v266, 8
        %v268 = vadd.s32 %v266, 16
        %v269 = vadd.s32 %v266, 24
        %v270 = vadd.s32 %v266, 32
        %v271 = vadd.s32 %v266, 40
        %v272 = vadd.s32 %v266, 48
        %v273 = vadd.s32 %v266, 56
        %v274 = vld [vmem:[%s258] sm:$0x1]
        %v275 = vld [vmem:[%s262] sm:$0x1]
        %v276 = vlaneseq
        %v277 = vshrl.u32 %v276, 7
        %v278 = vsub.s32 0, %v277
        %v279 = vrot.slane %v274, %v278
        %vm280 = vcmp.eq.s32.totalorder %v266, %v279
        %vm281 = vcmp.eq.s32.totalorder %v267, %v279
        %vm282 = vcmp.eq.s32.totalorder %v268, %v279
        %vm283 = vcmp.eq.s32.totalorder %v269, %v279
        %vm284 = vcmp.eq.s32.totalorder %v270, %v279
        %vm285 = vcmp.eq.s32.totalorder %v271, %v279
        %vm286 = vcmp.eq.s32.totalorder %v272, %v279
        %vm287 = vcmp.eq.s32.totalorder %v273, %v279
        %v288 = vsel %vm280, 1, 0
        %v289 = vsel %vm281, 1, 0
        %v290 = vsel %vm282, 1, 0
        %v291 = vsel %vm283, 1, 0
        %v292 = vsel %vm284, 1, 0
        %v293 = vsel %vm285, 1, 0
        %v294 = vsel %vm286, 1, 0
        %v295 = vsel %vm287, 1, 0
        %v296 = vcvt.s32.f32 %v288
        %v297 = vcvt.s32.f32 %v289
        %v298 = vcvt.s32.f32 %v290
        %v299 = vcvt.s32.f32 %v291
        %v300 = vcvt.s32.f32 %v292
        %v301 = vcvt.s32.f32 %v293
        %v302 = vcvt.s32.f32 %v294
        %v303 = vcvt.s32.f32 %v295
        %v304 = vlaneseq
        %v305 = vshrl.u32 %v304, 7
        %v306 = vsub.s32 0, %v305
        %v307 = vrot.slane %v275, %v306
        %v308 = vmul.f32 %v296, %v307
        %v309 = vmul.f32 %v297, %v307
        %v310 = vmul.f32 %v298, %v307
        %v311 = vmul.f32 %v299, %v307
        %v312 = vmul.f32 %v300, %v307
        %v313 = vmul.f32 %v301, %v307
        %v314 = vmul.f32 %v302, %v307
        %v315 = vmul.f32 %v303, %v307
        %v316 = vadd.f32 %v308, 0.0
        %v317 = vadd.f32 %v309, 0.0
        %v318 = vadd.f32 %v310, 0.0
        %v319 = vadd.f32 %v311, 0.0
        %v320 = vadd.f32 %v312, 0.0
        %v321 = vadd.f32 %v313, 0.0
        %v322 = vadd.f32 %v314, 0.0
        %v323 = vadd.f32 %v315, 0.0
        %v324 = vmul.f32 %v275, %v275
        %v325 = vlaneseq
        %v326 = vshrl.u32 %v325, 7
        %v327 = vsub.s32 0, %v326
        %v328 = vrot.slane %v324, %v327
        %v329 = vmul.f32 %v296, %v328
        %v330 = vmul.f32 %v297, %v328
        %v331 = vmul.f32 %v298, %v328
        %v332 = vmul.f32 %v299, %v328
        %v333 = vmul.f32 %v300, %v328
        %v334 = vmul.f32 %v301, %v328
        %v335 = vmul.f32 %v302, %v328
        %v336 = vmul.f32 %v303, %v328
        %v337 = vadd.f32 %v329, 0.0
        %v338 = vadd.f32 %v330, 0.0
        %v339 = vadd.f32 %v331, 0.0
        %v340 = vadd.f32 %v332, 0.0
        %v341 = vadd.f32 %v333, 0.0
        %v342 = vadd.f32 %v334, 0.0
        %v343 = vadd.f32 %v335, 0.0
        %v344 = vadd.f32 %v336, 0.0
        %v345 = vld [vmem:[%s258 + $0x1] sm:$0x1]
        %v346 = vld [vmem:[%s262 + $0x1] sm:$0x1]
        %v347 = vlaneseq
        %v348 = vshrl.u32 %v347, 7
        %v349 = vsub.s32 0, %v348
        %v350 = vrot.slane %v345, %v349
        %vm351 = vcmp.eq.s32.totalorder %v266, %v350
        %vm352 = vcmp.eq.s32.totalorder %v267, %v350
        %vm353 = vcmp.eq.s32.totalorder %v268, %v350
        %vm354 = vcmp.eq.s32.totalorder %v269, %v350
        %vm355 = vcmp.eq.s32.totalorder %v270, %v350
        %vm356 = vcmp.eq.s32.totalorder %v271, %v350
        %vm357 = vcmp.eq.s32.totalorder %v272, %v350
        %vm358 = vcmp.eq.s32.totalorder %v273, %v350
        %v359 = vsel %vm351, 1, 0
        %v360 = vsel %vm352, 1, 0
        %v361 = vsel %vm353, 1, 0
        %v362 = vsel %vm354, 1, 0
        %v363 = vsel %vm355, 1, 0
        %v364 = vsel %vm356, 1, 0
        %v365 = vsel %vm357, 1, 0
        %v366 = vsel %vm358, 1, 0
        %v367 = vcvt.s32.f32 %v359
        %v368 = vcvt.s32.f32 %v360
        %v369 = vcvt.s32.f32 %v361
        %v370 = vcvt.s32.f32 %v362
        %v371 = vcvt.s32.f32 %v363
        %v372 = vcvt.s32.f32 %v364
        %v373 = vcvt.s32.f32 %v365
        %v374 = vcvt.s32.f32 %v366
        %v375 = vlaneseq
        %v376 = vshrl.u32 %v375, 7
        %v377 = vsub.s32 0, %v376
        %v378 = vrot.slane %v346, %v377
        %v379 = vmul.f32 %v367, %v378
        %v380 = vmul.f32 %v368, %v378
        %v381 = vmul.f32 %v369, %v378
        %v382 = vmul.f32 %v370, %v378
        %v383 = vmul.f32 %v371, %v378
        %v384 = vmul.f32 %v372, %v378
        %v385 = vmul.f32 %v373, %v378
        %v386 = vmul.f32 %v374, %v378
        %v387 = vadd.f32 %v316, %v379
        %v388 = vadd.f32 %v317, %v380
        %v389 = vadd.f32 %v318, %v381
        %v390 = vadd.f32 %v319, %v382
        %v391 = vadd.f32 %v320, %v383
        %v392 = vadd.f32 %v321, %v384
        %v393 = vadd.f32 %v322, %v385
        %v394 = vadd.f32 %v323, %v386
        %v395 = vmul.f32 %v346, %v346
        %v396 = vlaneseq
        %v397 = vshrl.u32 %v396, 7
        %v398 = vsub.s32 0, %v397
        %v399 = vrot.slane %v395, %v398
        %v400 = vmul.f32 %v367, %v399
        %v401 = vmul.f32 %v368, %v399
        %v402 = vmul.f32 %v369, %v399
        %v403 = vmul.f32 %v370, %v399
        %v404 = vmul.f32 %v371, %v399
        %v405 = vmul.f32 %v372, %v399
        %v406 = vmul.f32 %v373, %v399
        %v407 = vmul.f32 %v374, %v399
        %v408 = vadd.f32 %v337, %v400
        %v409 = vadd.f32 %v338, %v401
        %v410 = vadd.f32 %v339, %v402
        %v411 = vadd.f32 %v340, %v403
        %v412 = vadd.f32 %v341, %v404
        %v413 = vadd.f32 %v342, %v405
        %v414 = vadd.f32 %v343, %v406
        %v415 = vadd.f32 %v344, %v407
        %v416 = vld [vmem:[%s258 + $0x2] sm:$0x1]
        %v417 = vld [vmem:[%s262 + $0x2] sm:$0x1]
        %v418 = vlaneseq
        %v419 = vshrl.u32 %v418, 7
        %v420 = vsub.s32 0, %v419
        %v421 = vrot.slane %v416, %v420
        %vm422 = vcmp.eq.s32.totalorder %v266, %v421
        %vm423 = vcmp.eq.s32.totalorder %v267, %v421
        %vm424 = vcmp.eq.s32.totalorder %v268, %v421
        %vm425 = vcmp.eq.s32.totalorder %v269, %v421
        %vm426 = vcmp.eq.s32.totalorder %v270, %v421
        %vm427 = vcmp.eq.s32.totalorder %v271, %v421
        %vm428 = vcmp.eq.s32.totalorder %v272, %v421
        %vm429 = vcmp.eq.s32.totalorder %v273, %v421
        %v430 = vsel %vm422, 1, 0
        %v431 = vsel %vm423, 1, 0
        %v432 = vsel %vm424, 1, 0
        %v433 = vsel %vm425, 1, 0
        %v434 = vsel %vm426, 1, 0
        %v435 = vsel %vm427, 1, 0
        %v436 = vsel %vm428, 1, 0
        %v437 = vsel %vm429, 1, 0
        %v438 = vcvt.s32.f32 %v430
        %v439 = vcvt.s32.f32 %v431
        %v440 = vcvt.s32.f32 %v432
        %v441 = vcvt.s32.f32 %v433
        %v442 = vcvt.s32.f32 %v434
        %v443 = vcvt.s32.f32 %v435
        %v444 = vcvt.s32.f32 %v436
        %v445 = vcvt.s32.f32 %v437
        %v446 = vlaneseq
        %v447 = vshrl.u32 %v446, 7
        %v448 = vsub.s32 0, %v447
        %v449 = vrot.slane %v417, %v448
        %v450 = vmul.f32 %v438, %v449
        %v451 = vmul.f32 %v439, %v449
        %v452 = vmul.f32 %v440, %v449
        %v453 = vmul.f32 %v441, %v449
        %v454 = vmul.f32 %v442, %v449
        %v455 = vmul.f32 %v443, %v449
        %v456 = vmul.f32 %v444, %v449
        %v457 = vmul.f32 %v445, %v449
        %v458 = vadd.f32 %v387, %v450
        %v459 = vadd.f32 %v388, %v451
        %v460 = vadd.f32 %v389, %v452
        %v461 = vadd.f32 %v390, %v453
        %v462 = vadd.f32 %v391, %v454
        %v463 = vadd.f32 %v392, %v455
        %v464 = vadd.f32 %v393, %v456
        %v465 = vadd.f32 %v394, %v457
        %v466 = vmul.f32 %v417, %v417
        %v467 = vlaneseq
        %v468 = vshrl.u32 %v467, 7
        %v469 = vsub.s32 0, %v468
        %v470 = vrot.slane %v466, %v469
        %v471 = vmul.f32 %v438, %v470
        %v472 = vmul.f32 %v439, %v470
        %v473 = vmul.f32 %v440, %v470
        %v474 = vmul.f32 %v441, %v470
        %v475 = vmul.f32 %v442, %v470
        %v476 = vmul.f32 %v443, %v470
        %v477 = vmul.f32 %v444, %v470
        %v478 = vmul.f32 %v445, %v470
        %v479 = vadd.f32 %v408, %v471
        %v480 = vadd.f32 %v409, %v472
        %v481 = vadd.f32 %v410, %v473
        %v482 = vadd.f32 %v411, %v474
        %v483 = vadd.f32 %v412, %v475
        %v484 = vadd.f32 %v413, %v476
        %v485 = vadd.f32 %v414, %v477
        %v486 = vadd.f32 %v415, %v478
        %v487 = vld [vmem:[%s258 + $0x3] sm:$0x1]
        %v488 = vld [vmem:[%s262 + $0x3] sm:$0x1]
        %v489 = vlaneseq
        %v490 = vshrl.u32 %v489, 7
        %v491 = vsub.s32 0, %v490
        %v492 = vrot.slane %v487, %v491
        %vm493 = vcmp.eq.s32.totalorder %v266, %v492
        %vm494 = vcmp.eq.s32.totalorder %v267, %v492
        %vm495 = vcmp.eq.s32.totalorder %v268, %v492
        %vm496 = vcmp.eq.s32.totalorder %v269, %v492
        %vm497 = vcmp.eq.s32.totalorder %v270, %v492
        %vm498 = vcmp.eq.s32.totalorder %v271, %v492
        %vm499 = vcmp.eq.s32.totalorder %v272, %v492
        %vm500 = vcmp.eq.s32.totalorder %v273, %v492
        %v501 = vsel %vm493, 1, 0
        %v502 = vsel %vm494, 1, 0
        %v503 = vsel %vm495, 1, 0
        %v504 = vsel %vm496, 1, 0
        %v505 = vsel %vm497, 1, 0
        %v506 = vsel %vm498, 1, 0
        %v507 = vsel %vm499, 1, 0
        %v508 = vsel %vm500, 1, 0
        %v509 = vcvt.s32.f32 %v501
        %v510 = vcvt.s32.f32 %v502
        %v511 = vcvt.s32.f32 %v503
        %v512 = vcvt.s32.f32 %v504
        %v513 = vcvt.s32.f32 %v505
        %v514 = vcvt.s32.f32 %v506
        %v515 = vcvt.s32.f32 %v507
        %v516 = vcvt.s32.f32 %v508
        %v517 = vlaneseq
        %v518 = vshrl.u32 %v517, 7
        %v519 = vsub.s32 0, %v518
        %v520 = vrot.slane %v488, %v519
        %v521 = vmul.f32 %v509, %v520
        %v522 = vmul.f32 %v510, %v520
        %v523 = vmul.f32 %v511, %v520
        %v524 = vmul.f32 %v512, %v520
        %v525 = vmul.f32 %v513, %v520
        %v526 = vmul.f32 %v514, %v520
        %v527 = vmul.f32 %v515, %v520
        %v528 = vmul.f32 %v516, %v520
        %v529 = vadd.f32 %v458, %v521
        %v530 = vadd.f32 %v459, %v522
        %v531 = vadd.f32 %v460, %v523
        %v532 = vadd.f32 %v461, %v524
        %v533 = vadd.f32 %v462, %v525
        %v534 = vadd.f32 %v463, %v526
        %v535 = vadd.f32 %v464, %v527
        %v536 = vadd.f32 %v465, %v528
        %v537 = vmul.f32 %v488, %v488
        %v538 = vlaneseq
        %v539 = vshrl.u32 %v538, 7
        %v540 = vsub.s32 0, %v539
        %v541 = vrot.slane %v537, %v540
        %v542 = vmul.f32 %v509, %v541
        %v543 = vmul.f32 %v510, %v541
        %v544 = vmul.f32 %v511, %v541
        %v545 = vmul.f32 %v512, %v541
        %v546 = vmul.f32 %v513, %v541
        %v547 = vmul.f32 %v514, %v541
        %v548 = vmul.f32 %v515, %v541
        %v549 = vmul.f32 %v516, %v541
        %v550 = vadd.f32 %v479, %v542
        %v551 = vadd.f32 %v480, %v543
        %v552 = vadd.f32 %v481, %v544
        %v553 = vadd.f32 %v482, %v545
        %v554 = vadd.f32 %v483, %v546
        %v555 = vadd.f32 %v484, %v547
        %v556 = vadd.f32 %v485, %v548
        %v557 = vadd.f32 %v486, %v549
        %v558 = vld [vmem:[%s258 + $0x4] sm:$0x1]
        %v559 = vld [vmem:[%s262 + $0x4] sm:$0x1]
        %v560 = vlaneseq
        %v561 = vshrl.u32 %v560, 7
        %v562 = vsub.s32 0, %v561
        %v563 = vrot.slane %v558, %v562
        %vm564 = vcmp.eq.s32.totalorder %v266, %v563
        %vm565 = vcmp.eq.s32.totalorder %v267, %v563
        %vm566 = vcmp.eq.s32.totalorder %v268, %v563
        %vm567 = vcmp.eq.s32.totalorder %v269, %v563
        %vm568 = vcmp.eq.s32.totalorder %v270, %v563
        %vm569 = vcmp.eq.s32.totalorder %v271, %v563
        %vm570 = vcmp.eq.s32.totalorder %v272, %v563
        %vm571 = vcmp.eq.s32.totalorder %v273, %v563
        %v572 = vsel %vm564, 1, 0
        %v573 = vsel %vm565, 1, 0
        %v574 = vsel %vm566, 1, 0
        %v575 = vsel %vm567, 1, 0
        %v576 = vsel %vm568, 1, 0
        %v577 = vsel %vm569, 1, 0
        %v578 = vsel %vm570, 1, 0
        %v579 = vsel %vm571, 1, 0
        %v580 = vcvt.s32.f32 %v572
        %v581 = vcvt.s32.f32 %v573
        %v582 = vcvt.s32.f32 %v574
        %v583 = vcvt.s32.f32 %v575
        %v584 = vcvt.s32.f32 %v576
        %v585 = vcvt.s32.f32 %v577
        %v586 = vcvt.s32.f32 %v578
        %v587 = vcvt.s32.f32 %v579
        %v588 = vlaneseq
        %v589 = vshrl.u32 %v588, 7
        %v590 = vsub.s32 0, %v589
        %v591 = vrot.slane %v559, %v590
        %v592 = vmul.f32 %v580, %v591
        %v593 = vmul.f32 %v581, %v591
        %v594 = vmul.f32 %v582, %v591
        %v595 = vmul.f32 %v583, %v591
        %v596 = vmul.f32 %v584, %v591
        %v597 = vmul.f32 %v585, %v591
        %v598 = vmul.f32 %v586, %v591
        %v599 = vmul.f32 %v587, %v591
        %v600 = vadd.f32 %v529, %v592
        %v601 = vadd.f32 %v530, %v593
        %v602 = vadd.f32 %v531, %v594
        %v603 = vadd.f32 %v532, %v595
        %v604 = vadd.f32 %v533, %v596
        %v605 = vadd.f32 %v534, %v597
        %v606 = vadd.f32 %v535, %v598
        %v607 = vadd.f32 %v536, %v599
        %v608 = vmul.f32 %v559, %v559
        %v609 = vlaneseq
        %v610 = vshrl.u32 %v609, 7
        %v611 = vsub.s32 0, %v610
        %v612 = vrot.slane %v608, %v611
        %v613 = vmul.f32 %v580, %v612
        %v614 = vmul.f32 %v581, %v612
        %v615 = vmul.f32 %v582, %v612
        %v616 = vmul.f32 %v583, %v612
        %v617 = vmul.f32 %v584, %v612
        %v618 = vmul.f32 %v585, %v612
        %v619 = vmul.f32 %v586, %v612
        %v620 = vmul.f32 %v587, %v612
        %v621 = vadd.f32 %v550, %v613
        %v622 = vadd.f32 %v551, %v614
        %v623 = vadd.f32 %v552, %v615
        %v624 = vadd.f32 %v553, %v616
        %v625 = vadd.f32 %v554, %v617
        %v626 = vadd.f32 %v555, %v618
        %v627 = vadd.f32 %v556, %v619
        %v628 = vadd.f32 %v557, %v620
        %v629 = vld [vmem:[%s258 + $0x5] sm:$0x1]
        %v630 = vld [vmem:[%s262 + $0x5] sm:$0x1]
        %v631 = vlaneseq
        %v632 = vshrl.u32 %v631, 7
        %v633 = vsub.s32 0, %v632
        %v634 = vrot.slane %v629, %v633
        %vm635 = vcmp.eq.s32.totalorder %v266, %v634
        %vm636 = vcmp.eq.s32.totalorder %v267, %v634
        %vm637 = vcmp.eq.s32.totalorder %v268, %v634
        %vm638 = vcmp.eq.s32.totalorder %v269, %v634
        %vm639 = vcmp.eq.s32.totalorder %v270, %v634
        %vm640 = vcmp.eq.s32.totalorder %v271, %v634
        %vm641 = vcmp.eq.s32.totalorder %v272, %v634
        %vm642 = vcmp.eq.s32.totalorder %v273, %v634
        %v643 = vsel %vm635, 1, 0
        %v644 = vsel %vm636, 1, 0
        %v645 = vsel %vm637, 1, 0
        %v646 = vsel %vm638, 1, 0
        %v647 = vsel %vm639, 1, 0
        %v648 = vsel %vm640, 1, 0
        %v649 = vsel %vm641, 1, 0
        %v650 = vsel %vm642, 1, 0
        %v651 = vcvt.s32.f32 %v643
        %v652 = vcvt.s32.f32 %v644
        %v653 = vcvt.s32.f32 %v645
        %v654 = vcvt.s32.f32 %v646
        %v655 = vcvt.s32.f32 %v647
        %v656 = vcvt.s32.f32 %v648
        %v657 = vcvt.s32.f32 %v649
        %v658 = vcvt.s32.f32 %v650
        %v659 = vlaneseq
        %v660 = vshrl.u32 %v659, 7
        %v661 = vsub.s32 0, %v660
        %v662 = vrot.slane %v630, %v661
        %v663 = vmul.f32 %v651, %v662
        %v664 = vmul.f32 %v652, %v662
        %v665 = vmul.f32 %v653, %v662
        %v666 = vmul.f32 %v654, %v662
        %v667 = vmul.f32 %v655, %v662
        %v668 = vmul.f32 %v656, %v662
        %v669 = vmul.f32 %v657, %v662
        %v670 = vmul.f32 %v658, %v662
        %v671 = vadd.f32 %v600, %v663
        %v672 = vadd.f32 %v601, %v664
        %v673 = vadd.f32 %v602, %v665
        %v674 = vadd.f32 %v603, %v666
        %v675 = vadd.f32 %v604, %v667
        %v676 = vadd.f32 %v605, %v668
        %v677 = vadd.f32 %v606, %v669
        %v678 = vadd.f32 %v607, %v670
        %v679 = vmul.f32 %v630, %v630
        %v680 = vlaneseq
        %v681 = vshrl.u32 %v680, 7
        %v682 = vsub.s32 0, %v681
        %v683 = vrot.slane %v679, %v682
        %v684 = vmul.f32 %v651, %v683
        %v685 = vmul.f32 %v652, %v683
        %v686 = vmul.f32 %v653, %v683
        %v687 = vmul.f32 %v654, %v683
        %v688 = vmul.f32 %v655, %v683
        %v689 = vmul.f32 %v656, %v683
        %v690 = vmul.f32 %v657, %v683
        %v691 = vmul.f32 %v658, %v683
        %v692 = vadd.f32 %v621, %v684
        %v693 = vadd.f32 %v622, %v685
        %v694 = vadd.f32 %v623, %v686
        %v695 = vadd.f32 %v624, %v687
        %v696 = vadd.f32 %v625, %v688
        %v697 = vadd.f32 %v626, %v689
        %v698 = vadd.f32 %v627, %v690
        %v699 = vadd.f32 %v628, %v691
        %v700 = vld [vmem:[%s258 + $0x6] sm:$0x1]
        %v701 = vld [vmem:[%s262 + $0x6] sm:$0x1]
        %v702 = vlaneseq
        %v703 = vshrl.u32 %v702, 7
        %v704 = vsub.s32 0, %v703
        %v705 = vrot.slane %v700, %v704
        %vm706 = vcmp.eq.s32.totalorder %v266, %v705
        %vm707 = vcmp.eq.s32.totalorder %v267, %v705
        %vm708 = vcmp.eq.s32.totalorder %v268, %v705
        %vm709 = vcmp.eq.s32.totalorder %v269, %v705
        %vm710 = vcmp.eq.s32.totalorder %v270, %v705
        %vm711 = vcmp.eq.s32.totalorder %v271, %v705
        %vm712 = vcmp.eq.s32.totalorder %v272, %v705
        %vm713 = vcmp.eq.s32.totalorder %v273, %v705
        %v714 = vsel %vm706, 1, 0
        %v715 = vsel %vm707, 1, 0
        %v716 = vsel %vm708, 1, 0
        %v717 = vsel %vm709, 1, 0
        %v718 = vsel %vm710, 1, 0
        %v719 = vsel %vm711, 1, 0
        %v720 = vsel %vm712, 1, 0
        %v721 = vsel %vm713, 1, 0
        %v722 = vcvt.s32.f32 %v714
        %v723 = vcvt.s32.f32 %v715
        %v724 = vcvt.s32.f32 %v716
        %v725 = vcvt.s32.f32 %v717
        %v726 = vcvt.s32.f32 %v718
        %v727 = vcvt.s32.f32 %v719
        %v728 = vcvt.s32.f32 %v720
        %v729 = vcvt.s32.f32 %v721
        %v730 = vlaneseq
        %v731 = vshrl.u32 %v730, 7
        %v732 = vsub.s32 0, %v731
        %v733 = vrot.slane %v701, %v732
        %v734 = vmul.f32 %v722, %v733
        %v735 = vmul.f32 %v723, %v733
        %v736 = vmul.f32 %v724, %v733
        %v737 = vmul.f32 %v725, %v733
        %v738 = vmul.f32 %v726, %v733
        %v739 = vmul.f32 %v727, %v733
        %v740 = vmul.f32 %v728, %v733
        %v741 = vmul.f32 %v729, %v733
        %v742 = vadd.f32 %v671, %v734
        %v743 = vadd.f32 %v672, %v735
        %v744 = vadd.f32 %v673, %v736
        %v745 = vadd.f32 %v674, %v737
        %v746 = vadd.f32 %v675, %v738
        %v747 = vadd.f32 %v676, %v739
        %v748 = vadd.f32 %v677, %v740
        %v749 = vadd.f32 %v678, %v741
        %v750 = vmul.f32 %v701, %v701
        %v751 = vlaneseq
        %v752 = vshrl.u32 %v751, 7
        %v753 = vsub.s32 0, %v752
        %v754 = vrot.slane %v750, %v753
        %v755 = vmul.f32 %v722, %v754
        %v756 = vmul.f32 %v723, %v754
        %v757 = vmul.f32 %v724, %v754
        %v758 = vmul.f32 %v725, %v754
        %v759 = vmul.f32 %v726, %v754
        %v760 = vmul.f32 %v727, %v754
        %v761 = vmul.f32 %v728, %v754
        %v762 = vmul.f32 %v729, %v754
        %v763 = vadd.f32 %v692, %v755
        %v764 = vadd.f32 %v693, %v756
        %v765 = vadd.f32 %v694, %v757
        %v766 = vadd.f32 %v695, %v758
        %v767 = vadd.f32 %v696, %v759
        %v768 = vadd.f32 %v697, %v760
        %v769 = vadd.f32 %v698, %v761
        %v770 = vadd.f32 %v699, %v762
        %v771 = vld [vmem:[%s258 + $0x7] sm:$0x1]
        %v772 = vld [vmem:[%s262 + $0x7] sm:$0x1]
        %v773 = vlaneseq
        %v774 = vshrl.u32 %v773, 7
        %v775 = vsub.s32 0, %v774
        %v776 = vrot.slane %v771, %v775
        %vm777 = vcmp.eq.s32.totalorder %v266, %v776
        %vm778 = vcmp.eq.s32.totalorder %v267, %v776
        %vm779 = vcmp.eq.s32.totalorder %v268, %v776
        %vm780 = vcmp.eq.s32.totalorder %v269, %v776
        %vm781 = vcmp.eq.s32.totalorder %v270, %v776
        %vm782 = vcmp.eq.s32.totalorder %v271, %v776
        %vm783 = vcmp.eq.s32.totalorder %v272, %v776
        %vm784 = vcmp.eq.s32.totalorder %v273, %v776
        %v785 = vsel %vm777, 1, 0
        %v786 = vsel %vm778, 1, 0
        %v787 = vsel %vm779, 1, 0
        %v788 = vsel %vm780, 1, 0
        %v789 = vsel %vm781, 1, 0
        %v790 = vsel %vm782, 1, 0
        %v791 = vsel %vm783, 1, 0
        %v792 = vsel %vm784, 1, 0
        %v793 = vcvt.s32.f32 %v785
        %v794 = vcvt.s32.f32 %v786
        %v795 = vcvt.s32.f32 %v787
        %v796 = vcvt.s32.f32 %v788
        %v797 = vcvt.s32.f32 %v789
        %v798 = vcvt.s32.f32 %v790
        %v799 = vcvt.s32.f32 %v791
        %v800 = vcvt.s32.f32 %v792
        %v801 = vlaneseq
        %v802 = vshrl.u32 %v801, 7
        %v803 = vsub.s32 0, %v802
        %v804 = vrot.slane %v772, %v803
        %v805 = vmul.f32 %v793, %v804
        %v806 = vmul.f32 %v794, %v804
        %v807 = vmul.f32 %v795, %v804
        %v808 = vmul.f32 %v796, %v804
        %v809 = vmul.f32 %v797, %v804
        %v810 = vmul.f32 %v798, %v804
        %v811 = vmul.f32 %v799, %v804
        %v812 = vmul.f32 %v800, %v804
        %v813 = vadd.f32 %v742, %v805
        %v814 = vadd.f32 %v743, %v806
        %v815 = vadd.f32 %v744, %v807
        %v816 = vadd.f32 %v745, %v808
        %v817 = vadd.f32 %v746, %v809
        %v818 = vadd.f32 %v747, %v810
        %v819 = vadd.f32 %v748, %v811
        %v820 = vadd.f32 %v749, %v812
        %v821 = vmul.f32 %v772, %v772
        %v822 = vlaneseq
        %v823 = vshrl.u32 %v822, 7
        %v824 = vsub.s32 0, %v823
        %v825 = vrot.slane %v821, %v824
        %v826 = vmul.f32 %v793, %v825
        %v827 = vmul.f32 %v794, %v825
        %v828 = vmul.f32 %v795, %v825
        %v829 = vmul.f32 %v796, %v825
        %v830 = vmul.f32 %v797, %v825
        %v831 = vmul.f32 %v798, %v825
        %v832 = vmul.f32 %v799, %v825
        %v833 = vmul.f32 %v800, %v825
        %v834 = vadd.f32 %v763, %v826
        %v835 = vadd.f32 %v764, %v827
        %v836 = vadd.f32 %v765, %v828
        %v837 = vadd.f32 %v766, %v829
        %v838 = vadd.f32 %v767, %v830
        %v839 = vadd.f32 %v768, %v831
        %v840 = vadd.f32 %v769, %v832
        %v841 = vadd.f32 %v770, %v833
        %vm842 = vcmask 523264
        %v844 = vsel %vm842, %v263, 0
        %846 = vmatprep.subr.mxu0 0.0
        %847 = vmatpush1.msra.mxu0 0.0
        %848 = vmatprep.subr.mxu0 0.0
        %849 = vmatpush1.msra.mxu0 0.0
        %850 = vmatprep.subr.mxu0 0.0
        %851 = vmatpush1.msra.mxu0 0.0
        %852 = vmatprep.subr.mxu0 0.0
        %853 = vmatpush1.msra.mxu0 0.0
        %854 = vmatprep.subr.mxu0 0.0
        %855 = vmatpush1.msra.mxu0 0.0
        %856 = vmatprep.subr.mxu0 0.0
        %857 = vmatpush1.msra.mxu0 0.0
        %858 = vmatprep.subr.mxu0 0.0
        %859 = vmatpush1.msra.mxu0 0.0
        %860 = vmatprep.subr.mxu0 0.0
        %861 = vmatpush1.msra.mxu0 0.0
        %862 = vmatprep.subr.mxu0 0.0
        %v863 = vand.u32 %v820, 4294901760
        %864 = vmatpush1.msra.mxu0 %v863
        %865 = vmatprep.subr.mxu0 0.0
        %v866 = vand.u32 %v819, 4294901760
        %867 = vmatpush1.msra.mxu0 %v866
        %868 = vmatprep.subr.mxu0 0.0
        %v869 = vand.u32 %v818, 4294901760
        %870 = vmatpush1.msra.mxu0 %v869
        %871 = vmatprep.subr.mxu0 0.0
        %v872 = vand.u32 %v817, 4294901760
        %873 = vmatpush1.msra.mxu0 %v872
        %874 = vmatprep.subr.mxu0 0.0
        %v875 = vand.u32 %v816, 4294901760
        %876 = vmatpush1.msra.mxu0 %v875
        %877 = vmatprep.subr.mxu0 0.0
        %v878 = vand.u32 %v815, 4294901760
        %879 = vmatpush1.msra.mxu0 %v878
        %880 = vmatprep.subr.mxu0 0.0
        %v881 = vand.u32 %v814, 4294901760
        %882 = vmatpush1.msra.mxu0 %v881
        %883 = vmatprep.subr.mxu0 0.0
        %v884 = vand.u32 %v813, 4294901760
        %885 = vmatpush1.msra.mxu0 %v884
        %886 = vmatprep.subr.mxu0 0.0
        %887 = vmatpush2.msra.mxu0 0.0
        %888 = vmatprep.subr.mxu0 0.0
        %889 = vmatpush2.msra.mxu0 0.0
        %890 = vmatprep.subr.mxu0 0.0
        %891 = vmatpush2.msra.mxu0 0.0
        %892 = vmatprep.subr.mxu0 0.0
        %893 = vmatpush2.msra.mxu0 0.0
        %894 = vmatprep.subr.mxu0 0.0
        %895 = vmatpush2.msra.mxu0 0.0
        %896 = vmatprep.subr.mxu0 0.0
        %897 = vmatpush2.msra.mxu0 0.0
        %898 = vmatprep.subr.mxu0 0.0
        %899 = vmatpush2.msra.mxu0 0.0
        %900 = vmatprep.subr.mxu0 0.0
        %901 = vmatpush2.msra.mxu0 0.0
        %902 = vmatprep.subr.mxu0 0.0
        %903 = vmatpush2.msra.mxu0 0.0
        %904 = vmatprep.subr.mxu0 0.0
        %905 = vmatpush2.msra.mxu0 0.0
        %906 = vmatprep.subr.mxu0 0.0
        %907 = vmatpush2.msra.mxu0 0.0
        %908 = vmatprep.subr.mxu0 0.0
        %909 = vmatpush2.msra.mxu0 0.0
        %910 = vmatprep.subr.mxu0 0.0
        %911 = vmatpush2.msra.mxu0 0.0
        %912 = vmatprep.subr.mxu0 0.0
        %913 = vmatpush2.msra.mxu0 0.0
        %914 = vmatprep.subr.mxu0 0.0
        %915 = vmatpush2.msra.mxu0 0.0
        %916 = vmatprep.subr.mxu0 0.0
        %917 = vmatpush2.msra.mxu0 0.0
        %918 = vmatprep.mubr.f32.mxu0 0.0
        %v919 = vand.u32 %v844, 4294901760
        %v920 = vsub.f32 %v844, %v919
        %v921 = vand.u32 %v920, 4294901760
        %v922 = vsub.f32 %v920, %v921
        %v923 = vand.u32 %v922, 4294901760
        %924 = vmatmul.mubr.f32.gmra.mxu0 %v923
        %v925 = vpop.f32.mrf.mxu0
        %v926 = vadd.f32 0.0, %v925
        %v927 = vpop.f32.mrf.mxu0
        %928 = vdwg.mxu0
        %929 = vmatprep.subr.mxu0 0.0
        %930 = vmatpush1.msra.mxu0 0.0
        %931 = vmatprep.subr.mxu0 0.0
        %932 = vmatpush1.msra.mxu0 0.0
        %933 = vmatprep.subr.mxu0 0.0
        %934 = vmatpush1.msra.mxu0 0.0
        %935 = vmatprep.subr.mxu0 0.0
        %936 = vmatpush1.msra.mxu0 0.0
        %937 = vmatprep.subr.mxu0 0.0
        %938 = vmatpush1.msra.mxu0 0.0
        %939 = vmatprep.subr.mxu0 0.0
        %940 = vmatpush1.msra.mxu0 0.0
        %941 = vmatprep.subr.mxu0 0.0
        %942 = vmatpush1.msra.mxu0 0.0
        %943 = vmatprep.subr.mxu0 0.0
        %944 = vmatpush1.msra.mxu0 0.0
        %945 = vmatprep.subr.mxu0 0.0
        %v946 = vand.u32 %v820, 4294901760
        %v947 = vsub.f32 %v820, %v946
        %v948 = vand.u32 %v947, 4294901760
        %v949 = vsub.f32 %v947, %v948
        %v950 = vand.u32 %v949, 4294901760
        %951 = vmatpush1.msra.mxu0 %v950
        %952 = vmatprep.subr.mxu0 0.0
        %v953 = vand.u32 %v819, 4294901760
        %v954 = vsub.f32 %v819, %v953
        %v955 = vand.u32 %v954, 4294901760
        %v956 = vsub.f32 %v954, %v955
        %v957 = vand.u32 %v956, 4294901760
        %958 = vmatpush1.msra.mxu0 %v957
        %959 = vmatprep.subr.mxu0 0.0
        %v960 = vand.u32 %v818, 4294901760
        %v961 = vsub.f32 %v818, %v960
        %v962 = vand.u32 %v961, 4294901760
        %v963 = vsub.f32 %v961, %v962
        %v964 = vand.u32 %v963, 4294901760
        %965 = vmatpush1.msra.mxu0 %v964
        %966 = vmatprep.subr.mxu0 0.0
        %v967 = vand.u32 %v817, 4294901760
        %v968 = vsub.f32 %v817, %v967
        %v969 = vand.u32 %v968, 4294901760
        %v970 = vsub.f32 %v968, %v969
        %v971 = vand.u32 %v970, 4294901760
        %972 = vmatpush1.msra.mxu0 %v971
        %973 = vmatprep.subr.mxu0 0.0
        %v974 = vand.u32 %v816, 4294901760
        %v975 = vsub.f32 %v816, %v974
        %v976 = vand.u32 %v975, 4294901760
        %v977 = vsub.f32 %v975, %v976
        %v978 = vand.u32 %v977, 4294901760
        %979 = vmatpush1.msra.mxu0 %v978
        %980 = vmatprep.subr.mxu0 0.0
        %v981 = vand.u32 %v815, 4294901760
        %v982 = vsub.f32 %v815, %v981
        %v983 = vand.u32 %v982, 4294901760
        %v984 = vsub.f32 %v982, %v983
        %v985 = vand.u32 %v984, 4294901760
        %986 = vmatpush1.msra.mxu0 %v985
        %987 = vmatprep.subr.mxu0 0.0
        %v988 = vand.u32 %v814, 4294901760
        %v989 = vsub.f32 %v814, %v988
        %v990 = vand.u32 %v989, 4294901760
        %v991 = vsub.f32 %v989, %v990
        %v992 = vand.u32 %v991, 4294901760
        %993 = vmatpush1.msra.mxu0 %v992
        %994 = vmatprep.subr.mxu0 0.0
        %v995 = vand.u32 %v813, 4294901760
        %v996 = vsub.f32 %v813, %v995
        %v997 = vand.u32 %v996, 4294901760
        %v998 = vsub.f32 %v996, %v997
        %v999 = vand.u32 %v998, 4294901760
        %1000 = vmatpush1.msra.mxu0 %v999
        %1001 = vmatprep.subr.mxu0 0.0
        %1002 = vmatpush2.msra.mxu0 0.0
        %1003 = vmatprep.subr.mxu0 0.0
        %1004 = vmatpush2.msra.mxu0 0.0
        %1005 = vmatprep.subr.mxu0 0.0
        %1006 = vmatpush2.msra.mxu0 0.0
        %1007 = vmatprep.subr.mxu0 0.0
        %1008 = vmatpush2.msra.mxu0 0.0
        %1009 = vmatprep.subr.mxu0 0.0
        %1010 = vmatpush2.msra.mxu0 0.0
        %1011 = vmatprep.subr.mxu0 0.0
        %1012 = vmatpush2.msra.mxu0 0.0
        %1013 = vmatprep.subr.mxu0 0.0
        %1014 = vmatpush2.msra.mxu0 0.0
        %1015 = vmatprep.subr.mxu0 0.0
        %1016 = vmatpush2.msra.mxu0 0.0
        %1017 = vmatprep.subr.mxu0 0.0
        %1018 = vmatpush2.msra.mxu0 0.0
        %1019 = vmatprep.subr.mxu0 0.0
        %1020 = vmatpush2.msra.mxu0 0.0
        %1021 = vmatprep.subr.mxu0 0.0
        %1022 = vmatpush2.msra.mxu0 0.0
        %1023 = vmatprep.subr.mxu0 0.0
        %1024 = vmatpush2.msra.mxu0 0.0
        %1025 = vmatprep.subr.mxu0 0.0
        %1026 = vmatpush2.msra.mxu0 0.0
        %1027 = vmatprep.subr.mxu0 0.0
        %1028 = vmatpush2.msra.mxu0 0.0
        %1029 = vmatprep.subr.mxu0 0.0
        %1030 = vmatpush2.msra.mxu0 0.0
        %1031 = vmatprep.subr.mxu0 0.0
        %1032 = vmatpush2.msra.mxu0 0.0
        %1033 = vmatprep.mubr.f32.mxu0 0.0
        %v1034 = vand.u32 %v844, 4294901760
        %1035 = vmatmul.mubr.f32.gmra.mxu0 %v1034
        %v1036 = vpop.f32.mrf.mxu0
        %v1037 = vadd.f32 %v926, %v1036
        %v1038 = vpop.f32.mrf.mxu0
        %1039 = vdwg.mxu0
        %1040 = vmatprep.subr.mxu0 0.0
        %1041 = vmatpush1.msra.mxu0 0.0
        %1042 = vmatprep.subr.mxu0 0.0
        %1043 = vmatpush1.msra.mxu0 0.0
        %1044 = vmatprep.subr.mxu0 0.0
        %1045 = vmatpush1.msra.mxu0 0.0
        %1046 = vmatprep.subr.mxu0 0.0
        %1047 = vmatpush1.msra.mxu0 0.0
        %1048 = vmatprep.subr.mxu0 0.0
        %1049 = vmatpush1.msra.mxu0 0.0
        %1050 = vmatprep.subr.mxu0 0.0
        %1051 = vmatpush1.msra.mxu0 0.0
        %1052 = vmatprep.subr.mxu0 0.0
        %1053 = vmatpush1.msra.mxu0 0.0
        %1054 = vmatprep.subr.mxu0 0.0
        %1055 = vmatpush1.msra.mxu0 0.0
        %1056 = vmatprep.subr.mxu0 0.0
        %v1057 = vand.u32 %v820, 4294901760
        %v1058 = vsub.f32 %v820, %v1057
        %1059 = vmatpush1.msra.mxu0 %v1058
        %1060 = vmatprep.subr.mxu0 0.0
        %v1061 = vand.u32 %v819, 4294901760
        %v1062 = vsub.f32 %v819, %v1061
        %1063 = vmatpush1.msra.mxu0 %v1062
        %1064 = vmatprep.subr.mxu0 0.0
        %v1065 = vand.u32 %v818, 4294901760
        %v1066 = vsub.f32 %v818, %v1065
        %1067 = vmatpush1.msra.mxu0 %v1066
        %1068 = vmatprep.subr.mxu0 0.0
        %v1069 = vand.u32 %v817, 4294901760
        %v1070 = vsub.f32 %v817, %v1069
        %1071 = vmatpush1.msra.mxu0 %v1070
        %1072 = vmatprep.subr.mxu0 0.0
        %v1073 = vand.u32 %v816, 4294901760
        %v1074 = vsub.f32 %v816, %v1073
        %1075 = vmatpush1.msra.mxu0 %v1074
        %1076 = vmatprep.subr.mxu0 0.0
        %v1077 = vand.u32 %v815, 4294901760
        %v1078 = vsub.f32 %v815, %v1077
        %1079 = vmatpush1.msra.mxu0 %v1078
        %1080 = vmatprep.subr.mxu0 0.0
        %v1081 = vand.u32 %v814, 4294901760
        %v1082 = vsub.f32 %v814, %v1081
        %1083 = vmatpush1.msra.mxu0 %v1082
        %1084 = vmatprep.subr.mxu0 0.0
        %v1085 = vand.u32 %v813, 4294901760
        %v1086 = vsub.f32 %v813, %v1085
        %1087 = vmatpush1.msra.mxu0 %v1086
        %1088 = vmatprep.subr.mxu0 0.0
        %1089 = vmatpush2.msra.mxu0 0.0
        %1090 = vmatprep.subr.mxu0 0.0
        %1091 = vmatpush2.msra.mxu0 0.0
        %1092 = vmatprep.subr.mxu0 0.0
        %1093 = vmatpush2.msra.mxu0 0.0
        %1094 = vmatprep.subr.mxu0 0.0
        %1095 = vmatpush2.msra.mxu0 0.0
        %1096 = vmatprep.subr.mxu0 0.0
        %1097 = vmatpush2.msra.mxu0 0.0
        %1098 = vmatprep.subr.mxu0 0.0
        %1099 = vmatpush2.msra.mxu0 0.0
        %1100 = vmatprep.subr.mxu0 0.0
        %1101 = vmatpush2.msra.mxu0 0.0
        %1102 = vmatprep.subr.mxu0 0.0
        %1103 = vmatpush2.msra.mxu0 0.0
        %1104 = vmatprep.subr.mxu0 0.0
        %1105 = vmatpush2.msra.mxu0 0.0
        %1106 = vmatprep.subr.mxu0 0.0
        %1107 = vmatpush2.msra.mxu0 0.0
        %1108 = vmatprep.subr.mxu0 0.0
        %1109 = vmatpush2.msra.mxu0 0.0
        %1110 = vmatprep.subr.mxu0 0.0
        %1111 = vmatpush2.msra.mxu0 0.0
        %1112 = vmatprep.subr.mxu0 0.0
        %1113 = vmatpush2.msra.mxu0 0.0
        %1114 = vmatprep.subr.mxu0 0.0
        %1115 = vmatpush2.msra.mxu0 0.0
        %1116 = vmatprep.subr.mxu0 0.0
        %1117 = vmatpush2.msra.mxu0 0.0
        %1118 = vmatprep.subr.mxu0 0.0
        %1119 = vmatpush2.msra.mxu0 0.0
        %1120 = vmatprep.mubr.f32.mxu0 0.0
        %v1121 = vand.u32 %v844, 4294901760
        %v1122 = vsub.f32 %v844, %v1121
        %1123 = vmatmul.mubr.f32.gmra.mxu0 %v1122
        %v1124 = vpop.f32.mrf.mxu0
        %v1125 = vadd.f32 %v1037, %v1124
        %v1126 = vpop.f32.mrf.mxu0
        %1127 = vdwg.mxu0
        %1128 = vmatprep.subr.mxu0 0.0
        %1129 = vmatpush1.msra.mxu0 0.0
        %1130 = vmatprep.subr.mxu0 0.0
        %1131 = vmatpush1.msra.mxu0 0.0
        %1132 = vmatprep.subr.mxu0 0.0
        %1133 = vmatpush1.msra.mxu0 0.0
        %1134 = vmatprep.subr.mxu0 0.0
        %1135 = vmatpush1.msra.mxu0 0.0
        %1136 = vmatprep.subr.mxu0 0.0
        %1137 = vmatpush1.msra.mxu0 0.0
        %1138 = vmatprep.subr.mxu0 0.0
        %1139 = vmatpush1.msra.mxu0 0.0
        %1140 = vmatprep.subr.mxu0 0.0
        %1141 = vmatpush1.msra.mxu0 0.0
        %1142 = vmatprep.subr.mxu0 0.0
        %1143 = vmatpush1.msra.mxu0 0.0
        %1144 = vmatprep.subr.mxu0 0.0
        %v1145 = vand.u32 %v820, 4294901760
        %1146 = vmatpush1.msra.mxu0 %v1145
        %1147 = vmatprep.subr.mxu0 0.0
        %v1148 = vand.u32 %v819, 4294901760
        %1149 = vmatpush1.msra.mxu0 %v1148
        %1150 = vmatprep.subr.mxu0 0.0
        %v1151 = vand.u32 %v818, 4294901760
        %1152 = vmatpush1.msra.mxu0 %v1151
        %1153 = vmatprep.subr.mxu0 0.0
        %v1154 = vand.u32 %v817, 4294901760
        %1155 = vmatpush1.msra.mxu0 %v1154
        %1156 = vmatprep.subr.mxu0 0.0
        %v1157 = vand.u32 %v816, 4294901760
        %1158 = vmatpush1.msra.mxu0 %v1157
        %1159 = vmatprep.subr.mxu0 0.0
        %v1160 = vand.u32 %v815, 4294901760
        %1161 = vmatpush1.msra.mxu0 %v1160
        %1162 = vmatprep.subr.mxu0 0.0
        %v1163 = vand.u32 %v814, 4294901760
        %1164 = vmatpush1.msra.mxu0 %v1163
        %1165 = vmatprep.subr.mxu0 0.0
        %v1166 = vand.u32 %v813, 4294901760
        %1167 = vmatpush1.msra.mxu0 %v1166
        %1168 = vmatprep.subr.mxu0 0.0
        %1169 = vmatpush2.msra.mxu0 0.0
        %1170 = vmatprep.subr.mxu0 0.0
        %1171 = vmatpush2.msra.mxu0 0.0
        %1172 = vmatprep.subr.mxu0 0.0
        %1173 = vmatpush2.msra.mxu0 0.0
        %1174 = vmatprep.subr.mxu0 0.0
        %1175 = vmatpush2.msra.mxu0 0.0
        %1176 = vmatprep.subr.mxu0 0.0
        %1177 = vmatpush2.msra.mxu0 0.0
        %1178 = vmatprep.subr.mxu0 0.0
        %1179 = vmatpush2.msra.mxu0 0.0
        %1180 = vmatprep.subr.mxu0 0.0
        %1181 = vmatpush2.msra.mxu0 0.0
        %1182 = vmatprep.subr.mxu0 0.0
        %1183 = vmatpush2.msra.mxu0 0.0
        %1184 = vmatprep.subr.mxu0 0.0
        %1185 = vmatpush2.msra.mxu0 0.0
        %1186 = vmatprep.subr.mxu0 0.0
        %1187 = vmatpush2.msra.mxu0 0.0
        %1188 = vmatprep.subr.mxu0 0.0
        %1189 = vmatpush2.msra.mxu0 0.0
        %1190 = vmatprep.subr.mxu0 0.0
        %1191 = vmatpush2.msra.mxu0 0.0
        %1192 = vmatprep.subr.mxu0 0.0
        %1193 = vmatpush2.msra.mxu0 0.0
        %1194 = vmatprep.subr.mxu0 0.0
        %1195 = vmatpush2.msra.mxu0 0.0
        %1196 = vmatprep.subr.mxu0 0.0
        %1197 = vmatpush2.msra.mxu0 0.0
        %1198 = vmatprep.subr.mxu0 0.0
        %1199 = vmatpush2.msra.mxu0 0.0
        %1200 = vmatprep.mubr.f32.mxu0 0.0
        %v1201 = vand.u32 %v844, 4294901760
        %v1202 = vsub.f32 %v844, %v1201
        %v1203 = vand.u32 %v1202, 4294901760
        %1204 = vmatmul.mubr.f32.gmra.mxu0 %v1203
        %v1205 = vpop.f32.mrf.mxu0
        %v1206 = vadd.f32 %v1125, %v1205
        %v1207 = vpop.f32.mrf.mxu0
        %1208 = vdwg.mxu0
        %1209 = vmatprep.subr.mxu0 0.0
        %1210 = vmatpush1.msra.mxu0 0.0
        %1211 = vmatprep.subr.mxu0 0.0
        %1212 = vmatpush1.msra.mxu0 0.0
        %1213 = vmatprep.subr.mxu0 0.0
        %1214 = vmatpush1.msra.mxu0 0.0
        %1215 = vmatprep.subr.mxu0 0.0
        %1216 = vmatpush1.msra.mxu0 0.0
        %1217 = vmatprep.subr.mxu0 0.0
        %1218 = vmatpush1.msra.mxu0 0.0
        %1219 = vmatprep.subr.mxu0 0.0
        %1220 = vmatpush1.msra.mxu0 0.0
        %1221 = vmatprep.subr.mxu0 0.0
        %1222 = vmatpush1.msra.mxu0 0.0
        %1223 = vmatprep.subr.mxu0 0.0
        %1224 = vmatpush1.msra.mxu0 0.0
        %1225 = vmatprep.subr.mxu0 0.0
        %v1226 = vand.u32 %v820, 4294901760
        %v1227 = vsub.f32 %v820, %v1226
        %v1228 = vand.u32 %v1227, 4294901760
        %1229 = vmatpush1.msra.mxu0 %v1228
        %1230 = vmatprep.subr.mxu0 0.0
        %v1231 = vand.u32 %v819, 4294901760
        %v1232 = vsub.f32 %v819, %v1231
        %v1233 = vand.u32 %v1232, 4294901760
        %1234 = vmatpush1.msra.mxu0 %v1233
        %1235 = vmatprep.subr.mxu0 0.0
        %v1236 = vand.u32 %v818, 4294901760
        %v1237 = vsub.f32 %v818, %v1236
        %v1238 = vand.u32 %v1237, 4294901760
        %1239 = vmatpush1.msra.mxu0 %v1238
        %1240 = vmatprep.subr.mxu0 0.0
        %v1241 = vand.u32 %v817, 4294901760
        %v1242 = vsub.f32 %v817, %v1241
        %v1243 = vand.u32 %v1242, 4294901760
        %1244 = vmatpush1.msra.mxu0 %v1243
        %1245 = vmatprep.subr.mxu0 0.0
        %v1246 = vand.u32 %v816, 4294901760
        %v1247 = vsub.f32 %v816, %v1246
        %v1248 = vand.u32 %v1247, 4294901760
        %1249 = vmatpush1.msra.mxu0 %v1248
        %1250 = vmatprep.subr.mxu0 0.0
        %v1251 = vand.u32 %v815, 4294901760
        %v1252 = vsub.f32 %v815, %v1251
        %v1253 = vand.u32 %v1252, 4294901760
        %1254 = vmatpush1.msra.mxu0 %v1253
        %1255 = vmatprep.subr.mxu0 0.0
        %v1256 = vand.u32 %v814, 4294901760
        %v1257 = vsub.f32 %v814, %v1256
        %v1258 = vand.u32 %v1257, 4294901760
        %1259 = vmatpush1.msra.mxu0 %v1258
        %1260 = vmatprep.subr.mxu0 0.0
        %v1261 = vand.u32 %v813, 4294901760
        %v1262 = vsub.f32 %v813, %v1261
        %v1263 = vand.u32 %v1262, 4294901760
        %1264 = vmatpush1.msra.mxu0 %v1263
        %1265 = vmatprep.subr.mxu0 0.0
        %1266 = vmatpush2.msra.mxu0 0.0
        %1267 = vmatprep.subr.mxu0 0.0
        %1268 = vmatpush2.msra.mxu0 0.0
        %1269 = vmatprep.subr.mxu0 0.0
        %1270 = vmatpush2.msra.mxu0 0.0
        %1271 = vmatprep.subr.mxu0 0.0
        %1272 = vmatpush2.msra.mxu0 0.0
        %1273 = vmatprep.subr.mxu0 0.0
        %1274 = vmatpush2.msra.mxu0 0.0
        %1275 = vmatprep.subr.mxu0 0.0
        %1276 = vmatpush2.msra.mxu0 0.0
        %1277 = vmatprep.subr.mxu0 0.0
        %1278 = vmatpush2.msra.mxu0 0.0
        %1279 = vmatprep.subr.mxu0 0.0
        %1280 = vmatpush2.msra.mxu0 0.0
        %1281 = vmatprep.subr.mxu0 0.0
        %1282 = vmatpush2.msra.mxu0 0.0
        %1283 = vmatprep.subr.mxu0 0.0
        %1284 = vmatpush2.msra.mxu0 0.0
        %1285 = vmatprep.subr.mxu0 0.0
        %1286 = vmatpush2.msra.mxu0 0.0
        %1287 = vmatprep.subr.mxu0 0.0
        %1288 = vmatpush2.msra.mxu0 0.0
        %1289 = vmatprep.subr.mxu0 0.0
        %1290 = vmatpush2.msra.mxu0 0.0
        %1291 = vmatprep.subr.mxu0 0.0
        %1292 = vmatpush2.msra.mxu0 0.0
        %1293 = vmatprep.subr.mxu0 0.0
        %1294 = vmatpush2.msra.mxu0 0.0
        %1295 = vmatprep.subr.mxu0 0.0
        %1296 = vmatpush2.msra.mxu0 0.0
        %1297 = vmatprep.mubr.f32.mxu0 0.0
        %v1298 = vand.u32 %v844, 4294901760
        %1299 = vmatmul.mubr.f32.gmra.mxu0 %v1298
        %v1300 = vpop.f32.mrf.mxu0
        %v1301 = vadd.f32 %v1206, %v1300
        %v1302 = vpop.f32.mrf.mxu0
        %1303 = vdwg.mxu0
        %1304 = vmatprep.subr.mxu0 0.0
        %1305 = vmatpush1.msra.mxu0 0.0
        %1306 = vmatprep.subr.mxu0 0.0
        %1307 = vmatpush1.msra.mxu0 0.0
        %1308 = vmatprep.subr.mxu0 0.0
        %1309 = vmatpush1.msra.mxu0 0.0
        %1310 = vmatprep.subr.mxu0 0.0
        %1311 = vmatpush1.msra.mxu0 0.0
        %1312 = vmatprep.subr.mxu0 0.0
        %1313 = vmatpush1.msra.mxu0 0.0
        %1314 = vmatprep.subr.mxu0 0.0
        %1315 = vmatpush1.msra.mxu0 0.0
        %1316 = vmatprep.subr.mxu0 0.0
        %1317 = vmatpush1.msra.mxu0 0.0
        %1318 = vmatprep.subr.mxu0 0.0
        %1319 = vmatpush1.msra.mxu0 0.0
        %1320 = vmatprep.subr.mxu0 0.0
        %v1321 = vand.u32 %v820, 4294901760
        %1322 = vmatpush1.msra.mxu0 %v1321
        %1323 = vmatprep.subr.mxu0 0.0
        %v1324 = vand.u32 %v819, 4294901760
        %1325 = vmatpush1.msra.mxu0 %v1324
        %1326 = vmatprep.subr.mxu0 0.0
        %v1327 = vand.u32 %v818, 4294901760
        %1328 = vmatpush1.msra.mxu0 %v1327
        %1329 = vmatprep.subr.mxu0 0.0
        %v1330 = vand.u32 %v817, 4294901760
        %1331 = vmatpush1.msra.mxu0 %v1330
        %1332 = vmatprep.subr.mxu0 0.0
        %v1333 = vand.u32 %v816, 4294901760
        %1334 = vmatpush1.msra.mxu0 %v1333
        %1335 = vmatprep.subr.mxu0 0.0
        %v1336 = vand.u32 %v815, 4294901760
        %1337 = vmatpush1.msra.mxu0 %v1336
        %1338 = vmatprep.subr.mxu0 0.0
        %v1339 = vand.u32 %v814, 4294901760
        %1340 = vmatpush1.msra.mxu0 %v1339
        %1341 = vmatprep.subr.mxu0 0.0
        %v1342 = vand.u32 %v813, 4294901760
        %1343 = vmatpush1.msra.mxu0 %v1342
        %1344 = vmatprep.subr.mxu0 0.0
        %1345 = vmatpush2.msra.mxu0 0.0
        %1346 = vmatprep.subr.mxu0 0.0
        %1347 = vmatpush2.msra.mxu0 0.0
        %1348 = vmatprep.subr.mxu0 0.0
        %1349 = vmatpush2.msra.mxu0 0.0
        %1350 = vmatprep.subr.mxu0 0.0
        %1351 = vmatpush2.msra.mxu0 0.0
        %1352 = vmatprep.subr.mxu0 0.0
        %1353 = vmatpush2.msra.mxu0 0.0
        %1354 = vmatprep.subr.mxu0 0.0
        %1355 = vmatpush2.msra.mxu0 0.0
        %1356 = vmatprep.subr.mxu0 0.0
        %1357 = vmatpush2.msra.mxu0 0.0
        %1358 = vmatprep.subr.mxu0 0.0
        %1359 = vmatpush2.msra.mxu0 0.0
        %1360 = vmatprep.subr.mxu0 0.0
        %1361 = vmatpush2.msra.mxu0 0.0
        %1362 = vmatprep.subr.mxu0 0.0
        %1363 = vmatpush2.msra.mxu0 0.0
        %1364 = vmatprep.subr.mxu0 0.0
        %1365 = vmatpush2.msra.mxu0 0.0
        %1366 = vmatprep.subr.mxu0 0.0
        %1367 = vmatpush2.msra.mxu0 0.0
        %1368 = vmatprep.subr.mxu0 0.0
        %1369 = vmatpush2.msra.mxu0 0.0
        %1370 = vmatprep.subr.mxu0 0.0
        %1371 = vmatpush2.msra.mxu0 0.0
        %1372 = vmatprep.subr.mxu0 0.0
        %1373 = vmatpush2.msra.mxu0 0.0
        %1374 = vmatprep.subr.mxu0 0.0
        %1375 = vmatpush2.msra.mxu0 0.0
        %1376 = vmatprep.mubr.f32.mxu0 0.0
        %v1377 = vand.u32 %v844, 4294901760
        %1378 = vmatmul.mubr.f32.gmra.mxu0 %v1377
        %v1379 = vpop.f32.mrf.mxu0
        %v1380 = vadd.f32 %v1301, %v1379
        %v1381 = vpop.f32.mrf.mxu0
        %1382 = vdwg.mxu0
        %v1384 = vsel %vm842, %v264, 0
        %1386 = vmatprep.subr.mxu0 0.0
        %1387 = vmatpush1.msra.mxu0 0.0
        %1388 = vmatprep.subr.mxu0 0.0
        %1389 = vmatpush1.msra.mxu0 0.0
        %1390 = vmatprep.subr.mxu0 0.0
        %1391 = vmatpush1.msra.mxu0 0.0
        %1392 = vmatprep.subr.mxu0 0.0
        %1393 = vmatpush1.msra.mxu0 0.0
        %1394 = vmatprep.subr.mxu0 0.0
        %1395 = vmatpush1.msra.mxu0 0.0
        %1396 = vmatprep.subr.mxu0 0.0
        %1397 = vmatpush1.msra.mxu0 0.0
        %1398 = vmatprep.subr.mxu0 0.0
        %1399 = vmatpush1.msra.mxu0 0.0
        %1400 = vmatprep.subr.mxu0 0.0
        %1401 = vmatpush1.msra.mxu0 0.0
        %1402 = vmatprep.subr.mxu0 0.0
        %v1403 = vand.u32 %v841, 4294901760
        %1404 = vmatpush1.msra.mxu0 %v1403
        %1405 = vmatprep.subr.mxu0 0.0
        %v1406 = vand.u32 %v840, 4294901760
        %1407 = vmatpush1.msra.mxu0 %v1406
        %1408 = vmatprep.subr.mxu0 0.0
        %v1409 = vand.u32 %v839, 4294901760
        %1410 = vmatpush1.msra.mxu0 %v1409
        %1411 = vmatprep.subr.mxu0 0.0
        %v1412 = vand.u32 %v838, 4294901760
        %1413 = vmatpush1.msra.mxu0 %v1412
        %1414 = vmatprep.subr.mxu0 0.0
        %v1415 = vand.u32 %v837, 4294901760
        %1416 = vmatpush1.msra.mxu0 %v1415
        %1417 = vmatprep.subr.mxu0 0.0
        %v1418 = vand.u32 %v836, 4294901760
        %1419 = vmatpush1.msra.mxu0 %v1418
        %1420 = vmatprep.subr.mxu0 0.0
        %v1421 = vand.u32 %v835, 4294901760
        %1422 = vmatpush1.msra.mxu0 %v1421
        %1423 = vmatprep.subr.mxu0 0.0
        %v1424 = vand.u32 %v834, 4294901760
        %1425 = vmatpush1.msra.mxu0 %v1424
        %1426 = vmatprep.subr.mxu0 0.0
        %1427 = vmatpush2.msra.mxu0 0.0
        %1428 = vmatprep.subr.mxu0 0.0
        %1429 = vmatpush2.msra.mxu0 0.0
        %1430 = vmatprep.subr.mxu0 0.0
        %1431 = vmatpush2.msra.mxu0 0.0
        %1432 = vmatprep.subr.mxu0 0.0
        %1433 = vmatpush2.msra.mxu0 0.0
        %1434 = vmatprep.subr.mxu0 0.0
        %1435 = vmatpush2.msra.mxu0 0.0
        %1436 = vmatprep.subr.mxu0 0.0
        %1437 = vmatpush2.msra.mxu0 0.0
        %1438 = vmatprep.subr.mxu0 0.0
        %1439 = vmatpush2.msra.mxu0 0.0
        %1440 = vmatprep.subr.mxu0 0.0
        %1441 = vmatpush2.msra.mxu0 0.0
        %1442 = vmatprep.subr.mxu0 0.0
        %1443 = vmatpush2.msra.mxu0 0.0
        %1444 = vmatprep.subr.mxu0 0.0
        %1445 = vmatpush2.msra.mxu0 0.0
        %1446 = vmatprep.subr.mxu0 0.0
        %1447 = vmatpush2.msra.mxu0 0.0
        %1448 = vmatprep.subr.mxu0 0.0
        %1449 = vmatpush2.msra.mxu0 0.0
        %1450 = vmatprep.subr.mxu0 0.0
        %1451 = vmatpush2.msra.mxu0 0.0
        %1452 = vmatprep.subr.mxu0 0.0
        %1453 = vmatpush2.msra.mxu0 0.0
        %1454 = vmatprep.subr.mxu0 0.0
        %1455 = vmatpush2.msra.mxu0 0.0
        %1456 = vmatprep.subr.mxu0 0.0
        %1457 = vmatpush2.msra.mxu0 0.0
        %1458 = vmatprep.mubr.f32.mxu0 0.0
        %v1459 = vand.u32 %v1384, 4294901760
        %v1460 = vsub.f32 %v1384, %v1459
        %v1461 = vand.u32 %v1460, 4294901760
        %v1462 = vsub.f32 %v1460, %v1461
        %v1463 = vand.u32 %v1462, 4294901760
        %1464 = vmatmul.mubr.f32.gmra.mxu0 %v1463
        %v1465 = vpop.f32.mrf.mxu0
        %v1466 = vadd.f32 0.0, %v1465
        %v1467 = vpop.f32.mrf.mxu0
        %1468 = vdwg.mxu0
        %1469 = vmatprep.subr.mxu0 0.0
        %1470 = vmatpush1.msra.mxu0 0.0
        %1471 = vmatprep.subr.mxu0 0.0
        %1472 = vmatpush1.msra.mxu0 0.0
        %1473 = vmatprep.subr.mxu0 0.0
        %1474 = vmatpush1.msra.mxu0 0.0
        %1475 = vmatprep.subr.mxu0 0.0
        %1476 = vmatpush1.msra.mxu0 0.0
        %1477 = vmatprep.subr.mxu0 0.0
        %1478 = vmatpush1.msra.mxu0 0.0
        %1479 = vmatprep.subr.mxu0 0.0
        %1480 = vmatpush1.msra.mxu0 0.0
        %1481 = vmatprep.subr.mxu0 0.0
        %1482 = vmatpush1.msra.mxu0 0.0
        %1483 = vmatprep.subr.mxu0 0.0
        %1484 = vmatpush1.msra.mxu0 0.0
        %1485 = vmatprep.subr.mxu0 0.0
        %v1486 = vand.u32 %v841, 4294901760
        %v1487 = vsub.f32 %v841, %v1486
        %v1488 = vand.u32 %v1487, 4294901760
        %v1489 = vsub.f32 %v1487, %v1488
        %v1490 = vand.u32 %v1489, 4294901760
        %1491 = vmatpush1.msra.mxu0 %v1490
        %1492 = vmatprep.subr.mxu0 0.0
        %v1493 = vand.u32 %v840, 4294901760
        %v1494 = vsub.f32 %v840, %v1493
        %v1495 = vand.u32 %v1494, 4294901760
        %v1496 = vsub.f32 %v1494, %v1495
        %v1497 = vand.u32 %v1496, 4294901760
        %1498 = vmatpush1.msra.mxu0 %v1497
        %1499 = vmatprep.subr.mxu0 0.0
        %v1500 = vand.u32 %v839, 4294901760
        %v1501 = vsub.f32 %v839, %v1500
        %v1502 = vand.u32 %v1501, 4294901760
        %v1503 = vsub.f32 %v1501, %v1502
        %v1504 = vand.u32 %v1503, 4294901760
        %1505 = vmatpush1.msra.mxu0 %v1504
        %1506 = vmatprep.subr.mxu0 0.0
        %v1507 = vand.u32 %v838, 4294901760
        %v1508 = vsub.f32 %v838, %v1507
        %v1509 = vand.u32 %v1508, 4294901760
        %v1510 = vsub.f32 %v1508, %v1509
        %v1511 = vand.u32 %v1510, 4294901760
        %1512 = vmatpush1.msra.mxu0 %v1511
        %1513 = vmatprep.subr.mxu0 0.0
        %v1514 = vand.u32 %v837, 4294901760
        %v1515 = vsub.f32 %v837, %v1514
        %v1516 = vand.u32 %v1515, 4294901760
        %v1517 = vsub.f32 %v1515, %v1516
        %v1518 = vand.u32 %v1517, 4294901760
        %1519 = vmatpush1.msra.mxu0 %v1518
        %1520 = vmatprep.subr.mxu0 0.0
        %v1521 = vand.u32 %v836, 4294901760
        %v1522 = vsub.f32 %v836, %v1521
        %v1523 = vand.u32 %v1522, 4294901760
        %v1524 = vsub.f32 %v1522, %v1523
        %v1525 = vand.u32 %v1524, 4294901760
        %1526 = vmatpush1.msra.mxu0 %v1525
        %1527 = vmatprep.subr.mxu0 0.0
        %v1528 = vand.u32 %v835, 4294901760
        %v1529 = vsub.f32 %v835, %v1528
        %v1530 = vand.u32 %v1529, 4294901760
        %v1531 = vsub.f32 %v1529, %v1530
        %v1532 = vand.u32 %v1531, 4294901760
        %1533 = vmatpush1.msra.mxu0 %v1532
        %1534 = vmatprep.subr.mxu0 0.0
        %v1535 = vand.u32 %v834, 4294901760
        %v1536 = vsub.f32 %v834, %v1535
        %v1537 = vand.u32 %v1536, 4294901760
        %v1538 = vsub.f32 %v1536, %v1537
        %v1539 = vand.u32 %v1538, 4294901760
        %1540 = vmatpush1.msra.mxu0 %v1539
        %1541 = vmatprep.subr.mxu0 0.0
        %1542 = vmatpush2.msra.mxu0 0.0
        %1543 = vmatprep.subr.mxu0 0.0
        %1544 = vmatpush2.msra.mxu0 0.0
        %1545 = vmatprep.subr.mxu0 0.0
        %1546 = vmatpush2.msra.mxu0 0.0
        %1547 = vmatprep.subr.mxu0 0.0
        %1548 = vmatpush2.msra.mxu0 0.0
        %1549 = vmatprep.subr.mxu0 0.0
        %1550 = vmatpush2.msra.mxu0 0.0
        %1551 = vmatprep.subr.mxu0 0.0
        %1552 = vmatpush2.msra.mxu0 0.0
        %1553 = vmatprep.subr.mxu0 0.0
        %1554 = vmatpush2.msra.mxu0 0.0
        %1555 = vmatprep.subr.mxu0 0.0
        %1556 = vmatpush2.msra.mxu0 0.0
        %1557 = vmatprep.subr.mxu0 0.0
        %1558 = vmatpush2.msra.mxu0 0.0
        %1559 = vmatprep.subr.mxu0 0.0
        %1560 = vmatpush2.msra.mxu0 0.0
        %1561 = vmatprep.subr.mxu0 0.0
        %1562 = vmatpush2.msra.mxu0 0.0
        %1563 = vmatprep.subr.mxu0 0.0
        %1564 = vmatpush2.msra.mxu0 0.0
        %1565 = vmatprep.subr.mxu0 0.0
        %1566 = vmatpush2.msra.mxu0 0.0
        %1567 = vmatprep.subr.mxu0 0.0
        %1568 = vmatpush2.msra.mxu0 0.0
        %1569 = vmatprep.subr.mxu0 0.0
        %1570 = vmatpush2.msra.mxu0 0.0
        %1571 = vmatprep.subr.mxu0 0.0
        %1572 = vmatpush2.msra.mxu0 0.0
        %1573 = vmatprep.mubr.f32.mxu0 0.0
        %v1574 = vand.u32 %v1384, 4294901760
        %1575 = vmatmul.mubr.f32.gmra.mxu0 %v1574
        %v1576 = vpop.f32.mrf.mxu0
        %v1577 = vadd.f32 %v1466, %v1576
        %v1578 = vpop.f32.mrf.mxu0
        %1579 = vdwg.mxu0
        %1580 = vmatprep.subr.mxu0 0.0
        %1581 = vmatpush1.msra.mxu0 0.0
        %1582 = vmatprep.subr.mxu0 0.0
        %1583 = vmatpush1.msra.mxu0 0.0
        %1584 = vmatprep.subr.mxu0 0.0
        %1585 = vmatpush1.msra.mxu0 0.0
        %1586 = vmatprep.subr.mxu0 0.0
        %1587 = vmatpush1.msra.mxu0 0.0
        %1588 = vmatprep.subr.mxu0 0.0
        %1589 = vmatpush1.msra.mxu0 0.0
        %1590 = vmatprep.subr.mxu0 0.0
        %1591 = vmatpush1.msra.mxu0 0.0
        %1592 = vmatprep.subr.mxu0 0.0
        %1593 = vmatpush1.msra.mxu0 0.0
        %1594 = vmatprep.subr.mxu0 0.0
        %1595 = vmatpush1.msra.mxu0 0.0
        %1596 = vmatprep.subr.mxu0 0.0
        %v1597 = vand.u32 %v841, 4294901760
        %v1598 = vsub.f32 %v841, %v1597
        %1599 = vmatpush1.msra.mxu0 %v1598
        %1600 = vmatprep.subr.mxu0 0.0
        %v1601 = vand.u32 %v840, 4294901760
        %v1602 = vsub.f32 %v840, %v1601
        %1603 = vmatpush1.msra.mxu0 %v1602
        %1604 = vmatprep.subr.mxu0 0.0
        %v1605 = vand.u32 %v839, 4294901760
        %v1606 = vsub.f32 %v839, %v1605
        %1607 = vmatpush1.msra.mxu0 %v1606
        %1608 = vmatprep.subr.mxu0 0.0
        %v1609 = vand.u32 %v838, 4294901760
        %v1610 = vsub.f32 %v838, %v1609
        %1611 = vmatpush1.msra.mxu0 %v1610
        %1612 = vmatprep.subr.mxu0 0.0
        %v1613 = vand.u32 %v837, 4294901760
        %v1614 = vsub.f32 %v837, %v1613
        %1615 = vmatpush1.msra.mxu0 %v1614
        %1616 = vmatprep.subr.mxu0 0.0
        %v1617 = vand.u32 %v836, 4294901760
        %v1618 = vsub.f32 %v836, %v1617
        %1619 = vmatpush1.msra.mxu0 %v1618
        %1620 = vmatprep.subr.mxu0 0.0
        %v1621 = vand.u32 %v835, 4294901760
        %v1622 = vsub.f32 %v835, %v1621
        %1623 = vmatpush1.msra.mxu0 %v1622
        %1624 = vmatprep.subr.mxu0 0.0
        %v1625 = vand.u32 %v834, 4294901760
        %v1626 = vsub.f32 %v834, %v1625
        %1627 = vmatpush1.msra.mxu0 %v1626
        %1628 = vmatprep.subr.mxu0 0.0
        %1629 = vmatpush2.msra.mxu0 0.0
        %1630 = vmatprep.subr.mxu0 0.0
        %1631 = vmatpush2.msra.mxu0 0.0
        %1632 = vmatprep.subr.mxu0 0.0
        %1633 = vmatpush2.msra.mxu0 0.0
        %1634 = vmatprep.subr.mxu0 0.0
        %1635 = vmatpush2.msra.mxu0 0.0
        %1636 = vmatprep.subr.mxu0 0.0
        %1637 = vmatpush2.msra.mxu0 0.0
        %1638 = vmatprep.subr.mxu0 0.0
        %1639 = vmatpush2.msra.mxu0 0.0
        %1640 = vmatprep.subr.mxu0 0.0
        %1641 = vmatpush2.msra.mxu0 0.0
        %1642 = vmatprep.subr.mxu0 0.0
        %1643 = vmatpush2.msra.mxu0 0.0
        %1644 = vmatprep.subr.mxu0 0.0
        %1645 = vmatpush2.msra.mxu0 0.0
        %1646 = vmatprep.subr.mxu0 0.0
        %1647 = vmatpush2.msra.mxu0 0.0
        %1648 = vmatprep.subr.mxu0 0.0
        %1649 = vmatpush2.msra.mxu0 0.0
        %1650 = vmatprep.subr.mxu0 0.0
        %1651 = vmatpush2.msra.mxu0 0.0
        %1652 = vmatprep.subr.mxu0 0.0
        %1653 = vmatpush2.msra.mxu0 0.0
        %1654 = vmatprep.subr.mxu0 0.0
        %1655 = vmatpush2.msra.mxu0 0.0
        %1656 = vmatprep.subr.mxu0 0.0
        %1657 = vmatpush2.msra.mxu0 0.0
        %1658 = vmatprep.subr.mxu0 0.0
        %1659 = vmatpush2.msra.mxu0 0.0
        %1660 = vmatprep.mubr.f32.mxu0 0.0
        %v1661 = vand.u32 %v1384, 4294901760
        %v1662 = vsub.f32 %v1384, %v1661
        %1663 = vmatmul.mubr.f32.gmra.mxu0 %v1662
        %v1664 = vpop.f32.mrf.mxu0
        %v1665 = vadd.f32 %v1577, %v1664
        %v1666 = vpop.f32.mrf.mxu0
        %1667 = vdwg.mxu0
        %1668 = vmatprep.subr.mxu0 0.0
        %1669 = vmatpush1.msra.mxu0 0.0
        %1670 = vmatprep.subr.mxu0 0.0
        %1671 = vmatpush1.msra.mxu0 0.0
        %1672 = vmatprep.subr.mxu0 0.0
        %1673 = vmatpush1.msra.mxu0 0.0
        %1674 = vmatprep.subr.mxu0 0.0
        %1675 = vmatpush1.msra.mxu0 0.0
        %1676 = vmatprep.subr.mxu0 0.0
        %1677 = vmatpush1.msra.mxu0 0.0
        %1678 = vmatprep.subr.mxu0 0.0
        %1679 = vmatpush1.msra.mxu0 0.0
        %1680 = vmatprep.subr.mxu0 0.0
        %1681 = vmatpush1.msra.mxu0 0.0
        %1682 = vmatprep.subr.mxu0 0.0
        %1683 = vmatpush1.msra.mxu0 0.0
        %1684 = vmatprep.subr.mxu0 0.0
        %v1685 = vand.u32 %v841, 4294901760
        %1686 = vmatpush1.msra.mxu0 %v1685
        %1687 = vmatprep.subr.mxu0 0.0
        %v1688 = vand.u32 %v840, 4294901760
        %1689 = vmatpush1.msra.mxu0 %v1688
        %1690 = vmatprep.subr.mxu0 0.0
        %v1691 = vand.u32 %v839, 4294901760
        %1692 = vmatpush1.msra.mxu0 %v1691
        %1693 = vmatprep.subr.mxu0 0.0
        %v1694 = vand.u32 %v838, 4294901760
        %1695 = vmatpush1.msra.mxu0 %v1694
        %1696 = vmatprep.subr.mxu0 0.0
        %v1697 = vand.u32 %v837, 4294901760
        %1698 = vmatpush1.msra.mxu0 %v1697
        %1699 = vmatprep.subr.mxu0 0.0
        %v1700 = vand.u32 %v836, 4294901760
        %1701 = vmatpush1.msra.mxu0 %v1700
        %1702 = vmatprep.subr.mxu0 0.0
        %v1703 = vand.u32 %v835, 4294901760
        %1704 = vmatpush1.msra.mxu0 %v1703
        %1705 = vmatprep.subr.mxu0 0.0
        %v1706 = vand.u32 %v834, 4294901760
        %1707 = vmatpush1.msra.mxu0 %v1706
        %1708 = vmatprep.subr.mxu0 0.0
        %1709 = vmatpush2.msra.mxu0 0.0
        %1710 = vmatprep.subr.mxu0 0.0
        %1711 = vmatpush2.msra.mxu0 0.0
        %1712 = vmatprep.subr.mxu0 0.0
        %1713 = vmatpush2.msra.mxu0 0.0
        %1714 = vmatprep.subr.mxu0 0.0
        %1715 = vmatpush2.msra.mxu0 0.0
        %1716 = vmatprep.subr.mxu0 0.0
        %1717 = vmatpush2.msra.mxu0 0.0
        %1718 = vmatprep.subr.mxu0 0.0
        %1719 = vmatpush2.msra.mxu0 0.0
        %1720 = vmatprep.subr.mxu0 0.0
        %1721 = vmatpush2.msra.mxu0 0.0
        %1722 = vmatprep.subr.mxu0 0.0
        %1723 = vmatpush2.msra.mxu0 0.0
        %1724 = vmatprep.subr.mxu0 0.0
        %1725 = vmatpush2.msra.mxu0 0.0
        %1726 = vmatprep.subr.mxu0 0.0
        %1727 = vmatpush2.msra.mxu0 0.0
        %1728 = vmatprep.subr.mxu0 0.0
        %1729 = vmatpush2.msra.mxu0 0.0
        %1730 = vmatprep.subr.mxu0 0.0
        %1731 = vmatpush2.msra.mxu0 0.0
        %1732 = vmatprep.subr.mxu0 0.0
        %1733 = vmatpush2.msra.mxu0 0.0
        %1734 = vmatprep.subr.mxu0 0.0
        %1735 = vmatpush2.msra.mxu0 0.0
        %1736 = vmatprep.subr.mxu0 0.0
        %1737 = vmatpush2.msra.mxu0 0.0
        %1738 = vmatprep.subr.mxu0 0.0
        %1739 = vmatpush2.msra.mxu0 0.0
        %1740 = vmatprep.mubr.f32.mxu0 0.0
        %v1741 = vand.u32 %v1384, 4294901760
        %v1742 = vsub.f32 %v1384, %v1741
        %v1743 = vand.u32 %v1742, 4294901760
        %1744 = vmatmul.mubr.f32.gmra.mxu0 %v1743
        %v1745 = vpop.f32.mrf.mxu0
        %v1746 = vadd.f32 %v1665, %v1745
        %v1747 = vpop.f32.mrf.mxu0
        %1748 = vdwg.mxu0
        %1749 = vmatprep.subr.mxu0 0.0
        %1750 = vmatpush1.msra.mxu0 0.0
        %1751 = vmatprep.subr.mxu0 0.0
        %1752 = vmatpush1.msra.mxu0 0.0
        %1753 = vmatprep.subr.mxu0 0.0
        %1754 = vmatpush1.msra.mxu0 0.0
        %1755 = vmatprep.subr.mxu0 0.0
        %1756 = vmatpush1.msra.mxu0 0.0
        %1757 = vmatprep.subr.mxu0 0.0
        %1758 = vmatpush1.msra.mxu0 0.0
        %1759 = vmatprep.subr.mxu0 0.0
        %1760 = vmatpush1.msra.mxu0 0.0
        %1761 = vmatprep.subr.mxu0 0.0
        %1762 = vmatpush1.msra.mxu0 0.0
        %1763 = vmatprep.subr.mxu0 0.0
        %1764 = vmatpush1.msra.mxu0 0.0
        %1765 = vmatprep.subr.mxu0 0.0
        %v1766 = vand.u32 %v841, 4294901760
        %v1767 = vsub.f32 %v841, %v1766
        %v1768 = vand.u32 %v1767, 4294901760
        %1769 = vmatpush1.msra.mxu0 %v1768
        %1770 = vmatprep.subr.mxu0 0.0
        %v1771 = vand.u32 %v840, 4294901760
        %v1772 = vsub.f32 %v840, %v1771
        %v1773 = vand.u32 %v1772, 4294901760
        %1774 = vmatpush1.msra.mxu0 %v1773
        %1775 = vmatprep.subr.mxu0 0.0
        %v1776 = vand.u32 %v839, 4294901760
        %v1777 = vsub.f32 %v839, %v1776
        %v1778 = vand.u32 %v1777, 4294901760
        %1779 = vmatpush1.msra.mxu0 %v1778
        %1780 = vmatprep.subr.mxu0 0.0
        %v1781 = vand.u32 %v838, 4294901760
        %v1782 = vsub.f32 %v838, %v1781
        %v1783 = vand.u32 %v1782, 4294901760
        %1784 = vmatpush1.msra.mxu0 %v1783
        %1785 = vmatprep.subr.mxu0 0.0
        %v1786 = vand.u32 %v837, 4294901760
        %v1787 = vsub.f32 %v837, %v1786
        %v1788 = vand.u32 %v1787, 4294901760
        %1789 = vmatpush1.msra.mxu0 %v1788
        %1790 = vmatprep.subr.mxu0 0.0
        %v1791 = vand.u32 %v836, 4294901760
        %v1792 = vsub.f32 %v836, %v1791
        %v1793 = vand.u32 %v1792, 4294901760
        %1794 = vmatpush1.msra.mxu0 %v1793
        %1795 = vmatprep.subr.mxu0 0.0
        %v1796 = vand.u32 %v835, 4294901760
        %v1797 = vsub.f32 %v835, %v1796
        %v1798 = vand.u32 %v1797, 4294901760
        %1799 = vmatpush1.msra.mxu0 %v1798
        %1800 = vmatprep.subr.mxu0 0.0
        %v1801 = vand.u32 %v834, 4294901760
        %v1802 = vsub.f32 %v834, %v1801
        %v1803 = vand.u32 %v1802, 4294901760
        %1804 = vmatpush1.msra.mxu0 %v1803
        %1805 = vmatprep.subr.mxu0 0.0
        %1806 = vmatpush2.msra.mxu0 0.0
        %1807 = vmatprep.subr.mxu0 0.0
        %1808 = vmatpush2.msra.mxu0 0.0
        %1809 = vmatprep.subr.mxu0 0.0
        %1810 = vmatpush2.msra.mxu0 0.0
        %1811 = vmatprep.subr.mxu0 0.0
        %1812 = vmatpush2.msra.mxu0 0.0
        %1813 = vmatprep.subr.mxu0 0.0
        %1814 = vmatpush2.msra.mxu0 0.0
        %1815 = vmatprep.subr.mxu0 0.0
        %1816 = vmatpush2.msra.mxu0 0.0
        %1817 = vmatprep.subr.mxu0 0.0
        %1818 = vmatpush2.msra.mxu0 0.0
        %1819 = vmatprep.subr.mxu0 0.0
        %1820 = vmatpush2.msra.mxu0 0.0
        %1821 = vmatprep.subr.mxu0 0.0
        %1822 = vmatpush2.msra.mxu0 0.0
        %1823 = vmatprep.subr.mxu0 0.0
        %1824 = vmatpush2.msra.mxu0 0.0
        %1825 = vmatprep.subr.mxu0 0.0
        %1826 = vmatpush2.msra.mxu0 0.0
        %1827 = vmatprep.subr.mxu0 0.0
        %1828 = vmatpush2.msra.mxu0 0.0
        %1829 = vmatprep.subr.mxu0 0.0
        %1830 = vmatpush2.msra.mxu0 0.0
        %1831 = vmatprep.subr.mxu0 0.0
        %1832 = vmatpush2.msra.mxu0 0.0
        %1833 = vmatprep.subr.mxu0 0.0
        %1834 = vmatpush2.msra.mxu0 0.0
        %1835 = vmatprep.subr.mxu0 0.0
        %1836 = vmatpush2.msra.mxu0 0.0
        %1837 = vmatprep.mubr.f32.mxu0 0.0
        %v1838 = vand.u32 %v1384, 4294901760
        %1839 = vmatmul.mubr.f32.gmra.mxu0 %v1838
        %v1840 = vpop.f32.mrf.mxu0
        %v1841 = vadd.f32 %v1746, %v1840
        %v1842 = vpop.f32.mrf.mxu0
        %1843 = vdwg.mxu0
        %1844 = vmatprep.subr.mxu0 0.0
        %1845 = vmatpush1.msra.mxu0 0.0
        %1846 = vmatprep.subr.mxu0 0.0
        %1847 = vmatpush1.msra.mxu0 0.0
        %1848 = vmatprep.subr.mxu0 0.0
        %1849 = vmatpush1.msra.mxu0 0.0
        %1850 = vmatprep.subr.mxu0 0.0
        %1851 = vmatpush1.msra.mxu0 0.0
        %1852 = vmatprep.subr.mxu0 0.0
        %1853 = vmatpush1.msra.mxu0 0.0
        %1854 = vmatprep.subr.mxu0 0.0
        %1855 = vmatpush1.msra.mxu0 0.0
        %1856 = vmatprep.subr.mxu0 0.0
        %1857 = vmatpush1.msra.mxu0 0.0
        %1858 = vmatprep.subr.mxu0 0.0
        %1859 = vmatpush1.msra.mxu0 0.0
        %1860 = vmatprep.subr.mxu0 0.0
        %v1861 = vand.u32 %v841, 4294901760
        %1862 = vmatpush1.msra.mxu0 %v1861
        %1863 = vmatprep.subr.mxu0 0.0
        %v1864 = vand.u32 %v840, 4294901760
        %1865 = vmatpush1.msra.mxu0 %v1864
        %1866 = vmatprep.subr.mxu0 0.0
        %v1867 = vand.u32 %v839, 4294901760
        %1868 = vmatpush1.msra.mxu0 %v1867
        %1869 = vmatprep.subr.mxu0 0.0
        %v1870 = vand.u32 %v838, 4294901760
        %1871 = vmatpush1.msra.mxu0 %v1870
        %1872 = vmatprep.subr.mxu0 0.0
        %v1873 = vand.u32 %v837, 4294901760
        %1874 = vmatpush1.msra.mxu0 %v1873
        %1875 = vmatprep.subr.mxu0 0.0
        %v1876 = vand.u32 %v836, 4294901760
        %1877 = vmatpush1.msra.mxu0 %v1876
        %1878 = vmatprep.subr.mxu0 0.0
        %v1879 = vand.u32 %v835, 4294901760
        %1880 = vmatpush1.msra.mxu0 %v1879
        %1881 = vmatprep.subr.mxu0 0.0
        %v1882 = vand.u32 %v834, 4294901760
        %1883 = vmatpush1.msra.mxu0 %v1882
        %1884 = vmatprep.subr.mxu0 0.0
        %1885 = vmatpush2.msra.mxu0 0.0
        %1886 = vmatprep.subr.mxu0 0.0
        %1887 = vmatpush2.msra.mxu0 0.0
        %1888 = vmatprep.subr.mxu0 0.0
        %1889 = vmatpush2.msra.mxu0 0.0
        %1890 = vmatprep.subr.mxu0 0.0
        %1891 = vmatpush2.msra.mxu0 0.0
        %1892 = vmatprep.subr.mxu0 0.0
        %1893 = vmatpush2.msra.mxu0 0.0
        %1894 = vmatprep.subr.mxu0 0.0
        %1895 = vmatpush2.msra.mxu0 0.0
        %1896 = vmatprep.subr.mxu0 0.0
        %1897 = vmatpush2.msra.mxu0 0.0
        %1898 = vmatprep.subr.mxu0 0.0
        %1899 = vmatpush2.msra.mxu0 0.0
        %1900 = vmatprep.subr.mxu0 0.0
        %1901 = vmatpush2.msra.mxu0 0.0
        %1902 = vmatprep.subr.mxu0 0.0
        %1903 = vmatpush2.msra.mxu0 0.0
        %1904 = vmatprep.subr.mxu0 0.0
        %1905 = vmatpush2.msra.mxu0 0.0
        %1906 = vmatprep.subr.mxu0 0.0
        %1907 = vmatpush2.msra.mxu0 0.0
        %1908 = vmatprep.subr.mxu0 0.0
        %1909 = vmatpush2.msra.mxu0 0.0
        %1910 = vmatprep.subr.mxu0 0.0
        %1911 = vmatpush2.msra.mxu0 0.0
        %1912 = vmatprep.subr.mxu0 0.0
        %1913 = vmatpush2.msra.mxu0 0.0
        %1914 = vmatprep.subr.mxu0 0.0
        %1915 = vmatpush2.msra.mxu0 0.0
        %1916 = vmatprep.mubr.f32.mxu0 0.0
        %v1917 = vand.u32 %v1384, 4294901760
        %1918 = vmatmul.mubr.f32.gmra.mxu0 %v1917
        %v1919 = vpop.f32.mrf.mxu0
        %v1920 = vadd.f32 %v1841, %v1919
        %v1921 = vpop.f32.mrf.mxu0
        %1922 = vdwg.mxu0
        %v1923 = vmul.f32 %v1380, %v1380
        %v1924 = vsub.f32 %v1923, %v1920
        %v1925 = vmul.f32 %v1924, 0.5
        %v1926 = vld [vmem:[%s5] sm:$0xff]
        %v1927 = vld [vmem:[%s5 + $0x8] sm:$0xff]
        %v1928 = vld [vmem:[%s5 + $0x10] sm:$0xff]
        %v1929 = vld [vmem:[%s5 + $0x18] sm:$0xff]
        %v1930 = vld [vmem:[%s5 + $0x20] sm:$0xff]
        %v1931 = vld [vmem:[%s5 + $0x28] sm:$0xff]
        %v1932 = vld [vmem:[%s5 + $0x30] sm:$0xff]
        %v1933 = vld [vmem:[%s5 + $0x38] sm:$0xff]
        %v1934 = vld [vmem:[%s5 + $0x40] sm:$0xff]
        %v1935 = vld [vmem:[%s5 + $0x48] sm:$0xff]
        %v1936 = vld [vmem:[%s5 + $0x50] sm:$0xff]
        %v1937 = vld [vmem:[%s5 + $0x58] sm:$0xff]
        %v1938 = vld [vmem:[%s5 + $0x60] sm:$0x1]
        %v1939 = vld [vmem:[%s3] sm:$0xff]
        %v1940 = vld [vmem:[%s3 + $0x8] sm:$0xff]
        %v1941 = vld [vmem:[%s3 + $0x10] sm:$0xff]
        %v1942 = vld [vmem:[%s3 + $0x18] sm:$0xff]
        %1944 = vset.pattern.permute.xlu0 0
        %1945 = vperm.xlu0 %1944, %v1926
        %v1946 = vpop.permute.xlu0 %1945
        %1949 = vset.pattern.permute.xlu0 0
        %1950 = vperm.xlu0 %1949, %v1927
        %v1951 = vpop.permute.xlu0 %1950
        %1954 = vset.pattern.permute.xlu0 0
        %1955 = vperm.xlu0 %1954, %v1928
        %v1956 = vpop.permute.xlu0 %1955
        %1959 = vset.pattern.permute.xlu0 0
        %1960 = vperm.xlu0 %1959, %v1929
        %v1961 = vpop.permute.xlu0 %1960
        %vm1963 = vcmask 64512
        %v1965 = vsel %vm1963, %v1939, 0
        %v1968 = vsel %vm1963, %v1940, 0
        %v1971 = vsel %vm1963, %v1941, 0
        %v1974 = vsel %vm1963, %v1942, 0
        %1976 = vmatprep.subr.mxu0 0.0
        %1977 = vmatpush1.msra.mxu0 0.0
        %1978 = vmatprep.subr.mxu0 0.0
        %1979 = vmatpush1.msra.mxu0 0.0
        %1980 = vmatprep.subr.mxu0 0.0
        %1981 = vmatpush1.msra.mxu0 0.0
        %1982 = vmatprep.subr.mxu0 0.0
        %1983 = vmatpush1.msra.mxu0 0.0
        %1984 = vmatprep.subr.mxu0 0.0
        %1985 = vmatpush1.msra.mxu0 0.0
        %1986 = vmatprep.subr.mxu0 0.0
        %1987 = vmatpush1.msra.mxu0 0.0
        %1988 = vmatprep.subr.mxu0 0.0
        %1989 = vmatpush1.msra.mxu0 0.0
        %1990 = vmatprep.subr.mxu0 0.0
        %1991 = vmatpush1.msra.mxu0 0.0
        %1992 = vmatprep.subr.mxu0 0.0
        %1993 = vmatpush1.msra.mxu0 0.0
        %1994 = vmatprep.subr.mxu0 0.0
        %1995 = vmatpush1.msra.mxu0 0.0
        %1996 = vmatprep.subr.mxu0 0.0
        %1997 = vmatpush1.msra.mxu0 0.0
        %1998 = vmatprep.subr.mxu0 0.0
        %1999 = vmatpush1.msra.mxu0 0.0
        %2000 = vmatprep.subr.mxu0 0.0
        %2001 = vmatpush1.msra.mxu0 0.0
        %2002 = vmatprep.subr.mxu0 0.0
        %2003 = vmatpush1.msra.mxu0 0.0
        %2004 = vmatprep.subr.mxu0 0.0
        %2005 = vmatpush1.msra.mxu0 0.0
        %2006 = vmatprep.subr.mxu0 0.0
        %v2007 = vand.u32 %v1925, 4294901760
        %2008 = vmatpush1.msra.mxu0 %v2007
        %2009 = vmatprep.subr.mxu0 0.0
        %2010 = vmatpush2.msra.mxu0 0.0
        %2011 = vmatprep.subr.mxu0 0.0
        %2012 = vmatpush2.msra.mxu0 0.0
        %2013 = vmatprep.subr.mxu0 0.0
        %2014 = vmatpush2.msra.mxu0 0.0
        %2015 = vmatprep.subr.mxu0 0.0
        %2016 = vmatpush2.msra.mxu0 0.0
        %2017 = vmatprep.subr.mxu0 0.0
        %2018 = vmatpush2.msra.mxu0 0.0
        %2019 = vmatprep.subr.mxu0 0.0
        %2020 = vmatpush2.msra.mxu0 0.0
        %2021 = vmatprep.subr.mxu0 0.0
        %2022 = vmatpush2.msra.mxu0 0.0
        %2023 = vmatprep.subr.mxu0 0.0
        %2024 = vmatpush2.msra.mxu0 0.0
        %2025 = vmatprep.subr.mxu0 0.0
        %2026 = vmatpush2.msra.mxu0 0.0
        %2027 = vmatprep.subr.mxu0 0.0
        %2028 = vmatpush2.msra.mxu0 0.0
        %2029 = vmatprep.subr.mxu0 0.0
        %2030 = vmatpush2.msra.mxu0 0.0
        %2031 = vmatprep.subr.mxu0 0.0
        %2032 = vmatpush2.msra.mxu0 0.0
        %2033 = vmatprep.subr.mxu0 0.0
        %2034 = vmatpush2.msra.mxu0 0.0
        %2035 = vmatprep.subr.mxu0 0.0
        %2036 = vmatpush2.msra.mxu0 0.0
        %2037 = vmatprep.subr.mxu0 0.0
        %2038 = vmatpush2.msra.mxu0 0.0
        %2039 = vmatprep.subr.mxu0 0.0
        %2040 = vmatpush2.msra.mxu0 0.0
        %2041 = vmatprep.mubr.f32.mxu0 0.0
        %v2042 = vand.u32 %v1965, 4294901760
        %v2043 = vsub.f32 %v1965, %v2042
        %v2044 = vand.u32 %v2043, 4294901760
        %v2045 = vsub.f32 %v2043, %v2044
        %v2046 = vand.u32 %v2045, 4294901760
        %2047 = vmatmul.mubr.f32.gmra.mxu0 %v2046
        %v2048 = vpop.f32.mrf.mxu0
        %v2049 = vadd.f32 %v1946, %v2048
        %v2050 = vpop.f32.mrf.mxu0
        %2051 = vmatprep.mubr.f32.mxu0 0.0
        %v2052 = vand.u32 %v1968, 4294901760
        %v2053 = vsub.f32 %v1968, %v2052
        %v2054 = vand.u32 %v2053, 4294901760
        %v2055 = vsub.f32 %v2053, %v2054
        %v2056 = vand.u32 %v2055, 4294901760
        %2057 = vmatmul.mubr.f32.gmra.mxu0 %v2056
        %v2058 = vpop.f32.mrf.mxu0
        %v2059 = vadd.f32 %v1951, %v2058
        %v2060 = vpop.f32.mrf.mxu0
        %2061 = vmatprep.mubr.f32.mxu0 0.0
        %v2062 = vand.u32 %v1971, 4294901760
        %v2063 = vsub.f32 %v1971, %v2062
        %v2064 = vand.u32 %v2063, 4294901760
        %v2065 = vsub.f32 %v2063, %v2064
        %v2066 = vand.u32 %v2065, 4294901760
        %2067 = vmatmul.mubr.f32.gmra.mxu0 %v2066
        %v2068 = vpop.f32.mrf.mxu0
        %v2069 = vadd.f32 %v1956, %v2068
        %v2070 = vpop.f32.mrf.mxu0
        %2071 = vmatprep.mubr.f32.mxu0 0.0
        %v2072 = vand.u32 %v1974, 4294901760
        %v2073 = vsub.f32 %v1974, %v2072
        %v2074 = vand.u32 %v2073, 4294901760
        %v2075 = vsub.f32 %v2073, %v2074
        %v2076 = vand.u32 %v2075, 4294901760
        %2077 = vmatmul.mubr.f32.gmra.mxu0 %v2076
        %v2078 = vpop.f32.mrf.mxu0
        %v2079 = vadd.f32 %v1961, %v2078
        %v2080 = vpop.f32.mrf.mxu0
        %2081 = vdwg.mxu0
        %2082 = vmatprep.subr.mxu0 0.0
        %2083 = vmatpush1.msra.mxu0 0.0
        %2084 = vmatprep.subr.mxu0 0.0
        %2085 = vmatpush1.msra.mxu0 0.0
        %2086 = vmatprep.subr.mxu0 0.0
        %2087 = vmatpush1.msra.mxu0 0.0
        %2088 = vmatprep.subr.mxu0 0.0
        %2089 = vmatpush1.msra.mxu0 0.0
        %2090 = vmatprep.subr.mxu0 0.0
        %2091 = vmatpush1.msra.mxu0 0.0
        %2092 = vmatprep.subr.mxu0 0.0
        %2093 = vmatpush1.msra.mxu0 0.0
        %2094 = vmatprep.subr.mxu0 0.0
        %2095 = vmatpush1.msra.mxu0 0.0
        %2096 = vmatprep.subr.mxu0 0.0
        %2097 = vmatpush1.msra.mxu0 0.0
        %2098 = vmatprep.subr.mxu0 0.0
        %2099 = vmatpush1.msra.mxu0 0.0
        %2100 = vmatprep.subr.mxu0 0.0
        %2101 = vmatpush1.msra.mxu0 0.0
        %2102 = vmatprep.subr.mxu0 0.0
        %2103 = vmatpush1.msra.mxu0 0.0
        %2104 = vmatprep.subr.mxu0 0.0
        %2105 = vmatpush1.msra.mxu0 0.0
        %2106 = vmatprep.subr.mxu0 0.0
        %2107 = vmatpush1.msra.mxu0 0.0
        %2108 = vmatprep.subr.mxu0 0.0
        %2109 = vmatpush1.msra.mxu0 0.0
        %2110 = vmatprep.subr.mxu0 0.0
        %2111 = vmatpush1.msra.mxu0 0.0
        %2112 = vmatprep.subr.mxu0 0.0
        %v2113 = vand.u32 %v1925, 4294901760
        %v2114 = vsub.f32 %v1925, %v2113
        %v2115 = vand.u32 %v2114, 4294901760
        %v2116 = vsub.f32 %v2114, %v2115
        %v2117 = vand.u32 %v2116, 4294901760
        %2118 = vmatpush1.msra.mxu0 %v2117
        %2119 = vmatprep.subr.mxu0 0.0
        %2120 = vmatpush2.msra.mxu0 0.0
        %2121 = vmatprep.subr.mxu0 0.0
        %2122 = vmatpush2.msra.mxu0 0.0
        %2123 = vmatprep.subr.mxu0 0.0
        %2124 = vmatpush2.msra.mxu0 0.0
        %2125 = vmatprep.subr.mxu0 0.0
        %2126 = vmatpush2.msra.mxu0 0.0
        %2127 = vmatprep.subr.mxu0 0.0
        %2128 = vmatpush2.msra.mxu0 0.0
        %2129 = vmatprep.subr.mxu0 0.0
        %2130 = vmatpush2.msra.mxu0 0.0
        %2131 = vmatprep.subr.mxu0 0.0
        %2132 = vmatpush2.msra.mxu0 0.0
        %2133 = vmatprep.subr.mxu0 0.0
        %2134 = vmatpush2.msra.mxu0 0.0
        %2135 = vmatprep.subr.mxu0 0.0
        %2136 = vmatpush2.msra.mxu0 0.0
        %2137 = vmatprep.subr.mxu0 0.0
        %2138 = vmatpush2.msra.mxu0 0.0
        %2139 = vmatprep.subr.mxu0 0.0
        %2140 = vmatpush2.msra.mxu0 0.0
        %2141 = vmatprep.subr.mxu0 0.0
        %2142 = vmatpush2.msra.mxu0 0.0
        %2143 = vmatprep.subr.mxu0 0.0
        %2144 = vmatpush2.msra.mxu0 0.0
        %2145 = vmatprep.subr.mxu0 0.0
        %2146 = vmatpush2.msra.mxu0 0.0
        %2147 = vmatprep.subr.mxu0 0.0
        %2148 = vmatpush2.msra.mxu0 0.0
        %2149 = vmatprep.subr.mxu0 0.0
        %2150 = vmatpush2.msra.mxu0 0.0
        %2151 = vmatprep.mubr.f32.mxu0 0.0
        %v2152 = vand.u32 %v1965, 4294901760
        %2153 = vmatmul.mubr.f32.gmra.mxu0 %v2152
        %v2154 = vpop.f32.mrf.mxu0
        %v2155 = vadd.f32 %v2049, %v2154
        %v2156 = vpop.f32.mrf.mxu0
        %2157 = vmatprep.mubr.f32.mxu0 0.0
        %v2158 = vand.u32 %v1968, 4294901760
        %2159 = vmatmul.mubr.f32.gmra.mxu0 %v2158
        %v2160 = vpop.f32.mrf.mxu0
        %v2161 = vadd.f32 %v2059, %v2160
        %v2162 = vpop.f32.mrf.mxu0
        %2163 = vmatprep.mubr.f32.mxu0 0.0
        %v2164 = vand.u32 %v1971, 4294901760
        %2165 = vmatmul.mubr.f32.gmra.mxu0 %v2164
        %v2166 = vpop.f32.mrf.mxu0
        %v2167 = vadd.f32 %v2069, %v2166
        %v2168 = vpop.f32.mrf.mxu0
        %2169 = vmatprep.mubr.f32.mxu0 0.0
        %v2170 = vand.u32 %v1974, 4294901760
        %2171 = vmatmul.mubr.f32.gmra.mxu0 %v2170
        %v2172 = vpop.f32.mrf.mxu0
        %v2173 = vadd.f32 %v2079, %v2172
        %v2174 = vpop.f32.mrf.mxu0
        %2175 = vdwg.mxu0
        %2176 = vmatprep.subr.mxu0 0.0
        %2177 = vmatpush1.msra.mxu0 0.0
        %2178 = vmatprep.subr.mxu0 0.0
        %2179 = vmatpush1.msra.mxu0 0.0
        %2180 = vmatprep.subr.mxu0 0.0
        %2181 = vmatpush1.msra.mxu0 0.0
        %2182 = vmatprep.subr.mxu0 0.0
        %2183 = vmatpush1.msra.mxu0 0.0
        %2184 = vmatprep.subr.mxu0 0.0
        %2185 = vmatpush1.msra.mxu0 0.0
        %2186 = vmatprep.subr.mxu0 0.0
        %2187 = vmatpush1.msra.mxu0 0.0
        %2188 = vmatprep.subr.mxu0 0.0
        %2189 = vmatpush1.msra.mxu0 0.0
        %2190 = vmatprep.subr.mxu0 0.0
        %2191 = vmatpush1.msra.mxu0 0.0
        %2192 = vmatprep.subr.mxu0 0.0
        %2193 = vmatpush1.msra.mxu0 0.0
        %2194 = vmatprep.subr.mxu0 0.0
        %2195 = vmatpush1.msra.mxu0 0.0
        %2196 = vmatprep.subr.mxu0 0.0
        %2197 = vmatpush1.msra.mxu0 0.0
        %2198 = vmatprep.subr.mxu0 0.0
        %2199 = vmatpush1.msra.mxu0 0.0
        %2200 = vmatprep.subr.mxu0 0.0
        %2201 = vmatpush1.msra.mxu0 0.0
        %2202 = vmatprep.subr.mxu0 0.0
        %2203 = vmatpush1.msra.mxu0 0.0
        %2204 = vmatprep.subr.mxu0 0.0
        %2205 = vmatpush1.msra.mxu0 0.0
        %2206 = vmatprep.subr.mxu0 0.0
        %v2207 = vand.u32 %v1925, 4294901760
        %v2208 = vsub.f32 %v1925, %v2207
        %2209 = vmatpush1.msra.mxu0 %v2208
        %2210 = vmatprep.subr.mxu0 0.0
        %2211 = vmatpush2.msra.mxu0 0.0
        %2212 = vmatprep.subr.mxu0 0.0
        %2213 = vmatpush2.msra.mxu0 0.0
        %2214 = vmatprep.subr.mxu0 0.0
        %2215 = vmatpush2.msra.mxu0 0.0
        %2216 = vmatprep.subr.mxu0 0.0
        %2217 = vmatpush2.msra.mxu0 0.0
        %2218 = vmatprep.subr.mxu0 0.0
        %2219 = vmatpush2.msra.mxu0 0.0
        %2220 = vmatprep.subr.mxu0 0.0
        %2221 = vmatpush2.msra.mxu0 0.0
        %2222 = vmatprep.subr.mxu0 0.0
        %2223 = vmatpush2.msra.mxu0 0.0
        %2224 = vmatprep.subr.mxu0 0.0
        %2225 = vmatpush2.msra.mxu0 0.0
        %2226 = vmatprep.subr.mxu0 0.0
        %2227 = vmatpush2.msra.mxu0 0.0
        %2228 = vmatprep.subr.mxu0 0.0
        %2229 = vmatpush2.msra.mxu0 0.0
        %2230 = vmatprep.subr.mxu0 0.0
        %2231 = vmatpush2.msra.mxu0 0.0
        %2232 = vmatprep.subr.mxu0 0.0
        %2233 = vmatpush2.msra.mxu0 0.0
        %2234 = vmatprep.subr.mxu0 0.0
        %2235 = vmatpush2.msra.mxu0 0.0
        %2236 = vmatprep.subr.mxu0 0.0
        %2237 = vmatpush2.msra.mxu0 0.0
        %2238 = vmatprep.subr.mxu0 0.0
        %2239 = vmatpush2.msra.mxu0 0.0
        %2240 = vmatprep.subr.mxu0 0.0
        %2241 = vmatpush2.msra.mxu0 0.0
        %2242 = vmatprep.mubr.f32.mxu0 0.0
        %v2243 = vand.u32 %v1965, 4294901760
        %v2244 = vsub.f32 %v1965, %v2243
        %2245 = vmatmul.mubr.f32.gmra.mxu0 %v2244
        %v2246 = vpop.f32.mrf.mxu0
        %v2247 = vadd.f32 %v2155, %v2246
        %v2248 = vpop.f32.mrf.mxu0
        %2249 = vmatprep.mubr.f32.mxu0 0.0
        %v2250 = vand.u32 %v1968, 4294901760
        %v2251 = vsub.f32 %v1968, %v2250
        %2252 = vmatmul.mubr.f32.gmra.mxu0 %v2251
        %v2253 = vpop.f32.mrf.mxu0
        %v2254 = vadd.f32 %v2161, %v2253
        %v2255 = vpop.f32.mrf.mxu0
        %2256 = vmatprep.mubr.f32.mxu0 0.0
        %v2257 = vand.u32 %v1971, 4294901760
        %v2258 = vsub.f32 %v1971, %v2257
        %2259 = vmatmul.mubr.f32.gmra.mxu0 %v2258
        %v2260 = vpop.f32.mrf.mxu0
        %v2261 = vadd.f32 %v2167, %v2260
        %v2262 = vpop.f32.mrf.mxu0
        %2263 = vmatprep.mubr.f32.mxu0 0.0
        %v2264 = vand.u32 %v1974, 4294901760
        %v2265 = vsub.f32 %v1974, %v2264
        %2266 = vmatmul.mubr.f32.gmra.mxu0 %v2265
        %v2267 = vpop.f32.mrf.mxu0
        %v2268 = vadd.f32 %v2173, %v2267
        %v2269 = vpop.f32.mrf.mxu0
        %2270 = vdwg.mxu0
        %2271 = vmatprep.subr.mxu0 0.0
        %2272 = vmatpush1.msra.mxu0 0.0
        %2273 = vmatprep.subr.mxu0 0.0
        %2274 = vmatpush1.msra.mxu0 0.0
        %2275 = vmatprep.subr.mxu0 0.0
        %2276 = vmatpush1.msra.mxu0 0.0
        %2277 = vmatprep.subr.mxu0 0.0
        %2278 = vmatpush1.msra.mxu0 0.0
        %2279 = vmatprep.subr.mxu0 0.0
        %2280 = vmatpush1.msra.mxu0 0.0
        %2281 = vmatprep.subr.mxu0 0.0
        %2282 = vmatpush1.msra.mxu0 0.0
        %2283 = vmatprep.subr.mxu0 0.0
        %2284 = vmatpush1.msra.mxu0 0.0
        %2285 = vmatprep.subr.mxu0 0.0
        %2286 = vmatpush1.msra.mxu0 0.0
        %2287 = vmatprep.subr.mxu0 0.0
        %2288 = vmatpush1.msra.mxu0 0.0
        %2289 = vmatprep.subr.mxu0 0.0
        %2290 = vmatpush1.msra.mxu0 0.0
        %2291 = vmatprep.subr.mxu0 0.0
        %2292 = vmatpush1.msra.mxu0 0.0
        %2293 = vmatprep.subr.mxu0 0.0
        %2294 = vmatpush1.msra.mxu0 0.0
        %2295 = vmatprep.subr.mxu0 0.0
        %2296 = vmatpush1.msra.mxu0 0.0
        %2297 = vmatprep.subr.mxu0 0.0
        %2298 = vmatpush1.msra.mxu0 0.0
        %2299 = vmatprep.subr.mxu0 0.0
        %2300 = vmatpush1.msra.mxu0 0.0
        %2301 = vmatprep.subr.mxu0 0.0
        %v2302 = vand.u32 %v1925, 4294901760
        %2303 = vmatpush1.msra.mxu0 %v2302
        %2304 = vmatprep.subr.mxu0 0.0
        %2305 = vmatpush2.msra.mxu0 0.0
        %2306 = vmatprep.subr.mxu0 0.0
        %2307 = vmatpush2.msra.mxu0 0.0
        %2308 = vmatprep.subr.mxu0 0.0
        %2309 = vmatpush2.msra.mxu0 0.0
        %2310 = vmatprep.subr.mxu0 0.0
        %2311 = vmatpush2.msra.mxu0 0.0
        %2312 = vmatprep.subr.mxu0 0.0
        %2313 = vmatpush2.msra.mxu0 0.0
        %2314 = vmatprep.subr.mxu0 0.0
        %2315 = vmatpush2.msra.mxu0 0.0
        %2316 = vmatprep.subr.mxu0 0.0
        %2317 = vmatpush2.msra.mxu0 0.0
        %2318 = vmatprep.subr.mxu0 0.0
        %2319 = vmatpush2.msra.mxu0 0.0
        %2320 = vmatprep.subr.mxu0 0.0
        %2321 = vmatpush2.msra.mxu0 0.0
        %2322 = vmatprep.subr.mxu0 0.0
        %2323 = vmatpush2.msra.mxu0 0.0
        %2324 = vmatprep.subr.mxu0 0.0
        %2325 = vmatpush2.msra.mxu0 0.0
        %2326 = vmatprep.subr.mxu0 0.0
        %2327 = vmatpush2.msra.mxu0 0.0
        %2328 = vmatprep.subr.mxu0 0.0
        %2329 = vmatpush2.msra.mxu0 0.0
        %2330 = vmatprep.subr.mxu0 0.0
        %2331 = vmatpush2.msra.mxu0 0.0
        %2332 = vmatprep.subr.mxu0 0.0
        %2333 = vmatpush2.msra.mxu0 0.0
        %2334 = vmatprep.subr.mxu0 0.0
        %2335 = vmatpush2.msra.mxu0 0.0
        %2336 = vmatprep.mubr.f32.mxu0 0.0
        %v2337 = vand.u32 %v1965, 4294901760
        %v2338 = vsub.f32 %v1965, %v2337
        %v2339 = vand.u32 %v2338, 4294901760
        %2340 = vmatmul.mubr.f32.gmra.mxu0 %v2339
        %v2341 = vpop.f32.mrf.mxu0
        %v2342 = vadd.f32 %v2247, %v2341
        %v2343 = vpop.f32.mrf.mxu0
        %2344 = vmatprep.mubr.f32.mxu0 0.0
        %v2345 = vand.u32 %v1968, 4294901760
        %v2346 = vsub.f32 %v1968, %v2345
        %v2347 = vand.u32 %v2346, 4294901760
        %2348 = vmatmul.mubr.f32.gmra.mxu0 %v2347
        %v2349 = vpop.f32.mrf.mxu0
        %v2350 = vadd.f32 %v2254, %v2349
        %v2351 = vpop.f32.mrf.mxu0
        %2352 = vmatprep.mubr.f32.mxu0 0.0
        %v2353 = vand.u32 %v1971, 4294901760
        %v2354 = vsub.f32 %v1971, %v2353
        %v2355 = vand.u32 %v2354, 4294901760
        %2356 = vmatmul.mubr.f32.gmra.mxu0 %v2355
        %v2357 = vpop.f32.mrf.mxu0
        %v2358 = vadd.f32 %v2261, %v2357
        %v2359 = vpop.f32.mrf.mxu0
        %2360 = vmatprep.mubr.f32.mxu0 0.0
        %v2361 = vand.u32 %v1974, 4294901760
        %v2362 = vsub.f32 %v1974, %v2361
        %v2363 = vand.u32 %v2362, 4294901760
        %2364 = vmatmul.mubr.f32.gmra.mxu0 %v2363
        %v2365 = vpop.f32.mrf.mxu0
        %v2366 = vadd.f32 %v2268, %v2365
        %v2367 = vpop.f32.mrf.mxu0
        %2368 = vdwg.mxu0
        %2369 = vmatprep.subr.mxu0 0.0
        %2370 = vmatpush1.msra.mxu0 0.0
        %2371 = vmatprep.subr.mxu0 0.0
        %2372 = vmatpush1.msra.mxu0 0.0
        %2373 = vmatprep.subr.mxu0 0.0
        %2374 = vmatpush1.msra.mxu0 0.0
        %2375 = vmatprep.subr.mxu0 0.0
        %2376 = vmatpush1.msra.mxu0 0.0
        %2377 = vmatprep.subr.mxu0 0.0
        %2378 = vmatpush1.msra.mxu0 0.0
        %2379 = vmatprep.subr.mxu0 0.0
        %2380 = vmatpush1.msra.mxu0 0.0
        %2381 = vmatprep.subr.mxu0 0.0
        %2382 = vmatpush1.msra.mxu0 0.0
        %2383 = vmatprep.subr.mxu0 0.0
        %2384 = vmatpush1.msra.mxu0 0.0
        %2385 = vmatprep.subr.mxu0 0.0
        %2386 = vmatpush1.msra.mxu0 0.0
        %2387 = vmatprep.subr.mxu0 0.0
        %2388 = vmatpush1.msra.mxu0 0.0
        %2389 = vmatprep.subr.mxu0 0.0
        %2390 = vmatpush1.msra.mxu0 0.0
        %2391 = vmatprep.subr.mxu0 0.0
        %2392 = vmatpush1.msra.mxu0 0.0
        %2393 = vmatprep.subr.mxu0 0.0
        %2394 = vmatpush1.msra.mxu0 0.0
        %2395 = vmatprep.subr.mxu0 0.0
        %2396 = vmatpush1.msra.mxu0 0.0
        %2397 = vmatprep.subr.mxu0 0.0
        %2398 = vmatpush1.msra.mxu0 0.0
        %2399 = vmatprep.subr.mxu0 0.0
        %v2400 = vand.u32 %v1925, 4294901760
        %v2401 = vsub.f32 %v1925, %v2400
        %v2402 = vand.u32 %v2401, 4294901760
        %2403 = vmatpush1.msra.mxu0 %v2402
        %2404 = vmatprep.subr.mxu0 0.0
        %2405 = vmatpush2.msra.mxu0 0.0
        %2406 = vmatprep.subr.mxu0 0.0
        %2407 = vmatpush2.msra.mxu0 0.0
        %2408 = vmatprep.subr.mxu0 0.0
        %2409 = vmatpush2.msra.mxu0 0.0
        %2410 = vmatprep.subr.mxu0 0.0
        %2411 = vmatpush2.msra.mxu0 0.0
        %2412 = vmatprep.subr.mxu0 0.0
        %2413 = vmatpush2.msra.mxu0 0.0
        %2414 = vmatprep.subr.mxu0 0.0
        %2415 = vmatpush2.msra.mxu0 0.0
        %2416 = vmatprep.subr.mxu0 0.0
        %2417 = vmatpush2.msra.mxu0 0.0
        %2418 = vmatprep.subr.mxu0 0.0
        %2419 = vmatpush2.msra.mxu0 0.0
        %2420 = vmatprep.subr.mxu0 0.0
        %2421 = vmatpush2.msra.mxu0 0.0
        %2422 = vmatprep.subr.mxu0 0.0
        %2423 = vmatpush2.msra.mxu0 0.0
        %2424 = vmatprep.subr.mxu0 0.0
        %2425 = vmatpush2.msra.mxu0 0.0
        %2426 = vmatprep.subr.mxu0 0.0
        %2427 = vmatpush2.msra.mxu0 0.0
        %2428 = vmatprep.subr.mxu0 0.0
        %2429 = vmatpush2.msra.mxu0 0.0
        %2430 = vmatprep.subr.mxu0 0.0
        %2431 = vmatpush2.msra.mxu0 0.0
        %2432 = vmatprep.subr.mxu0 0.0
        %2433 = vmatpush2.msra.mxu0 0.0
        %2434 = vmatprep.subr.mxu0 0.0
        %2435 = vmatpush2.msra.mxu0 0.0
        %2436 = vmatprep.mubr.f32.mxu0 0.0
        %v2437 = vand.u32 %v1965, 4294901760
        %2438 = vmatmul.mubr.f32.gmra.mxu0 %v2437
        %v2439 = vpop.f32.mrf.mxu0
        %v2440 = vadd.f32 %v2342, %v2439
        %v2441 = vpop.f32.mrf.mxu0
        %2442 = vmatprep.mubr.f32.mxu0 0.0
        %v2443 = vand.u32 %v1968, 4294901760
        %2444 = vmatmul.mubr.f32.gmra.mxu0 %v2443
        %v2445 = vpop.f32.mrf.mxu0
        %v2446 = vadd.f32 %v2350, %v2445
        %v2447 = vpop.f32.mrf.mxu0
        %2448 = vmatprep.mubr.f32.mxu0 0.0
        %v2449 = vand.u32 %v1971, 4294901760
        %2450 = vmatmul.mubr.f32.gmra.mxu0 %v2449
        %v2451 = vpop.f32.mrf.mxu0
        %v2452 = vadd.f32 %v2358, %v2451
        %v2453 = vpop.f32.mrf.mxu0
        %2454 = vmatprep.mubr.f32.mxu0 0.0
        %v2455 = vand.u32 %v1974, 4294901760
        %2456 = vmatmul.mubr.f32.gmra.mxu0 %v2455
        %v2457 = vpop.f32.mrf.mxu0
        %v2458 = vadd.f32 %v2366, %v2457
        %v2459 = vpop.f32.mrf.mxu0
        %2460 = vdwg.mxu0
        %2461 = vmatprep.subr.mxu0 0.0
        %2462 = vmatpush1.msra.mxu0 0.0
        %2463 = vmatprep.subr.mxu0 0.0
        %2464 = vmatpush1.msra.mxu0 0.0
        %2465 = vmatprep.subr.mxu0 0.0
        %2466 = vmatpush1.msra.mxu0 0.0
        %2467 = vmatprep.subr.mxu0 0.0
        %2468 = vmatpush1.msra.mxu0 0.0
        %2469 = vmatprep.subr.mxu0 0.0
        %2470 = vmatpush1.msra.mxu0 0.0
        %2471 = vmatprep.subr.mxu0 0.0
        %2472 = vmatpush1.msra.mxu0 0.0
        %2473 = vmatprep.subr.mxu0 0.0
        %2474 = vmatpush1.msra.mxu0 0.0
        %2475 = vmatprep.subr.mxu0 0.0
        %2476 = vmatpush1.msra.mxu0 0.0
        %2477 = vmatprep.subr.mxu0 0.0
        %2478 = vmatpush1.msra.mxu0 0.0
        %2479 = vmatprep.subr.mxu0 0.0
        %2480 = vmatpush1.msra.mxu0 0.0
        %2481 = vmatprep.subr.mxu0 0.0
        %2482 = vmatpush1.msra.mxu0 0.0
        %2483 = vmatprep.subr.mxu0 0.0
        %2484 = vmatpush1.msra.mxu0 0.0
        %2485 = vmatprep.subr.mxu0 0.0
        %2486 = vmatpush1.msra.mxu0 0.0
        %2487 = vmatprep.subr.mxu0 0.0
        %2488 = vmatpush1.msra.mxu0 0.0
        %2489 = vmatprep.subr.mxu0 0.0
        %2490 = vmatpush1.msra.mxu0 0.0
        %2491 = vmatprep.subr.mxu0 0.0
        %v2492 = vand.u32 %v1925, 4294901760
        %2493 = vmatpush1.msra.mxu0 %v2492
        %2494 = vmatprep.subr.mxu0 0.0
        %2495 = vmatpush2.msra.mxu0 0.0
        %2496 = vmatprep.subr.mxu0 0.0
        %2497 = vmatpush2.msra.mxu0 0.0
        %2498 = vmatprep.subr.mxu0 0.0
        %2499 = vmatpush2.msra.mxu0 0.0
        %2500 = vmatprep.subr.mxu0 0.0
        %2501 = vmatpush2.msra.mxu0 0.0
        %2502 = vmatprep.subr.mxu0 0.0
        %2503 = vmatpush2.msra.mxu0 0.0
        %2504 = vmatprep.subr.mxu0 0.0
        %2505 = vmatpush2.msra.mxu0 0.0
        %2506 = vmatprep.subr.mxu0 0.0
        %2507 = vmatpush2.msra.mxu0 0.0
        %2508 = vmatprep.subr.mxu0 0.0
        %2509 = vmatpush2.msra.mxu0 0.0
        %2510 = vmatprep.subr.mxu0 0.0
        %2511 = vmatpush2.msra.mxu0 0.0
        %2512 = vmatprep.subr.mxu0 0.0
        %2513 = vmatpush2.msra.mxu0 0.0
        %2514 = vmatprep.subr.mxu0 0.0
        %2515 = vmatpush2.msra.mxu0 0.0
        %2516 = vmatprep.subr.mxu0 0.0
        %2517 = vmatpush2.msra.mxu0 0.0
        %2518 = vmatprep.subr.mxu0 0.0
        %2519 = vmatpush2.msra.mxu0 0.0
        %2520 = vmatprep.subr.mxu0 0.0
        %2521 = vmatpush2.msra.mxu0 0.0
        %2522 = vmatprep.subr.mxu0 0.0
        %2523 = vmatpush2.msra.mxu0 0.0
        %2524 = vmatprep.subr.mxu0 0.0
        %2525 = vmatpush2.msra.mxu0 0.0
        %2526 = vmatprep.mubr.f32.mxu0 0.0
        %v2527 = vand.u32 %v1965, 4294901760
        %2528 = vmatmul.mubr.f32.gmra.mxu0 %v2527
        %v2529 = vpop.f32.mrf.mxu0
        %v2530 = vadd.f32 %v2440, %v2529
        %v2531 = vpop.f32.mrf.mxu0
        %2532 = vmatprep.mubr.f32.mxu0 0.0
        %v2533 = vand.u32 %v1968, 4294901760
        %2534 = vmatmul.mubr.f32.gmra.mxu0 %v2533
        %v2535 = vpop.f32.mrf.mxu0
        %v2536 = vadd.f32 %v2446, %v2535
        %v2537 = vpop.f32.mrf.mxu0
        %2538 = vmatprep.mubr.f32.mxu0 0.0
        %v2539 = vand.u32 %v1971, 4294901760
        %2540 = vmatmul.mubr.f32.gmra.mxu0 %v2539
        %v2541 = vpop.f32.mrf.mxu0
        %v2542 = vadd.f32 %v2452, %v2541
        %v2543 = vpop.f32.mrf.mxu0
        %2544 = vmatprep.mubr.f32.mxu0 0.0
        %v2545 = vand.u32 %v1974, 4294901760
        %2546 = vmatmul.mubr.f32.gmra.mxu0 %v2545
        %v2547 = vpop.f32.mrf.mxu0
        %v2548 = vadd.f32 %v2458, %v2547
        %v2549 = vpop.f32.mrf.mxu0
        %2550 = vdwg.mxu0
        %v2551 = vmax.f32 %v2530, 0.0
        %v2552 = vmax.f32 %v2536, 0.0
        %v2553 = vmax.f32 %v2542, 0.0
        %v2554 = vmax.f32 %v2548, 0.0
        %v2555 = vld [vmem:[%s4] sm:$0xff]
        %v2556 = vld [vmem:[%s4 + $0x8] sm:$0xff]
        %v2557 = vld [vmem:[%s4 + $0x10] sm:$0xff]
        %v2558 = vld [vmem:[%s4 + $0x18] sm:$0xff]
        %2560 = vset.pattern.permute.xlu0 0
        %2561 = vperm.xlu0 %2560, %v1930
        %v2562 = vpop.permute.xlu0 %2561
        %2565 = vset.pattern.permute.xlu0 0
        %2566 = vperm.xlu0 %2565, %v1931
        %v2567 = vpop.permute.xlu0 %2566
        %2570 = vset.pattern.permute.xlu0 0
        %2571 = vperm.xlu0 %2570, %v1932
        %v2572 = vpop.permute.xlu0 %2571
        %2575 = vset.pattern.permute.xlu0 0
        %2576 = vperm.xlu0 %2575, %v1933
        %v2577 = vpop.permute.xlu0 %2576
        %vm2579 = vcmask 261120
        %v2581 = vsel %vm2579, %v2555, 0
        %v2584 = vsel %vm2579, %v2556, 0
        %v2587 = vsel %vm2579, %v2557, 0
        %v2590 = vsel %vm2579, %v2558, 0
        %2592 = vmatprep.subr.mxu0 0.0
        %2593 = vmatpush1.msra.mxu0 0.0
        %2594 = vmatprep.subr.mxu0 0.0
        %2595 = vmatpush1.msra.mxu0 0.0
        %2596 = vmatprep.subr.mxu0 0.0
        %2597 = vmatpush1.msra.mxu0 0.0
        %2598 = vmatprep.subr.mxu0 0.0
        %2599 = vmatpush1.msra.mxu0 0.0
        %2600 = vmatprep.subr.mxu0 0.0
        %2601 = vmatpush1.msra.mxu0 0.0
        %2602 = vmatprep.subr.mxu0 0.0
        %2603 = vmatpush1.msra.mxu0 0.0
        %2604 = vmatprep.subr.mxu0 0.0
        %2605 = vmatpush1.msra.mxu0 0.0
        %2606 = vmatprep.subr.mxu0 0.0
        %2607 = vmatpush1.msra.mxu0 0.0
        %2608 = vmatprep.subr.mxu0 0.0
        %2609 = vmatpush1.msra.mxu0 0.0
        %2610 = vmatprep.subr.mxu0 0.0
        %2611 = vmatpush1.msra.mxu0 0.0
        %2612 = vmatprep.subr.mxu0 0.0
        %2613 = vmatpush1.msra.mxu0 0.0
        %2614 = vmatprep.subr.mxu0 0.0
        %2615 = vmatpush1.msra.mxu0 0.0
        %2616 = vmatprep.subr.mxu0 0.0
        %v2617 = vand.u32 %v2554, 4294901760
        %2618 = vmatpush1.msra.mxu0 %v2617
        %2619 = vmatprep.subr.mxu0 0.0
        %v2620 = vand.u32 %v2553, 4294901760
        %2621 = vmatpush1.msra.mxu0 %v2620
        %2622 = vmatprep.subr.mxu0 0.0
        %v2623 = vand.u32 %v2552, 4294901760
        %2624 = vmatpush1.msra.mxu0 %v2623
        %2625 = vmatprep.subr.mxu0 0.0
        %v2626 = vand.u32 %v2551, 4294901760
        %2627 = vmatpush1.msra.mxu0 %v2626
        %2628 = vmatprep.subr.mxu0 0.0
        %2629 = vmatpush2.msra.mxu0 0.0
        %2630 = vmatprep.subr.mxu0 0.0
        %2631 = vmatpush2.msra.mxu0 0.0
        %2632 = vmatprep.subr.mxu0 0.0
        %2633 = vmatpush2.msra.mxu0 0.0
        %2634 = vmatprep.subr.mxu0 0.0
        %2635 = vmatpush2.msra.mxu0 0.0
        %2636 = vmatprep.subr.mxu0 0.0
        %2637 = vmatpush2.msra.mxu0 0.0
        %2638 = vmatprep.subr.mxu0 0.0
        %2639 = vmatpush2.msra.mxu0 0.0
        %2640 = vmatprep.subr.mxu0 0.0
        %2641 = vmatpush2.msra.mxu0 0.0
        %2642 = vmatprep.subr.mxu0 0.0
        %2643 = vmatpush2.msra.mxu0 0.0
        %2644 = vmatprep.subr.mxu0 0.0
        %2645 = vmatpush2.msra.mxu0 0.0
        %2646 = vmatprep.subr.mxu0 0.0
        %2647 = vmatpush2.msra.mxu0 0.0
        %2648 = vmatprep.subr.mxu0 0.0
        %2649 = vmatpush2.msra.mxu0 0.0
        %2650 = vmatprep.subr.mxu0 0.0
        %2651 = vmatpush2.msra.mxu0 0.0
        %2652 = vmatprep.subr.mxu0 0.0
        %2653 = vmatpush2.msra.mxu0 0.0
        %2654 = vmatprep.subr.mxu0 0.0
        %2655 = vmatpush2.msra.mxu0 0.0
        %2656 = vmatprep.subr.mxu0 0.0
        %2657 = vmatpush2.msra.mxu0 0.0
        %2658 = vmatprep.subr.mxu0 0.0
        %2659 = vmatpush2.msra.mxu0 0.0
        %2660 = vmatprep.mubr.f32.mxu0 0.0
        %v2661 = vand.u32 %v2581, 4294901760
        %v2662 = vsub.f32 %v2581, %v2661
        %v2663 = vand.u32 %v2662, 4294901760
        %v2664 = vsub.f32 %v2662, %v2663
        %v2665 = vand.u32 %v2664, 4294901760
        %2666 = vmatmul.mubr.f32.gmra.mxu0 %v2665
        %v2667 = vpop.f32.mrf.mxu0
        %v2668 = vadd.f32 %v2562, %v2667
        %v2669 = vpop.f32.mrf.mxu0
        %2670 = vmatprep.mubr.f32.mxu0 0.0
        %v2671 = vand.u32 %v2584, 4294901760
        %v2672 = vsub.f32 %v2584, %v2671
        %v2673 = vand.u32 %v2672, 4294901760
        %v2674 = vsub.f32 %v2672, %v2673
        %v2675 = vand.u32 %v2674, 4294901760
        %2676 = vmatmul.mubr.f32.gmra.mxu0 %v2675
        %v2677 = vpop.f32.mrf.mxu0
        %v2678 = vadd.f32 %v2567, %v2677
        %v2679 = vpop.f32.mrf.mxu0
        %2680 = vmatprep.mubr.f32.mxu0 0.0
        %v2681 = vand.u32 %v2587, 4294901760
        %v2682 = vsub.f32 %v2587, %v2681
        %v2683 = vand.u32 %v2682, 4294901760
        %v2684 = vsub.f32 %v2682, %v2683
        %v2685 = vand.u32 %v2684, 4294901760
        %2686 = vmatmul.mubr.f32.gmra.mxu0 %v2685
        %v2687 = vpop.f32.mrf.mxu0
        %v2688 = vadd.f32 %v2572, %v2687
        %v2689 = vpop.f32.mrf.mxu0
        %2690 = vmatprep.mubr.f32.mxu0 0.0
        %v2691 = vand.u32 %v2590, 4294901760
        %v2692 = vsub.f32 %v2590, %v2691
        %v2693 = vand.u32 %v2692, 4294901760
        %v2694 = vsub.f32 %v2692, %v2693
        %v2695 = vand.u32 %v2694, 4294901760
        %2696 = vmatmul.mubr.f32.gmra.mxu0 %v2695
        %v2697 = vpop.f32.mrf.mxu0
        %v2698 = vadd.f32 %v2577, %v2697
        %v2699 = vpop.f32.mrf.mxu0
        %2700 = vdwg.mxu0
        %2701 = vmatprep.subr.mxu0 0.0
        %2702 = vmatpush1.msra.mxu0 0.0
        %2703 = vmatprep.subr.mxu0 0.0
        %2704 = vmatpush1.msra.mxu0 0.0
        %2705 = vmatprep.subr.mxu0 0.0
        %2706 = vmatpush1.msra.mxu0 0.0
        %2707 = vmatprep.subr.mxu0 0.0
        %2708 = vmatpush1.msra.mxu0 0.0
        %2709 = vmatprep.subr.mxu0 0.0
        %2710 = vmatpush1.msra.mxu0 0.0
        %2711 = vmatprep.subr.mxu0 0.0
        %2712 = vmatpush1.msra.mxu0 0.0
        %2713 = vmatprep.subr.mxu0 0.0
        %2714 = vmatpush1.msra.mxu0 0.0
        %2715 = vmatprep.subr.mxu0 0.0
        %2716 = vmatpush1.msra.mxu0 0.0
        %2717 = vmatprep.subr.mxu0 0.0
        %2718 = vmatpush1.msra.mxu0 0.0
        %2719 = vmatprep.subr.mxu0 0.0
        %2720 = vmatpush1.msra.mxu0 0.0
        %2721 = vmatprep.subr.mxu0 0.0
        %2722 = vmatpush1.msra.mxu0 0.0
        %2723 = vmatprep.subr.mxu0 0.0
        %2724 = vmatpush1.msra.mxu0 0.0
        %2725 = vmatprep.subr.mxu0 0.0
        %v2726 = vand.u32 %v2554, 4294901760
        %v2727 = vsub.f32 %v2554, %v2726
        %v2728 = vand.u32 %v2727, 4294901760
        %v2729 = vsub.f32 %v2727, %v2728
        %v2730 = vand.u32 %v2729, 4294901760
        %2731 = vmatpush1.msra.mxu0 %v2730
        %2732 = vmatprep.subr.mxu0 0.0
        %v2733 = vand.u32 %v2553, 4294901760
        %v2734 = vsub.f32 %v2553, %v2733
        %v2735 = vand.u32 %v2734, 4294901760
        %v2736 = vsub.f32 %v2734, %v2735
        %v2737 = vand.u32 %v2736, 4294901760
        %2738 = vmatpush1.msra.mxu0 %v2737
        %2739 = vmatprep.subr.mxu0 0.0
        %v2740 = vand.u32 %v2552, 4294901760
        %v2741 = vsub.f32 %v2552, %v2740
        %v2742 = vand.u32 %v2741, 4294901760
        %v2743 = vsub.f32 %v2741, %v2742
        %v2744 = vand.u32 %v2743, 4294901760
        %2745 = vmatpush1.msra.mxu0 %v2744
        %2746 = vmatprep.subr.mxu0 0.0
        %v2747 = vand.u32 %v2551, 4294901760
        %v2748 = vsub.f32 %v2551, %v2747
        %v2749 = vand.u32 %v2748, 4294901760
        %v2750 = vsub.f32 %v2748, %v2749
        %v2751 = vand.u32 %v2750, 4294901760
        %2752 = vmatpush1.msra.mxu0 %v2751
        %2753 = vmatprep.subr.mxu0 0.0
        %2754 = vmatpush2.msra.mxu0 0.0
        %2755 = vmatprep.subr.mxu0 0.0
        %2756 = vmatpush2.msra.mxu0 0.0
        %2757 = vmatprep.subr.mxu0 0.0
        %2758 = vmatpush2.msra.mxu0 0.0
        %2759 = vmatprep.subr.mxu0 0.0
        %2760 = vmatpush2.msra.mxu0 0.0
        %2761 = vmatprep.subr.mxu0 0.0
        %2762 = vmatpush2.msra.mxu0 0.0
        %2763 = vmatprep.subr.mxu0 0.0
        %2764 = vmatpush2.msra.mxu0 0.0
        %2765 = vmatprep.subr.mxu0 0.0
        %2766 = vmatpush2.msra.mxu0 0.0
        %2767 = vmatprep.subr.mxu0 0.0
        %2768 = vmatpush2.msra.mxu0 0.0
        %2769 = vmatprep.subr.mxu0 0.0
        %2770 = vmatpush2.msra.mxu0 0.0
        %2771 = vmatprep.subr.mxu0 0.0
        %2772 = vmatpush2.msra.mxu0 0.0
        %2773 = vmatprep.subr.mxu0 0.0
        %2774 = vmatpush2.msra.mxu0 0.0
        %2775 = vmatprep.subr.mxu0 0.0
        %2776 = vmatpush2.msra.mxu0 0.0
        %2777 = vmatprep.subr.mxu0 0.0
        %2778 = vmatpush2.msra.mxu0 0.0
        %2779 = vmatprep.subr.mxu0 0.0
        %2780 = vmatpush2.msra.mxu0 0.0
        %2781 = vmatprep.subr.mxu0 0.0
        %2782 = vmatpush2.msra.mxu0 0.0
        %2783 = vmatprep.subr.mxu0 0.0
        %2784 = vmatpush2.msra.mxu0 0.0
        %2785 = vmatprep.mubr.f32.mxu0 0.0
        %v2786 = vand.u32 %v2581, 4294901760
        %2787 = vmatmul.mubr.f32.gmra.mxu0 %v2786
        %v2788 = vpop.f32.mrf.mxu0
        %v2789 = vadd.f32 %v2668, %v2788
        %v2790 = vpop.f32.mrf.mxu0
        %2791 = vmatprep.mubr.f32.mxu0 0.0
        %v2792 = vand.u32 %v2584, 4294901760
        %2793 = vmatmul.mubr.f32.gmra.mxu0 %v2792
        %v2794 = vpop.f32.mrf.mxu0
        %v2795 = vadd.f32 %v2678, %v2794
        %v2796 = vpop.f32.mrf.mxu0
        %2797 = vmatprep.mubr.f32.mxu0 0.0
        %v2798 = vand.u32 %v2587, 4294901760
        %2799 = vmatmul.mubr.f32.gmra.mxu0 %v2798
        %v2800 = vpop.f32.mrf.mxu0
        %v2801 = vadd.f32 %v2688, %v2800
        %v2802 = vpop.f32.mrf.mxu0
        %2803 = vmatprep.mubr.f32.mxu0 0.0
        %v2804 = vand.u32 %v2590, 4294901760
        %2805 = vmatmul.mubr.f32.gmra.mxu0 %v2804
        %v2806 = vpop.f32.mrf.mxu0
        %v2807 = vadd.f32 %v2698, %v2806
        %v2808 = vpop.f32.mrf.mxu0
        %2809 = vdwg.mxu0
        %2810 = vmatprep.subr.mxu0 0.0
        %2811 = vmatpush1.msra.mxu0 0.0
        %2812 = vmatprep.subr.mxu0 0.0
        %2813 = vmatpush1.msra.mxu0 0.0
        %2814 = vmatprep.subr.mxu0 0.0
        %2815 = vmatpush1.msra.mxu0 0.0
        %2816 = vmatprep.subr.mxu0 0.0
        %2817 = vmatpush1.msra.mxu0 0.0
        %2818 = vmatprep.subr.mxu0 0.0
        %2819 = vmatpush1.msra.mxu0 0.0
        %2820 = vmatprep.subr.mxu0 0.0
        %2821 = vmatpush1.msra.mxu0 0.0
        %2822 = vmatprep.subr.mxu0 0.0
        %2823 = vmatpush1.msra.mxu0 0.0
        %2824 = vmatprep.subr.mxu0 0.0
        %2825 = vmatpush1.msra.mxu0 0.0
        %2826 = vmatprep.subr.mxu0 0.0
        %2827 = vmatpush1.msra.mxu0 0.0
        %2828 = vmatprep.subr.mxu0 0.0
        %2829 = vmatpush1.msra.mxu0 0.0
        %2830 = vmatprep.subr.mxu0 0.0
        %2831 = vmatpush1.msra.mxu0 0.0
        %2832 = vmatprep.subr.mxu0 0.0
        %2833 = vmatpush1.msra.mxu0 0.0
        %2834 = vmatprep.subr.mxu0 0.0
        %v2835 = vand.u32 %v2554, 4294901760
        %v2836 = vsub.f32 %v2554, %v2835
        %2837 = vmatpush1.msra.mxu0 %v2836
        %2838 = vmatprep.subr.mxu0 0.0
        %v2839 = vand.u32 %v2553, 4294901760
        %v2840 = vsub.f32 %v2553, %v2839
        %2841 = vmatpush1.msra.mxu0 %v2840
        %2842 = vmatprep.subr.mxu0 0.0
        %v2843 = vand.u32 %v2552, 4294901760
        %v2844 = vsub.f32 %v2552, %v2843
        %2845 = vmatpush1.msra.mxu0 %v2844
        %2846 = vmatprep.subr.mxu0 0.0
        %v2847 = vand.u32 %v2551, 4294901760
        %v2848 = vsub.f32 %v2551, %v2847
        %2849 = vmatpush1.msra.mxu0 %v2848
        %2850 = vmatprep.subr.mxu0 0.0
        %2851 = vmatpush2.msra.mxu0 0.0
        %2852 = vmatprep.subr.mxu0 0.0
        %2853 = vmatpush2.msra.mxu0 0.0
        %2854 = vmatprep.subr.mxu0 0.0
        %2855 = vmatpush2.msra.mxu0 0.0
        %2856 = vmatprep.subr.mxu0 0.0
        %2857 = vmatpush2.msra.mxu0 0.0
        %2858 = vmatprep.subr.mxu0 0.0
        %2859 = vmatpush2.msra.mxu0 0.0
        %2860 = vmatprep.subr.mxu0 0.0
        %2861 = vmatpush2.msra.mxu0 0.0
        %2862 = vmatprep.subr.mxu0 0.0
        %2863 = vmatpush2.msra.mxu0 0.0
        %2864 = vmatprep.subr.mxu0 0.0
        %2865 = vmatpush2.msra.mxu0 0.0
        %2866 = vmatprep.subr.mxu0 0.0
        %2867 = vmatpush2.msra.mxu0 0.0
        %2868 = vmatprep.subr.mxu0 0.0
        %2869 = vmatpush2.msra.mxu0 0.0
        %2870 = vmatprep.subr.mxu0 0.0
        %2871 = vmatpush2.msra.mxu0 0.0
        %2872 = vmatprep.subr.mxu0 0.0
        %2873 = vmatpush2.msra.mxu0 0.0
        %2874 = vmatprep.subr.mxu0 0.0
        %2875 = vmatpush2.msra.mxu0 0.0
        %2876 = vmatprep.subr.mxu0 0.0
        %2877 = vmatpush2.msra.mxu0 0.0
        %2878 = vmatprep.subr.mxu0 0.0
        %2879 = vmatpush2.msra.mxu0 0.0
        %2880 = vmatprep.subr.mxu0 0.0
        %2881 = vmatpush2.msra.mxu0 0.0
        %2882 = vmatprep.mubr.f32.mxu0 0.0
        %v2883 = vand.u32 %v2581, 4294901760
        %v2884 = vsub.f32 %v2581, %v2883
        %2885 = vmatmul.mubr.f32.gmra.mxu0 %v2884
        %v2886 = vpop.f32.mrf.mxu0
        %v2887 = vadd.f32 %v2789, %v2886
        %v2888 = vpop.f32.mrf.mxu0
        %2889 = vmatprep.mubr.f32.mxu0 0.0
        %v2890 = vand.u32 %v2584, 4294901760
        %v2891 = vsub.f32 %v2584, %v2890
        %2892 = vmatmul.mubr.f32.gmra.mxu0 %v2891
        %v2893 = vpop.f32.mrf.mxu0
        %v2894 = vadd.f32 %v2795, %v2893
        %v2895 = vpop.f32.mrf.mxu0
        %2896 = vmatprep.mubr.f32.mxu0 0.0
        %v2897 = vand.u32 %v2587, 4294901760
        %v2898 = vsub.f32 %v2587, %v2897
        %2899 = vmatmul.mubr.f32.gmra.mxu0 %v2898
        %v2900 = vpop.f32.mrf.mxu0
        %v2901 = vadd.f32 %v2801, %v2900
        %v2902 = vpop.f32.mrf.mxu0
        %2903 = vmatprep.mubr.f32.mxu0 0.0
        %v2904 = vand.u32 %v2590, 4294901760
        %v2905 = vsub.f32 %v2590, %v2904
        %2906 = vmatmul.mubr.f32.gmra.mxu0 %v2905
        %v2907 = vpop.f32.mrf.mxu0
        %v2908 = vadd.f32 %v2807, %v2907
        %v2909 = vpop.f32.mrf.mxu0
        %2910 = vdwg.mxu0
        %2911 = vmatprep.subr.mxu0 0.0
        %2912 = vmatpush1.msra.mxu0 0.0
        %2913 = vmatprep.subr.mxu0 0.0
        %2914 = vmatpush1.msra.mxu0 0.0
        %2915 = vmatprep.subr.mxu0 0.0
        %2916 = vmatpush1.msra.mxu0 0.0
        %2917 = vmatprep.subr.mxu0 0.0
        %2918 = vmatpush1.msra.mxu0 0.0
        %2919 = vmatprep.subr.mxu0 0.0
        %2920 = vmatpush1.msra.mxu0 0.0
        %2921 = vmatprep.subr.mxu0 0.0
        %2922 = vmatpush1.msra.mxu0 0.0
        %2923 = vmatprep.subr.mxu0 0.0
        %2924 = vmatpush1.msra.mxu0 0.0
        %2925 = vmatprep.subr.mxu0 0.0
        %2926 = vmatpush1.msra.mxu0 0.0
        %2927 = vmatprep.subr.mxu0 0.0
        %2928 = vmatpush1.msra.mxu0 0.0
        %2929 = vmatprep.subr.mxu0 0.0
        %2930 = vmatpush1.msra.mxu0 0.0
        %2931 = vmatprep.subr.mxu0 0.0
        %2932 = vmatpush1.msra.mxu0 0.0
        %2933 = vmatprep.subr.mxu0 0.0
        %2934 = vmatpush1.msra.mxu0 0.0
        %2935 = vmatprep.subr.mxu0 0.0
        %v2936 = vand.u32 %v2554, 4294901760
        %2937 = vmatpush1.msra.mxu0 %v2936
        %2938 = vmatprep.subr.mxu0 0.0
        %v2939 = vand.u32 %v2553, 4294901760
        %2940 = vmatpush1.msra.mxu0 %v2939
        %2941 = vmatprep.subr.mxu0 0.0
        %v2942 = vand.u32 %v2552, 4294901760
        %2943 = vmatpush1.msra.mxu0 %v2942
        %2944 = vmatprep.subr.mxu0 0.0
        %v2945 = vand.u32 %v2551, 4294901760
        %2946 = vmatpush1.msra.mxu0 %v2945
        %2947 = vmatprep.subr.mxu0 0.0
        %2948 = vmatpush2.msra.mxu0 0.0
        %2949 = vmatprep.subr.mxu0 0.0
        %2950 = vmatpush2.msra.mxu0 0.0
        %2951 = vmatprep.subr.mxu0 0.0
        %2952 = vmatpush2.msra.mxu0 0.0
        %2953 = vmatprep.subr.mxu0 0.0
        %2954 = vmatpush2.msra.mxu0 0.0
        %2955 = vmatprep.subr.mxu0 0.0
        %2956 = vmatpush2.msra.mxu0 0.0
        %2957 = vmatprep.subr.mxu0 0.0
        %2958 = vmatpush2.msra.mxu0 0.0
        %2959 = vmatprep.subr.mxu0 0.0
        %2960 = vmatpush2.msra.mxu0 0.0
        %2961 = vmatprep.subr.mxu0 0.0
        %2962 = vmatpush2.msra.mxu0 0.0
        %2963 = vmatprep.subr.mxu0 0.0
        %2964 = vmatpush2.msra.mxu0 0.0
        %2965 = vmatprep.subr.mxu0 0.0
        %2966 = vmatpush2.msra.mxu0 0.0
        %2967 = vmatprep.subr.mxu0 0.0
        %2968 = vmatpush2.msra.mxu0 0.0
        %2969 = vmatprep.subr.mxu0 0.0
        %2970 = vmatpush2.msra.mxu0 0.0
        %2971 = vmatprep.subr.mxu0 0.0
        %2972 = vmatpush2.msra.mxu0 0.0
        %2973 = vmatprep.subr.mxu0 0.0
        %2974 = vmatpush2.msra.mxu0 0.0
        %2975 = vmatprep.subr.mxu0 0.0
        %2976 = vmatpush2.msra.mxu0 0.0
        %2977 = vmatprep.subr.mxu0 0.0
        %2978 = vmatpush2.msra.mxu0 0.0
        %2979 = vmatprep.mubr.f32.mxu0 0.0
        %v2980 = vand.u32 %v2581, 4294901760
        %v2981 = vsub.f32 %v2581, %v2980
        %v2982 = vand.u32 %v2981, 4294901760
        %2983 = vmatmul.mubr.f32.gmra.mxu0 %v2982
        %v2984 = vpop.f32.mrf.mxu0
        %v2985 = vadd.f32 %v2887, %v2984
        %v2986 = vpop.f32.mrf.mxu0
        %2987 = vmatprep.mubr.f32.mxu0 0.0
        %v2988 = vand.u32 %v2584, 4294901760
        %v2989 = vsub.f32 %v2584, %v2988
        %v2990 = vand.u32 %v2989, 4294901760
        %2991 = vmatmul.mubr.f32.gmra.mxu0 %v2990
        %v2992 = vpop.f32.mrf.mxu0
        %v2993 = vadd.f32 %v2894, %v2992
        %v2994 = vpop.f32.mrf.mxu0
        %2995 = vmatprep.mubr.f32.mxu0 0.0
        %v2996 = vand.u32 %v2587, 4294901760
        %v2997 = vsub.f32 %v2587, %v2996
        %v2998 = vand.u32 %v2997, 4294901760
        %2999 = vmatmul.mubr.f32.gmra.mxu0 %v2998
        %v3000 = vpop.f32.mrf.mxu0
        %v3001 = vadd.f32 %v2901, %v3000
        %v3002 = vpop.f32.mrf.mxu0
        %3003 = vmatprep.mubr.f32.mxu0 0.0
        %v3004 = vand.u32 %v2590, 4294901760
        %v3005 = vsub.f32 %v2590, %v3004
        %v3006 = vand.u32 %v3005, 4294901760
        %3007 = vmatmul.mubr.f32.gmra.mxu0 %v3006
        %v3008 = vpop.f32.mrf.mxu0
        %v3009 = vadd.f32 %v2908, %v3008
        %v3010 = vpop.f32.mrf.mxu0
        %3011 = vdwg.mxu0
        %3012 = vmatprep.subr.mxu0 0.0
        %3013 = vmatpush1.msra.mxu0 0.0
        %3014 = vmatprep.subr.mxu0 0.0
        %3015 = vmatpush1.msra.mxu0 0.0
        %3016 = vmatprep.subr.mxu0 0.0
        %3017 = vmatpush1.msra.mxu0 0.0
        %3018 = vmatprep.subr.mxu0 0.0
        %3019 = vmatpush1.msra.mxu0 0.0
        %3020 = vmatprep.subr.mxu0 0.0
        %3021 = vmatpush1.msra.mxu0 0.0
        %3022 = vmatprep.subr.mxu0 0.0
        %3023 = vmatpush1.msra.mxu0 0.0
        %3024 = vmatprep.subr.mxu0 0.0
        %3025 = vmatpush1.msra.mxu0 0.0
        %3026 = vmatprep.subr.mxu0 0.0
        %3027 = vmatpush1.msra.mxu0 0.0
        %3028 = vmatprep.subr.mxu0 0.0
        %3029 = vmatpush1.msra.mxu0 0.0
        %3030 = vmatprep.subr.mxu0 0.0
        %3031 = vmatpush1.msra.mxu0 0.0
        %3032 = vmatprep.subr.mxu0 0.0
        %3033 = vmatpush1.msra.mxu0 0.0
        %3034 = vmatprep.subr.mxu0 0.0
        %3035 = vmatpush1.msra.mxu0 0.0
        %3036 = vmatprep.subr.mxu0 0.0
        %v3037 = vand.u32 %v2554, 4294901760
        %v3038 = vsub.f32 %v2554, %v3037
        %v3039 = vand.u32 %v3038, 4294901760
        %3040 = vmatpush1.msra.mxu0 %v3039
        %3041 = vmatprep.subr.mxu0 0.0
        %v3042 = vand.u32 %v2553, 4294901760
        %v3043 = vsub.f32 %v2553, %v3042
        %v3044 = vand.u32 %v3043, 4294901760
        %3045 = vmatpush1.msra.mxu0 %v3044
        %3046 = vmatprep.subr.mxu0 0.0
        %v3047 = vand.u32 %v2552, 4294901760
        %v3048 = vsub.f32 %v2552, %v3047
        %v3049 = vand.u32 %v3048, 4294901760
        %3050 = vmatpush1.msra.mxu0 %v3049
        %3051 = vmatprep.subr.mxu0 0.0
        %v3052 = vand.u32 %v2551, 4294901760
        %v3053 = vsub.f32 %v2551, %v3052
        %v3054 = vand.u32 %v3053, 4294901760
        %3055 = vmatpush1.msra.mxu0 %v3054
        %3056 = vmatprep.subr.mxu0 0.0
        %3057 = vmatpush2.msra.mxu0 0.0
        %3058 = vmatprep.subr.mxu0 0.0
        %3059 = vmatpush2.msra.mxu0 0.0
        %3060 = vmatprep.subr.mxu0 0.0
        %3061 = vmatpush2.msra.mxu0 0.0
        %3062 = vmatprep.subr.mxu0 0.0
        %3063 = vmatpush2.msra.mxu0 0.0
        %3064 = vmatprep.subr.mxu0 0.0
        %3065 = vmatpush2.msra.mxu0 0.0
        %3066 = vmatprep.subr.mxu0 0.0
        %3067 = vmatpush2.msra.mxu0 0.0
        %3068 = vmatprep.subr.mxu0 0.0
        %3069 = vmatpush2.msra.mxu0 0.0
        %3070 = vmatprep.subr.mxu0 0.0
        %3071 = vmatpush2.msra.mxu0 0.0
        %3072 = vmatprep.subr.mxu0 0.0
        %3073 = vmatpush2.msra.mxu0 0.0
        %3074 = vmatprep.subr.mxu0 0.0
        %3075 = vmatpush2.msra.mxu0 0.0
        %3076 = vmatprep.subr.mxu0 0.0
        %3077 = vmatpush2.msra.mxu0 0.0
        %3078 = vmatprep.subr.mxu0 0.0
        %3079 = vmatpush2.msra.mxu0 0.0
        %3080 = vmatprep.subr.mxu0 0.0
        %3081 = vmatpush2.msra.mxu0 0.0
        %3082 = vmatprep.subr.mxu0 0.0
        %3083 = vmatpush2.msra.mxu0 0.0
        %3084 = vmatprep.subr.mxu0 0.0
        %3085 = vmatpush2.msra.mxu0 0.0
        %3086 = vmatprep.subr.mxu0 0.0
        %3087 = vmatpush2.msra.mxu0 0.0
        %3088 = vmatprep.mubr.f32.mxu0 0.0
        %v3089 = vand.u32 %v2581, 4294901760
        %3090 = vmatmul.mubr.f32.gmra.mxu0 %v3089
        %v3091 = vpop.f32.mrf.mxu0
        %v3092 = vadd.f32 %v2985, %v3091
        %v3093 = vpop.f32.mrf.mxu0
        %3094 = vmatprep.mubr.f32.mxu0 0.0
        %v3095 = vand.u32 %v2584, 4294901760
        %3096 = vmatmul.mubr.f32.gmra.mxu0 %v3095
        %v3097 = vpop.f32.mrf.mxu0
        %v3098 = vadd.f32 %v2993, %v3097
        %v3099 = vpop.f32.mrf.mxu0
        %3100 = vmatprep.mubr.f32.mxu0 0.0
        %v3101 = vand.u32 %v2587, 4294901760
        %3102 = vmatmul.mubr.f32.gmra.mxu0 %v3101
        %v3103 = vpop.f32.mrf.mxu0
        %v3104 = vadd.f32 %v3001, %v3103
        %v3105 = vpop.f32.mrf.mxu0
        %3106 = vmatprep.mubr.f32.mxu0 0.0
        %v3107 = vand.u32 %v2590, 4294901760
        %3108 = vmatmul.mubr.f32.gmra.mxu0 %v3107
        %v3109 = vpop.f32.mrf.mxu0
        %v3110 = vadd.f32 %v3009, %v3109
        %v3111 = vpop.f32.mrf.mxu0
        %3112 = vdwg.mxu0
        %3113 = vmatprep.subr.mxu0 0.0
        %3114 = vmatpush1.msra.mxu0 0.0
        %3115 = vmatprep.subr.mxu0 0.0
        %3116 = vmatpush1.msra.mxu0 0.0
        %3117 = vmatprep.subr.mxu0 0.0
        %3118 = vmatpush1.msra.mxu0 0.0
        %3119 = vmatprep.subr.mxu0 0.0
        %3120 = vmatpush1.msra.mxu0 0.0
        %3121 = vmatprep.subr.mxu0 0.0
        %3122 = vmatpush1.msra.mxu0 0.0
        %3123 = vmatprep.subr.mxu0 0.0
        %3124 = vmatpush1.msra.mxu0 0.0
        %3125 = vmatprep.subr.mxu0 0.0
        %3126 = vmatpush1.msra.mxu0 0.0
        %3127 = vmatprep.subr.mxu0 0.0
        %3128 = vmatpush1.msra.mxu0 0.0
        %3129 = vmatprep.subr.mxu0 0.0
        %3130 = vmatpush1.msra.mxu0 0.0
        %3131 = vmatprep.subr.mxu0 0.0
        %3132 = vmatpush1.msra.mxu0 0.0
        %3133 = vmatprep.subr.mxu0 0.0
        %3134 = vmatpush1.msra.mxu0 0.0
        %3135 = vmatprep.subr.mxu0 0.0
        %3136 = vmatpush1.msra.mxu0 0.0
        %3137 = vmatprep.subr.mxu0 0.0
        %v3138 = vand.u32 %v2554, 4294901760
        %3139 = vmatpush1.msra.mxu0 %v3138
        %3140 = vmatprep.subr.mxu0 0.0
        %v3141 = vand.u32 %v2553, 4294901760
        %3142 = vmatpush1.msra.mxu0 %v3141
        %3143 = vmatprep.subr.mxu0 0.0
        %v3144 = vand.u32 %v2552, 4294901760
        %3145 = vmatpush1.msra.mxu0 %v3144
        %3146 = vmatprep.subr.mxu0 0.0
        %v3147 = vand.u32 %v2551, 4294901760
        %3148 = vmatpush1.msra.mxu0 %v3147
        %3149 = vmatprep.subr.mxu0 0.0
        %3150 = vmatpush2.msra.mxu0 0.0
        %3151 = vmatprep.subr.mxu0 0.0
        %3152 = vmatpush2.msra.mxu0 0.0
        %3153 = vmatprep.subr.mxu0 0.0
        %3154 = vmatpush2.msra.mxu0 0.0
        %3155 = vmatprep.subr.mxu0 0.0
        %3156 = vmatpush2.msra.mxu0 0.0
        %3157 = vmatprep.subr.mxu0 0.0
        %3158 = vmatpush2.msra.mxu0 0.0
        %3159 = vmatprep.subr.mxu0 0.0
        %3160 = vmatpush2.msra.mxu0 0.0
        %3161 = vmatprep.subr.mxu0 0.0
        %3162 = vmatpush2.msra.mxu0 0.0
        %3163 = vmatprep.subr.mxu0 0.0
        %3164 = vmatpush2.msra.mxu0 0.0
        %3165 = vmatprep.subr.mxu0 0.0
        %3166 = vmatpush2.msra.mxu0 0.0
        %3167 = vmatprep.subr.mxu0 0.0
        %3168 = vmatpush2.msra.mxu0 0.0
        %3169 = vmatprep.subr.mxu0 0.0
        %3170 = vmatpush2.msra.mxu0 0.0
        %3171 = vmatprep.subr.mxu0 0.0
        %3172 = vmatpush2.msra.mxu0 0.0
        %3173 = vmatprep.subr.mxu0 0.0
        %3174 = vmatpush2.msra.mxu0 0.0
        %3175 = vmatprep.subr.mxu0 0.0
        %3176 = vmatpush2.msra.mxu0 0.0
        %3177 = vmatprep.subr.mxu0 0.0
        %3178 = vmatpush2.msra.mxu0 0.0
        %3179 = vmatprep.subr.mxu0 0.0
        %3180 = vmatpush2.msra.mxu0 0.0
        %3181 = vmatprep.mubr.f32.mxu0 0.0
        %v3182 = vand.u32 %v2581, 4294901760
        %3183 = vmatmul.mubr.f32.gmra.mxu0 %v3182
        %v3184 = vpop.f32.mrf.mxu0
        %v3185 = vadd.f32 %v3092, %v3184
        %v3186 = vpop.f32.mrf.mxu0
        %3187 = vmatprep.mubr.f32.mxu0 0.0
        %v3188 = vand.u32 %v2584, 4294901760
        %3189 = vmatmul.mubr.f32.gmra.mxu0 %v3188
        %v3190 = vpop.f32.mrf.mxu0
        %v3191 = vadd.f32 %v3098, %v3190
        %v3192 = vpop.f32.mrf.mxu0
        %3193 = vmatprep.mubr.f32.mxu0 0.0
        %v3194 = vand.u32 %v2587, 4294901760
        %3195 = vmatmul.mubr.f32.gmra.mxu0 %v3194
        %v3196 = vpop.f32.mrf.mxu0
        %v3197 = vadd.f32 %v3104, %v3196
        %v3198 = vpop.f32.mrf.mxu0
        %3199 = vmatprep.mubr.f32.mxu0 0.0
        %v3200 = vand.u32 %v2590, 4294901760
        %3201 = vmatmul.mubr.f32.gmra.mxu0 %v3200
        %v3202 = vpop.f32.mrf.mxu0
        %v3203 = vadd.f32 %v3110, %v3202
        %v3204 = vpop.f32.mrf.mxu0
        %3205 = vdwg.mxu0
        %v3206 = vmax.f32 %v3185, 0.0
        %v3207 = vmax.f32 %v3191, 0.0
        %v3208 = vmax.f32 %v3197, 0.0
        %v3209 = vmax.f32 %v3203, 0.0
        %3211 = vset.pattern.permute.xlu0 0
        %3212 = vperm.xlu0 %3211, %v1934
        %v3213 = vpop.permute.xlu0 %3212
        %3216 = vset.pattern.permute.xlu0 0
        %3217 = vperm.xlu0 %3216, %v1935
        %v3218 = vpop.permute.xlu0 %3217
        %3221 = vset.pattern.permute.xlu0 0
        %3222 = vperm.xlu0 %3221, %v1936
        %v3223 = vpop.permute.xlu0 %3222
        %3226 = vset.pattern.permute.xlu0 0
        %3227 = vperm.xlu0 %3226, %v1937
        %v3228 = vpop.permute.xlu0 %3227
        %v3230 = vmul.f32 %v3206, %v3213
        %v3231 = vmul.f32 %v3207, %v3218
        %v3232 = vmul.f32 %v3208, %v3223
        %v3233 = vmul.f32 %v3209, %v3228
        %v3234 = vadd.f32 %v3230, %v3231
        %v3235 = vadd.f32 %v3234, %v3232
        %v3236 = vadd.f32 %v3235, %v3233
        %v3237 = vrot.slane %v3236, 4
        %v3238 = vadd.f32 %v3236, %v3237
        %v3239 = vrot.slane %v3238, 2
        %v3240 = vadd.f32 %v3238, %v3239
        %v3241 = vrot.slane %v3240, 1
        %v3242 = vadd.f32 %v3240, %v3241
        %3244 = vset.pattern.permute.xlu0 0
        %3245 = vperm.xlu0 %3244, %v1938
        %v3246 = vpop.permute.xlu0 %3245
        %v3248 = vadd.f32 %v3242, %v3246
        %v3249 = vxor.u32 %v3248, 2147483648
        %v3250 = vmul.f32 %v3249, 1.442695
        %v3251 = vpow.pop %v3250
        %v3252 = vadd.f32 %v3251, 1.0
        %v3253 = vrcp.pop %v3252
        %v3254 = vmul.f32 1.0, %v3253
        %3255 = vst [vmem:[%s254] sm:$0x1] %v3254
        %s3256 = sand.u32 %s164, 1
        %s3257 = scalar_lea.sflag [#allocation3], %s3256
        %s3258 = sand.u32 %s164, 1
        %s3259 = scalar_lea.vmem [#allocation2], %s3258
        // Predicated region
        $region45: #{tpu_custom_call.1} parent=43 // pred_check
          %p3260 = pneg %p174
        $region46: #{tpu_custom_call.1} parent=43 // pred_check_branch
          %3262 = sbr.rel (%p3260) target = $region48
        $region47: #{tpu_custom_call.1} parent=43 // pred_region
          %s3264 = ssub.s32 16, 16
          %3265 = vsyncadd %s3257, %s3264
          %s3266 = smul.addr %s20, 16
          %s3267 = scalar_lea.hbm %s6, %s3266
          %s3269 = sshll.u32 %s3259, 4
          %s3270 = int_to_ptr.vmem [resolvable:$true] %s3269
          %3272 = dma.vmem_to_hbm [thread:$0]  %s3270, 16, %s3267, %s3257
        $region48: #{tpu_custom_call.1} parent=43 // pred_fallthru
          _
      $region44: #{tpu_custom_call.1} parent=5 // pred_fallthru
        _
      %p3273 = scmp.le.s32.totalorder 2, %s15
      // Predicated region
      $region49: #{tpu_custom_call.1} parent=5 // pred_check
        %p3274 = pneg %p3273
      $region50: #{tpu_custom_call.1} parent=5 // pred_check_branch
        %3276 = sbr.rel (%p3274) target = $region52
      $region51: #{tpu_custom_call.1} parent=5 // pred_region
        %s3277 = ssub.s32 %s15, 2
        // Predicated region
        $region53: #{tpu_custom_call.1} parent=51 // pred_check
          %p3278 = pneg %p180
        $region54: #{tpu_custom_call.1} parent=51 // pred_check_branch
          %3280 = sbr.rel (%p3278) target = $region56
        $region55: #{tpu_custom_call.1} parent=51 // pred_region
          %s3281 = sand.u32 %s165, 1
          %s3282 = scalar_lea.sflag [#allocation3], %s3281
          %s3283 = sand.u32 %s165, 1
          %s3284 = scalar_lea.vmem [#allocation2], %s3283
          %3285 = dma.done %s3282, 16
        $region56: #{tpu_custom_call.1} parent=51 // pred_fallthru
          _
      $region52: #{tpu_custom_call.1} parent=5 // pred_fallthru
        _
    $region6: #{tpu_custom_call.1} parent=1 // loop_footer
      %s19 = sadd.s32 1, %s15
    $region7: #{tpu_custom_call.1} parent=1 // loop_footer_branch
      %14 = sbr.rel target = $region3
    $region8: #{tpu_custom_call.1} parent=1 // loop_exit
      _
    %3286 = vsyncpa [#allocation3], 1
    %s3287 = scalar_lea.sflag [#allocation3], 1
    %3288 = vsyncpa %s3287, 1

</llo_original>
